<compile_context>
chip_gen: v7x
topology: tpu7x:2x2x1
jax: 0.10.0
libtpu: 0.0.40
codegen_flags: <defaults>
</compile_context>

<pallas_src>
import functools

import jax
import jax.numpy as jnp
from jax.experimental import pallas as pl
from jax.experimental.pallas import tpu as pltpu


# ----------------------------------------------------------------------------
# Fused GCLSTM Pallas kernel: multi-layer LSTM (x & y streams) + BN/Linear head
# ----------------------------------------------------------------------------
def _gclstm_kernel(num_layers, batch_x, batch2, hidden, seq_len, *refs):
    """refs layout:
         inputs : x2d, (wih_l, whh_l, b_l) * num_layers,
                  bn1_g, bn1_b, fc1_w, fc1_b, bn2_g, bn2_b, fc2_w, fc2_b
         outputs: lasth (2B,H), hn (L,2B,H), cn (L,2B,H), out (B,out_dim)
         scratch: seq_scr (T*2B,H), xp_scr (T*2B,4H)
    """
    H, B2, T = hidden, batch2, seq_len

    idx = 0
    x_ref = refs[idx]; idx += 1
    layer_w = []
    for _ in range(num_layers):
        layer_w.append(tuple(refs[idx:idx + 3])); idx += 3
    (bn1_g, bn1_b, fc1_w, fc1_b,
     bn2_g, bn2_b, fc2_w, fc2_b) = refs[idx:idx + 8]; idx += 8
    lasth_ref, hn_ref, cn_ref, out_ref = refs[idx:idx + 4]; idx += 4
    seq_scr, xp_scr = refs[idx:idx + 2]

    h_fin = None
    for l in range(num_layers):
        wih_ref, whh_ref, b_ref = layer_w[l]

        # Hoisted whole-sequence input projection: ONE MXU call per layer.
        xin = x_ref[...] if l == 0 else seq_scr[...]            # (T*2B, Din)
        xp_scr[...] = (jnp.dot(xin, wih_ref[...],
                               preferred_element_type=jnp.float32)
                       + b_ref[...])                            # (T*2B, 4H)

        whh = whh_ref[...]
        write_seq = l < num_layers - 1    # last layer's sequence is never read

        def step(t, carry, whh=whh, write_seq=write_seq):
            h, c = carry
            row = pl.multiple_of(t * B2, B2)                    # sublane-aligned
            gates = (xp_scr[pl.ds(row, B2), :]
                     + jnp.dot(h, whh, preferred_element_type=jnp.float32))
            # PyTorch gate ordering: i, f, g, o
            i = jax.nn.sigmoid(gates[:, 0 * H:1 * H])
            f = jax.nn.sigmoid(gates[:, 1 * H:2 * H])
            g = jnp.tanh(gates[:, 2 * H:3 * H])
            o = jax.nn.sigmoid(gates[:, 3 * H:4 * H])
            c = f * c + i * g
            h = o * jnp.tanh(c)
            if write_seq:
                seq_scr[pl.ds(row, B2), :] = h
            return h, c

        h0 = jnp.zeros((B2, H), jnp.float32)
        c0 = jnp.zeros((B2, H), jnp.float32)
        h_fin, c_fin = jax.lax.fori_loop(0, T, step, (h0, c0), unroll=True)

        # Final states written once per layer (not per timestep).
        hn_ref[l] = h_fin
        cn_ref[l] = c_fin

    lasth_ref[...] = h_fin                                      # (2B, H)

    # ---- fused epilogue: BN1 -> Linear1 -> BN2 -> Linear2 on the x-stream ----
    def batchnorm(z, g_ref, bta_ref):
        mean = jnp.mean(z, axis=0, keepdims=True)
        var = jnp.mean((z - mean) ** 2, axis=0, keepdims=True)  # biased (train mode)
        return (z - mean) * jax.lax.rsqrt(var + 1e-5) * g_ref[...] + bta_ref[...]

    fx = h_fin[:batch_x]                                        # (B, H) — x rows only
    h1 = (jnp.dot(batchnorm(fx, bn1_g, bn1_b), fc1_w[...],
                  preferred_element_type=jnp.float32) + fc1_b[...])
    out = (jnp.dot(batchnorm(h1, bn2_g, bn2_b), fc2_w[...],
                   preferred_element_type=jnp.float32) + fc2_b[...])
    out_ref[...] = out.astype(out_ref.dtype)


def _build_fused_call(num_layers, B, T, H, out_dim):
    B2 = 2 * B
    n_in = 1 + 3 * num_layers + 8
    return pl.pallas_call(
        functools.partial(_gclstm_kernel, num_layers, B, B2, H, T),
        out_shape=(
            jax.ShapeDtypeStruct((B2, H), jnp.float32),              # last hidden (x|y)
            jax.ShapeDtypeStruct((num_layers, B2, H), jnp.float32),  # hn (x|y)
            jax.ShapeDtypeStruct((num_layers, B2, H), jnp.float32),  # cn (x|y)
            jax.ShapeDtypeStruct((B, out_dim), jnp.float32),         # fc head output
        ),
        in_specs=[pl.BlockSpec(memory_space=pltpu.MemorySpace.VMEM)] * n_in,
        out_specs=(pl.BlockSpec(memory_space=pltpu.MemorySpace.VMEM),) * 4,
        scratch_shapes=[
            pltpu.VMEM((T * B2, H), jnp.float32),        # inter-layer activation sequence
            pltpu.VMEM((T * B2, 4 * H), jnp.float32),    # hoisted input projection (lane-dense)
        ],
    )


# ----------------------------------------------------------------------------
# Marginal divergence (MMD) and copula distance (Gaussian-copula KL) — glue.
# (jnp.linalg.slogdet / solve have no Pallas lowering; computed in plain JAX.)
# ----------------------------------------------------------------------------
def md_mmd(x, y, sigma=1.0):
    # TODO(synk): exact MD_MMD implementation not provided; standard RBF-MMD used.
    def gram(a, b):
        d = jnp.sum((a[:, None, :] - b[None, :, :]) ** 2, axis=-1)
        return jnp.exp(-d / (2.0 * sigma ** 2))
    return jnp.mean(gram(x, x)) + jnp.mean(gram(y, y)) - 2.0 * jnp.mean(gram(x, y))


def cd_kl(x, y, eps=1e-3):
    # TODO(synk): exact CD_KL implementation not provided; Gaussian-copula KL used.
    def corr(z):
        zc = z - jnp.mean(z, axis=0, keepdims=True)
        cov = zc.T @ zc / z.shape[0]
        d = jnp.sqrt(jnp.diag(cov) + 1e-8)
        r = cov / (d[:, None] * d[None, :])
        return r + eps * jnp.eye(r.shape[0], dtype=r.dtype)
    rx, ry = corr(x), corr(y)
    h = rx.shape[0]
    _, logdet_x = jnp.linalg.slogdet(rx)
    _, logdet_y = jnp.linalg.slogdet(ry)
    return 0.5 * (jnp.trace(jnp.linalg.solve(ry, rx)) - h + logdet_y - logdet_x)


# ----------------------------------------------------------------------------
# Parameters (PyTorch-equivalent init; weights stored pre-transposed)
# ----------------------------------------------------------------------------
def init_params(key, input_dim, hidden_dim, num_layers, output_dim):
    params = {}
    k = key
    scale = 1.0 / jnp.sqrt(hidden_dim)

    def nxt():
        nonlocal k
        k, sub = jax.random.split(k)
        return sub

    for l in range(num_layers):
        d_in = input_dim if l == 0 else hidden_dim
        params[f"wih{l}"] = jax.random.uniform(
            nxt(), (d_in, 4 * hidden_dim), jnp.float32, -scale, scale)
        params[f"whh{l}"] = jax.random.uniform(
            nxt(), (hidden_dim, 4 * hidden_dim), jnp.float32, -scale, scale)
        b_ih = jax.random.uniform(nxt(), (4 * hidden_dim,), jnp.float32, -scale, scale)
        b_hh = jax.random.uniform(nxt(), (4 * hidden_dim,), jnp.float32, -scale, scale)
        params[f"b{l}"] = (b_ih + b_hh).reshape(1, 4 * hidden_dim)

    half = hidden_dim // 2
    s1 = 1.0 / jnp.sqrt(hidden_dim)
    s2 = 1.0 / jnp.sqrt(half)
    params["bn1_g"] = jnp.ones((1, hidden_dim), jnp.float32)
    params["bn1_b"] = jnp.zeros((1, hidden_dim), jnp.float32)
    params["fc1_w"] = jax.random.uniform(nxt(), (hidden_dim, half), jnp.float32, -s1, s1)
    params["fc1_b"] = jax.random.uniform(nxt(), (1, half), jnp.float32, -s1, s1)
    params["bn2_g"] = jnp.ones((1, half), jnp.float32)
    params["bn2_b"] = jnp.zeros((1, half), jnp.float32)
    params["fc2_w"] = jax.random.uniform(nxt(), (half, output_dim), jnp.float32, -s2, s2)
    params["fc2_b"] = jax.random.uniform(nxt(), (1, output_dim), jnp.float32, -s2, s2)
    return params


# ----------------------------------------------------------------------------
# GCLSTM forward
# ----------------------------------------------------------------------------
@functools.partial(jax.jit, static_argnames=("num_layers",))
def gclstm_forward(params, x, y, num_layers):
    """x, y: (B, T, input_dim) batch-first, float32 (zero initial h/c, hc=(None,None))."""
    B, T, D = x.shape
    H = params["whh0"].shape[0]
    out_dim = params["fc2_w"].shape[1]

    # Merge x/y streams along batch (shared weights, doubled MXU M dim), go
    # time-major and flatten: rows [t*2B : (t+1)*2B] hold timestep t.
    xy = jnp.concatenate([x, y], axis=0)             # (2B, T, D)
    xy = jnp.transpose(xy, (1, 0, 2))                # (T, 2B, D)
    xy2d = xy.reshape(T * 2 * B, D)                  # (T*2B, D)

    args = [xy2d]
    for l in range(num_layers):
        args += [params[f"wih{l}"], params[f"whh{l}"], params[f"b{l}"]]
    args += [params["bn1_g"], params["bn1_b"], params["fc1_w"], params["fc1_b"],
             params["bn2_g"], params["bn2_b"], params["fc2_w"], params["fc2_b"]]

    lasth, hn2, cn2, out = _build_fused_call(num_layers, B, T, H, out_dim)(*args)

    fx, fy = lasth[:B], lasth[B:]                    # last-timestep features of x / y
    marginal_div = md_mmd(fx, fy)
    copula_dist = cd_kl(fx, fy)                      # method='KL'
    hn, cn = hn2[:, :B, :], cn2[:, :B, :]            # PyTorch returns x-stream states

    return marginal_div, copula_dist, out, (hn, cn)


if __name__ == "__main__":
    B, T = 8, 8
    INPUT_DIM, HIDDEN_DIM, NUM_LAYERS, OUTPUT_DIM = 8, 32, 2, 1

    key = jax.random.PRNGKey(0)
    kp, kx, ky = jax.random.split(key, 3)

    params = init_params(kp, INPUT_DIM, HIDDEN_DIM, NUM_LAYERS, OUTPUT_DIM)
    x = jax.random.normal(kx, (B, T, INPUT_DIM), jnp.float32)
    y = jax.random.normal(ky, (B, T, INPUT_DIM), jnp.float32)

    md, cd, out, (hn, cn) = gclstm_forward(params, x, y, num_layers=NUM_LAYERS)
    jax.block_until_ready((md, cd, out, hn, cn))

    assert out.shape == (B, OUTPUT_DIM)
    assert hn.shape == (NUM_LAYERS, B, HIDDEN_DIM)
    assert cn.shape == (NUM_LAYERS, B, HIDDEN_DIM)
    assert bool(jnp.isfinite(md)) and bool(jnp.isfinite(cd))
    assert bool(jnp.all(jnp.isfinite(out)))
    print("KERNEL_OK")
</pallas_src>

<mosaic_0001>
module attributes {stable_mosaic.version = 11 : i64} {
  func.func @_gclstm_kernel(%arg0: memref<128x8xf32, #tpu.memory_space<vmem>>, %arg1: memref<8x128xf32, #tpu.memory_space<vmem>>, %arg2: memref<32x128xf32, #tpu.memory_space<vmem>>, %arg3: memref<1x128xf32, #tpu.memory_space<vmem>>, %arg4: memref<32x128xf32, #tpu.memory_space<vmem>>, %arg5: memref<32x128xf32, #tpu.memory_space<vmem>>, %arg6: memref<1x128xf32, #tpu.memory_space<vmem>>, %arg7: memref<1x32xf32, #tpu.memory_space<vmem>>, %arg8: memref<1x32xf32, #tpu.memory_space<vmem>>, %arg9: memref<32x16xf32, #tpu.memory_space<vmem>>, %arg10: memref<1x16xf32, #tpu.memory_space<vmem>>, %arg11: memref<1x16xf32, #tpu.memory_space<vmem>>, %arg12: memref<1x16xf32, #tpu.memory_space<vmem>>, %arg13: memref<16x1xf32, #tpu.memory_space<vmem>>, %arg14: memref<1x1xf32, #tpu.memory_space<vmem>>, %arg15: memref<16x32xf32, #tpu.memory_space<vmem>>, %arg16: memref<2x16x32xf32, #tpu.memory_space<vmem>>, %arg17: memref<2x16x32xf32, #tpu.memory_space<vmem>>, %arg18: memref<8x1xf32, #tpu.memory_space<vmem>>, %arg19: memref<128x32xf32, #tpu.memory_space<vmem>>, %arg20: memref<128x128xf32, #tpu.memory_space<vmem>>) attributes {dimension_semantics = [], scalar_prefetch = 0 : i64, scratch_operands = 2 : i64, tpu.core_type = #tpu.core_type<tc>} {
    %c0 = arith.constant 0 : index
    %c0_0 = arith.constant 0 : index
    %0 = vector.load %arg0[%c0, %c0_0] : memref<128x8xf32, #tpu.memory_space<vmem>>, vector<128x8xf32>
    %c0_1 = arith.constant 0 : index
    %c0_2 = arith.constant 0 : index
    %1 = vector.load %arg1[%c0_1, %c0_2] : memref<8x128xf32, #tpu.memory_space<vmem>>, vector<8x128xf32>
    %cst = arith.constant dense<0.000000e+00> : vector<128x128xf32>
    %2 = tpu.matmul %0, %1, %cst {dimension_numbers = #tpu.dot_dimension_numbers<[1], [0], [0], [1], [0, 0, 1, 1], [], []>} : vector<128x8xf32>, vector<8x128xf32>, vector<128x128xf32> -> vector<128x128xf32>
    %c0_3 = arith.constant 0 : index
    %c0_4 = arith.constant 0 : index
    %3 = vector.load %arg3[%c0_3, %c0_4] : memref<1x128xf32, #tpu.memory_space<vmem>>, vector<1x128xf32>
    %4 = vector.broadcast %3 : vector<1x128xf32> to vector<128x128xf32>
    %5 = arith.addf %2, %4 : vector<128x128xf32>
    %c0_5 = arith.constant 0 : index
    %c0_6 = arith.constant 0 : index
    %6 = vector.load %arg20[%c0_5, %c0_6] : memref<128x128xf32, #tpu.memory_space<vmem>>, vector<128x128xf32>
    tpu.vector_store %arg20[%c0_5, %c0_6], %5 {strides = array<i32>} : memref<128x128xf32, #tpu.memory_space<vmem>>, vector<128x128xf32>,
    %c0_7 = arith.constant 0 : index
    %c0_8 = arith.constant 0 : index
    %7 = vector.load %arg2[%c0_7, %c0_8] : memref<32x128xf32, #tpu.memory_space<vmem>>, vector<32x128xf32>
    %cst_9 = arith.constant 0.000000e+00 : f32
    %8 = vector.broadcast %cst_9 : f32 to vector<16x32xf32>
    %cst_10 = arith.constant 0.000000e+00 : f32
    %9 = vector.broadcast %cst_10 : f32 to vector<16x32xf32>
    %c0_i32 = arith.constant 0 : i32
    %c16_i32 = arith.constant 16 : i32
    %10 = arith.muli %c0_i32, %c16_i32 : i32
    %11 = tpu.assume_multiple %10, 16 : i32
    %12 = arith.index_cast %11 : i32 to index
    %c0_11 = arith.constant 0 : index
    %13 = vector.load %arg20[%12, %c0_11] : memref<128x128xf32, #tpu.memory_space<vmem>>, vector<16x128xf32>
    %cst_12 = arith.constant dense<0.000000e+00> : vector<16x128xf32>
    %14 = tpu.matmul %8, %7, %cst_12 {dimension_numbers = #tpu.dot_dimension_numbers<[1], [0], [0], [1], [0, 0, 1, 1], [], []>} : vector<16x32xf32>, vector<32x128xf32>, vector<16x128xf32> -> vector<16x128xf32>
    %15 = arith.addf %13, %14 : vector<16x128xf32>
    %16 = vector.extract_strided_slice %15 {offsets = [0, 0], sizes = [16, 32], strides = [1, 1]} : vector<16x128xf32> to vector<16x32xf32>
    %17 = arith.negf %16 : vector<16x32xf32>
    %18 = math.exp %17 : vector<16x32xf32>
    %cst_13 = arith.constant 1.000000e+00 : f32
    %19 = vector.broadcast %cst_13 : f32 to vector<16x32xf32>
    %20 = arith.addf %19, %18 : vector<16x32xf32>
    %21 = arith.divf %19, %20 : vector<16x32xf32>
    %22 = vector.extract_strided_slice %15 {offsets = [0, 32], sizes = [16, 32], strides = [1, 1]} : vector<16x128xf32> to vector<16x32xf32>
    %23 = arith.negf %22 : vector<16x32xf32>
    %24 = math.exp %23 : vector<16x32xf32>
    %cst_14 = arith.constant 1.000000e+00 : f32
    %25 = vector.broadcast %cst_14 : f32 to vector<16x32xf32>
    %26 = arith.addf %25, %24 : vector<16x32xf32>
    %27 = arith.divf %25, %26 : vector<16x32xf32>
    %28 = vector.extract_strided_slice %15 {offsets = [0, 64], sizes = [16, 32], strides = [1, 1]} : vector<16x128xf32> to vector<16x32xf32>
    %29 = math.tanh %28 : vector<16x32xf32>
    %30 = vector.extract_strided_slice %15 {offsets = [0, 96], sizes = [16, 32], strides = [1, 1]} : vector<16x128xf32> to vector<16x32xf32>
    %31 = arith.negf %30 : vector<16x32xf32>
    %32 = math.exp %31 : vector<16x32xf32>
    %cst_15 = arith.constant 1.000000e+00 : f32
    %33 = vector.broadcast %cst_15 : f32 to vector<16x32xf32>
    %34 = arith.addf %33, %32 : vector<16x32xf32>
    %35 = arith.divf %33, %34 : vector<16x32xf32>
    %36 = arith.mulf %27, %9 : vector<16x32xf32>
    %37 = arith.mulf %21, %29 : vector<16x32xf32>
    %38 = arith.addf %36, %37 : vector<16x32xf32>
    %39 = math.tanh %38 : vector<16x32xf32>
    %40 = arith.mulf %35, %39 : vector<16x32xf32>
    %41 = arith.index_cast %11 : i32 to index
    %c0_16 = arith.constant 0 : index
    %42 = vector.load %arg19[%41, %c0_16] : memref<128x32xf32, #tpu.memory_space<vmem>>, vector<16x32xf32>
    tpu.vector_store %arg19[%41, %c0_16], %40 {strides = array<i32>} : memref<128x32xf32, #tpu.memory_space<vmem>>, vector<16x32xf32>,
    %c1_i32 = arith.constant 1 : i32
    %c16_i32_17 = arith.constant 16 : i32
    %43 = arith.muli %c1_i32, %c16_i32_17 : i32
    %44 = tpu.assume_multiple %43, 16 : i32
    %45 = arith.index_cast %44 : i32 to index
    %c0_18 = arith.constant 0 : index
    %46 = vector.load %arg20[%45, %c0_18] : memref<128x128xf32, #tpu.memory_space<vmem>>, vector<16x128xf32>
    %cst_19 = arith.constant dense<0.000000e+00> : vector<16x128xf32>
    %47 = tpu.matmul %40, %7, %cst_19 {dimension_numbers = #tpu.dot_dimension_numbers<[1], [0], [0], [1], [0, 0, 1, 1], [], []>} : vector<16x32xf32>, vector<32x128xf32>, vector<16x128xf32> -> vector<16x128xf32>
    %48 = arith.addf %46, %47 : vector<16x128xf32>
    %49 = vector.extract_strided_slice %48 {offsets = [0, 0], sizes = [16, 32], strides = [1, 1]} : vector<16x128xf32> to vector<16x32xf32>
    %50 = arith.negf %49 : vector<16x32xf32>
    %51 = math.exp %50 : vector<16x32xf32>
    %cst_20 = arith.constant 1.000000e+00 : f32
    %52 = vector.broadcast %cst_20 : f32 to vector<16x32xf32>
    %53 = arith.addf %52, %51 : vector<16x32xf32>
    %54 = arith.divf %52, %53 : vector<16x32xf32>
    %55 = vector.extract_strided_slice %48 {offsets = [0, 32], sizes = [16, 32], strides = [1, 1]} : vector<16x128xf32> to vector<16x32xf32>
    %56 = arith.negf %55 : vector<16x32xf32>
    %57 = math.exp %56 : vector<16x32xf32>
    %cst_21 = arith.constant 1.000000e+00 : f32
    %58 = vector.broadcast %cst_21 : f32 to vector<16x32xf32>
    %59 = arith.addf %58, %57 : vector<16x32xf32>
    %60 = arith.divf %58, %59 : vector<16x32xf32>
    %61 = vector.extract_strided_slice %48 {offsets = [0, 64], sizes = [16, 32], strides = [1, 1]} : vector<16x128xf32> to vector<16x32xf32>
    %62 = math.tanh %61 : vector<16x32xf32>
    %63 = vector.extract_strided_slice %48 {offsets = [0, 96], sizes = [16, 32], strides = [1, 1]} : vector<16x128xf32> to vector<16x32xf32>
    %64 = arith.negf %63 : vector<16x32xf32>
    %65 = math.exp %64 : vector<16x32xf32>
    %cst_22 = arith.constant 1.000000e+00 : f32
    %66 = vector.broadcast %cst_22 : f32 to vector<16x32xf32>
    %67 = arith.addf %66, %65 : vector<16x32xf32>
    %68 = arith.divf %66, %67 : vector<16x32xf32>
    %69 = arith.mulf %60, %38 : vector<16x32xf32>
    %70 = arith.mulf %54, %62 : vector<16x32xf32>
    %71 = arith.addf %69, %70 : vector<16x32xf32>
    %72 = math.tanh %71 : vector<16x32xf32>
    %73 = arith.mulf %68, %72 : vector<16x32xf32>
    %74 = arith.index_cast %44 : i32 to index
    %c0_23 = arith.constant 0 : index
    %75 = vector.load %arg19[%74, %c0_23] : memref<128x32xf32, #tpu.memory_space<vmem>>, vector<16x32xf32>
    tpu.vector_store %arg19[%74, %c0_23], %73 {strides = array<i32>} : memref<128x32xf32, #tpu.memory_space<vmem>>, vector<16x32xf32>,
    %c2_i32 = arith.constant 2 : i32
    %c16_i32_24 = arith.constant 16 : i32
    %76 = arith.muli %c2_i32, %c16_i32_24 : i32
    %77 = tpu.assume_multiple %76, 16 : i32
    %78 = arith.index_cast %77 : i32 to index
    %c0_25 = arith.constant 0 : index
    %79 = vector.load %arg20[%78, %c0_25] : memref<128x128xf32, #tpu.memory_space<vmem>>, vector<16x128xf32>
    %cst_26 = arith.constant dense<0.000000e+00> : vector<16x128xf32>
    %80 = tpu.matmul %73, %7, %cst_26 {dimension_numbers = #tpu.dot_dimension_numbers<[1], [0], [0], [1], [0, 0, 1, 1], [], []>} : vector<16x32xf32>, vector<32x128xf32>, vector<16x128xf32> -> vector<16x128xf32>
    %81 = arith.addf %79, %80 : vector<16x128xf32>
    %82 = vector.extract_strided_slice %81 {offsets = [0, 0], sizes = [16, 32], strides = [1, 1]} : vector<16x128xf32> to vector<16x32xf32>
    %83 = arith.negf %82 : vector<16x32xf32>
    %84 = math.exp %83 : vector<16x32xf32>
    %cst_27 = arith.constant 1.000000e+00 : f32
    %85 = vector.broadcast %cst_27 : f32 to vector<16x32xf32>
    %86 = arith.addf %85, %84 : vector<16x32xf32>
    %87 = arith.divf %85, %86 : vector<16x32xf32>
    %88 = vector.extract_strided_slice %81 {offsets = [0, 32], sizes = [16, 32], strides = [1, 1]} : vector<16x128xf32> to vector<16x32xf32>
    %89 = arith.negf %88 : vector<16x32xf32>
    %90 = math.exp %89 : vector<16x32xf32>
    %cst_28 = arith.constant 1.000000e+00 : f32
    %91 = vector.broadcast %cst_28 : f32 to vector<16x32xf32>
    %92 = arith.addf %91, %90 : vector<16x32xf32>
    %93 = arith.divf %91, %92 : vector<16x32xf32>
    %94 = vector.extract_strided_slice %81 {offsets = [0, 64], sizes = [16, 32], strides = [1, 1]} : vector<16x128xf32> to vector<16x32xf32>
    %95 = math.tanh %94 : vector<16x32xf32>
    %96 = vector.extract_strided_slice %81 {offsets = [0, 96], sizes = [16, 32], strides = [1, 1]} : vector<16x128xf32> to vector<16x32xf32>
    %97 = arith.negf %96 : vector<16x32xf32>
    %98 = math.exp %97 : vector<16x32xf32>
    %cst_29 = arith.constant 1.000000e+00 : f32
    %99 = vector.broadcast %cst_29 : f32 to vector<16x32xf32>
    %100 = arith.addf %99, %98 : vector<16x32xf32>
    %101 = arith.divf %99, %100 : vector<16x32xf32>
    %102 = arith.mulf %93, %71 : vector<16x32xf32>
    %103 = arith.mulf %87, %95 : vector<16x32xf32>
    %104 = arith.addf %102, %103 : vector<16x32xf32>
    %105 = math.tanh %104 : vector<16x32xf32>
    %106 = arith.mulf %101, %105 : vector<16x32xf32>
    %107 = arith.index_cast %77 : i32 to index
    %c0_30 = arith.constant 0 : index
    %108 = vector.load %arg19[%107, %c0_30] : memref<128x32xf32, #tpu.memory_space<vmem>>, vector<16x32xf32>
    tpu.vector_store %arg19[%107, %c0_30], %106 {strides = array<i32>} : memref<128x32xf32, #tpu.memory_space<vmem>>, vector<16x32xf32>,
    %c3_i32 = arith.constant 3 : i32
    %c16_i32_31 = arith.constant 16 : i32
    %109 = arith.muli %c3_i32, %c16_i32_31 : i32
    %110 = tpu.assume_multiple %109, 16 : i32
    %111 = arith.index_cast %110 : i32 to index
    %c0_32 = arith.constant 0 : index
    %112 = vector.load %arg20[%111, %c0_32] : memref<128x128xf32, #tpu.memory_space<vmem>>, vector<16x128xf32>
    %cst_33 = arith.constant dense<0.000000e+00> : vector<16x128xf32>
    %113 = tpu.matmul %106, %7, %cst_33 {dimension_numbers = #tpu.dot_dimension_numbers<[1], [0], [0], [1], [0, 0, 1, 1], [], []>} : vector<16x32xf32>, vector<32x128xf32>, vector<16x128xf32> -> vector<16x128xf32>
    %114 = arith.addf %112, %113 : vector<16x128xf32>
    %115 = vector.extract_strided_slice %114 {offsets = [0, 0], sizes = [16, 32], strides = [1, 1]} : vector<16x128xf32> to vector<16x32xf32>
    %116 = arith.negf %115 : vector<16x32xf32>
    %117 = math.exp %116 : vector<16x32xf32>
    %cst_34 = arith.constant 1.000000e+00 : f32
    %118 = vector.broadcast %cst_34 : f32 to vector<16x32xf32>
    %119 = arith.addf %118, %117 : vector<16x32xf32>
    %120 = arith.divf %118, %119 : vector<16x32xf32>
    %121 = vector.extract_strided_slice %114 {offsets = [0, 32], sizes = [16, 32], strides = [1, 1]} : vector<16x128xf32> to vector<16x32xf32>
    %122 = arith.negf %121 : vector<16x32xf32>
    %123 = math.exp %122 : vector<16x32xf32>
    %cst_35 = arith.constant 1.000000e+00 : f32
    %124 = vector.broadcast %cst_35 : f32 to vector<16x32xf32>
    %125 = arith.addf %124, %123 : vector<16x32xf32>
    %126 = arith.divf %124, %125 : vector<16x32xf32>
    %127 = vector.extract_strided_slice %114 {offsets = [0, 64], sizes = [16, 32], strides = [1, 1]} : vector<16x128xf32> to vector<16x32xf32>
    %128 = math.tanh %127 : vector<16x32xf32>
    %129 = vector.extract_strided_slice %114 {offsets = [0, 96], sizes = [16, 32], strides = [1, 1]} : vector<16x128xf32> to vector<16x32xf32>
    %130 = arith.negf %129 : vector<16x32xf32>
    %131 = math.exp %130 : vector<16x32xf32>
    %cst_36 = arith.constant 1.000000e+00 : f32
    %132 = vector.broadcast %cst_36 : f32 to vector<16x32xf32>
    %133 = arith.addf %132, %131 : vector<16x32xf32>
    %134 = arith.divf %132, %133 : vector<16x32xf32>
    %135 = arith.mulf %126, %104 : vector<16x32xf32>
    %136 = arith.mulf %120, %128 : vector<16x32xf32>
    %137 = arith.addf %135, %136 : vector<16x32xf32>
    %138 = math.tanh %137 : vector<16x32xf32>
    %139 = arith.mulf %134, %138 : vector<16x32xf32>
    %140 = arith.index_cast %110 : i32 to index
    %c0_37 = arith.constant 0 : index
    %141 = vector.load %arg19[%140, %c0_37] : memref<128x32xf32, #tpu.memory_space<vmem>>, vector<16x32xf32>
    tpu.vector_store %arg19[%140, %c0_37], %139 {strides = array<i32>} : memref<128x32xf32, #tpu.memory_space<vmem>>, vector<16x32xf32>,
    %c4_i32 = arith.constant 4 : i32
    %c16_i32_38 = arith.constant 16 : i32
    %142 = arith.muli %c4_i32, %c16_i32_38 : i32
    %143 = tpu.assume_multiple %142, 16 : i32
    %144 = arith.index_cast %143 : i32 to index
    %c0_39 = arith.constant 0 : index
    %145 = vector.load %arg20[%144, %c0_39] : memref<128x128xf32, #tpu.memory_space<vmem>>, vector<16x128xf32>
    %cst_40 = arith.constant dense<0.000000e+00> : vector<16x128xf32>
    %146 = tpu.matmul %139, %7, %cst_40 {dimension_numbers = #tpu.dot_dimension_numbers<[1], [0], [0], [1], [0, 0, 1, 1], [], []>} : vector<16x32xf32>, vector<32x128xf32>, vector<16x128xf32> -> vector<16x128xf32>
    %147 = arith.addf %145, %146 : vector<16x128xf32>
    %148 = vector.extract_strided_slice %147 {offsets = [0, 0], sizes = [16, 32], strides = [1, 1]} : vector<16x128xf32> to vector<16x32xf32>
    %149 = arith.negf %148 : vector<16x32xf32>
    %150 = math.exp %149 : vector<16x32xf32>
    %cst_41 = arith.constant 1.000000e+00 : f32
    %151 = vector.broadcast %cst_41 : f32 to vector<16x32xf32>
    %152 = arith.addf %151, %150 : vector<16x32xf32>
    %153 = arith.divf %151, %152 : vector<16x32xf32>
    %154 = vector.extract_strided_slice %147 {offsets = [0, 32], sizes = [16, 32], strides = [1, 1]} : vector<16x128xf32> to vector<16x32xf32>
    %155 = arith.negf %154 : vector<16x32xf32>
    %156 = math.exp %155 : vector<16x32xf32>
    %cst_42 = arith.constant 1.000000e+00 : f32
    %157 = vector.broadcast %cst_42 : f32 to vector<16x32xf32>
    %158 = arith.addf %157, %156 : vector<16x32xf32>
    %159 = arith.divf %157, %158 : vector<16x32xf32>
    %160 = vector.extract_strided_slice %147 {offsets = [0, 64], sizes = [16, 32], strides = [1, 1]} : vector<16x128xf32> to vector<16x32xf32>
    %161 = math.tanh %160 : vector<16x32xf32>
    %162 = vector.extract_strided_slice %147 {offsets = [0, 96], sizes = [16, 32], strides = [1, 1]} : vector<16x128xf32> to vector<16x32xf32>
    %163 = arith.negf %162 : vector<16x32xf32>
    %164 = math.exp %163 : vector<16x32xf32>
    %cst_43 = arith.constant 1.000000e+00 : f32
    %165 = vector.broadcast %cst_43 : f32 to vector<16x32xf32>
    %166 = arith.addf %165, %164 : vector<16x32xf32>
    %167 = arith.divf %165, %166 : vector<16x32xf32>
    %168 = arith.mulf %159, %137 : vector<16x32xf32>
    %169 = arith.mulf %153, %161 : vector<16x32xf32>
    %170 = arith.addf %168, %169 : vector<16x32xf32>
    %171 = math.tanh %170 : vector<16x32xf32>
    %172 = arith.mulf %167, %171 : vector<16x32xf32>
    %173 = arith.index_cast %143 : i32 to index
    %c0_44 = arith.constant 0 : index
    %174 = vector.load %arg19[%173, %c0_44] : memref<128x32xf32, #tpu.memory_space<vmem>>, vector<16x32xf32>
    tpu.vector_store %arg19[%173, %c0_44], %172 {strides = array<i32>} : memref<128x32xf32, #tpu.memory_space<vmem>>, vector<16x32xf32>,
    %c5_i32 = arith.constant 5 : i32
    %c16_i32_45 = arith.constant 16 : i32
    %175 = arith.muli %c5_i32, %c16_i32_45 : i32
    %176 = tpu.assume_multiple %175, 16 : i32
    %177 = arith.index_cast %176 : i32 to index
    %c0_46 = arith.constant 0 : index
    %178 = vector.load %arg20[%177, %c0_46] : memref<128x128xf32, #tpu.memory_space<vmem>>, vector<16x128xf32>
    %cst_47 = arith.constant dense<0.000000e+00> : vector<16x128xf32>
    %179 = tpu.matmul %172, %7, %cst_47 {dimension_numbers = #tpu.dot_dimension_numbers<[1], [0], [0], [1], [0, 0, 1, 1], [], []>} : vector<16x32xf32>, vector<32x128xf32>, vector<16x128xf32> -> vector<16x128xf32>
    %180 = arith.addf %178, %179 : vector<16x128xf32>
    %181 = vector.extract_strided_slice %180 {offsets = [0, 0], sizes = [16, 32], strides = [1, 1]} : vector<16x128xf32> to vector<16x32xf32>
    %182 = arith.negf %181 : vector<16x32xf32>
    %183 = math.exp %182 : vector<16x32xf32>
    %cst_48 = arith.constant 1.000000e+00 : f32
    %184 = vector.broadcast %cst_48 : f32 to vector<16x32xf32>
    %185 = arith.addf %184, %183 : vector<16x32xf32>
    %186 = arith.divf %184, %185 : vector<16x32xf32>
    %187 = vector.extract_strided_slice %180 {offsets = [0, 32], sizes = [16, 32], strides = [1, 1]} : vector<16x128xf32> to vector<16x32xf32>
    %188 = arith.negf %187 : vector<16x32xf32>
    %189 = math.exp %188 : vector<16x32xf32>
    %cst_49 = arith.constant 1.000000e+00 : f32
    %190 = vector.broadcast %cst_49 : f32 to vector<16x32xf32>
    %191 = arith.addf %190, %189 : vector<16x32xf32>
    %192 = arith.divf %190, %191 : vector<16x32xf32>
    %193 = vector.extract_strided_slice %180 {offsets = [0, 64], sizes = [16, 32], strides = [1, 1]} : vector<16x128xf32> to vector<16x32xf32>
    %194 = math.tanh %193 : vector<16x32xf32>
    %195 = vector.extract_strided_slice %180 {offsets = [0, 96], sizes = [16, 32], strides = [1, 1]} : vector<16x128xf32> to vector<16x32xf32>
    %196 = arith.negf %195 : vector<16x32xf32>
    %197 = math.exp %196 : vector<16x32xf32>
    %cst_50 = arith.constant 1.000000e+00 : f32
    %198 = vector.broadcast %cst_50 : f32 to vector<16x32xf32>
    %199 = arith.addf %198, %197 : vector<16x32xf32>
    %200 = arith.divf %198, %199 : vector<16x32xf32>
    %201 = arith.mulf %192, %170 : vector<16x32xf32>
    %202 = arith.mulf %186, %194 : vector<16x32xf32>
    %203 = arith.addf %201, %202 : vector<16x32xf32>
    %204 = math.tanh %203 : vector<16x32xf32>
    %205 = arith.mulf %200, %204 : vector<16x32xf32>
    %206 = arith.index_cast %176 : i32 to index
    %c0_51 = arith.constant 0 : index
    %207 = vector.load %arg19[%206, %c0_51] : memref<128x32xf32, #tpu.memory_space<vmem>>, vector<16x32xf32>
    tpu.vector_store %arg19[%206, %c0_51], %205 {strides = array<i32>} : memref<128x32xf32, #tpu.memory_space<vmem>>, vector<16x32xf32>,
    %c6_i32 = arith.constant 6 : i32
    %c16_i32_52 = arith.constant 16 : i32
    %208 = arith.muli %c6_i32, %c16_i32_52 : i32
    %209 = tpu.assume_multiple %208, 16 : i32
    %210 = arith.index_cast %209 : i32 to index
    %c0_53 = arith.constant 0 : index
    %211 = vector.load %arg20[%210, %c0_53] : memref<128x128xf32, #tpu.memory_space<vmem>>, vector<16x128xf32>
    %cst_54 = arith.constant dense<0.000000e+00> : vector<16x128xf32>
    %212 = tpu.matmul %205, %7, %cst_54 {dimension_numbers = #tpu.dot_dimension_numbers<[1], [0], [0], [1], [0, 0, 1, 1], [], []>} : vector<16x32xf32>, vector<32x128xf32>, vector<16x128xf32> -> vector<16x128xf32>
    %213 = arith.addf %211, %212 : vector<16x128xf32>
    %214 = vector.extract_strided_slice %213 {offsets = [0, 0], sizes = [16, 32], strides = [1, 1]} : vector<16x128xf32> to vector<16x32xf32>
    %215 = arith.negf %214 : vector<16x32xf32>
    %216 = math.exp %215 : vector<16x32xf32>
    %cst_55 = arith.constant 1.000000e+00 : f32
    %217 = vector.broadcast %cst_55 : f32 to vector<16x32xf32>
    %218 = arith.addf %217, %216 : vector<16x32xf32>
    %219 = arith.divf %217, %218 : vector<16x32xf32>
    %220 = vector.extract_strided_slice %213 {offsets = [0, 32], sizes = [16, 32], strides = [1, 1]} : vector<16x128xf32> to vector<16x32xf32>
    %221 = arith.negf %220 : vector<16x32xf32>
    %222 = math.exp %221 : vector<16x32xf32>
    %cst_56 = arith.constant 1.000000e+00 : f32
    %223 = vector.broadcast %cst_56 : f32 to vector<16x32xf32>
    %224 = arith.addf %223, %222 : vector<16x32xf32>
    %225 = arith.divf %223, %224 : vector<16x32xf32>
    %226 = vector.extract_strided_slice %213 {offsets = [0, 64], sizes = [16, 32], strides = [1, 1]} : vector<16x128xf32> to vector<16x32xf32>
    %227 = math.tanh %226 : vector<16x32xf32>
    %228 = vector.extract_strided_slice %213 {offsets = [0, 96], sizes = [16, 32], strides = [1, 1]} : vector<16x128xf32> to vector<16x32xf32>
    %229 = arith.negf %228 : vector<16x32xf32>
    %230 = math.exp %229 : vector<16x32xf32>
    %cst_57 = arith.constant 1.000000e+00 : f32
    %231 = vector.broadcast %cst_57 : f32 to vector<16x32xf32>
    %232 = arith.addf %231, %230 : vector<16x32xf32>
    %233 = arith.divf %231, %232 : vector<16x32xf32>
    %234 = arith.mulf %225, %203 : vector<16x32xf32>
    %235 = arith.mulf %219, %227 : vector<16x32xf32>
    %236 = arith.addf %234, %235 : vector<16x32xf32>
    %237 = math.tanh %236 : vector<16x32xf32>
    %238 = arith.mulf %233, %237 : vector<16x32xf32>
    %239 = arith.index_cast %209 : i32 to index
    %c0_58 = arith.constant 0 : index
    %240 = vector.load %arg19[%239, %c0_58] : memref<128x32xf32, #tpu.memory_space<vmem>>, vector<16x32xf32>
    tpu.vector_store %arg19[%239, %c0_58], %238 {strides = array<i32>} : memref<128x32xf32, #tpu.memory_space<vmem>>, vector<16x32xf32>,
    %c7_i32 = arith.constant 7 : i32
    %c16_i32_59 = arith.constant 16 : i32
    %241 = arith.muli %c7_i32, %c16_i32_59 : i32
    %242 = tpu.assume_multiple %241, 16 : i32
    %243 = arith.index_cast %242 : i32 to index
    %c0_60 = arith.constant 0 : index
    %244 = vector.load %arg20[%243, %c0_60] : memref<128x128xf32, #tpu.memory_space<vmem>>, vector<16x128xf32>
    %cst_61 = arith.constant dense<0.000000e+00> : vector<16x128xf32>
    %245 = tpu.matmul %238, %7, %cst_61 {dimension_numbers = #tpu.dot_dimension_numbers<[1], [0], [0], [1], [0, 0, 1, 1], [], []>} : vector<16x32xf32>, vector<32x128xf32>, vector<16x128xf32> -> vector<16x128xf32>
    %246 = arith.addf %244, %245 : vector<16x128xf32>
    %247 = vector.extract_strided_slice %246 {offsets = [0, 0], sizes = [16, 32], strides = [1, 1]} : vector<16x128xf32> to vector<16x32xf32>
    %248 = arith.negf %247 : vector<16x32xf32>
    %249 = math.exp %248 : vector<16x32xf32>
    %cst_62 = arith.constant 1.000000e+00 : f32
    %250 = vector.broadcast %cst_62 : f32 to vector<16x32xf32>
    %251 = arith.addf %250, %249 : vector<16x32xf32>
    %252 = arith.divf %250, %251 : vector<16x32xf32>
    %253 = vector.extract_strided_slice %246 {offsets = [0, 32], sizes = [16, 32], strides = [1, 1]} : vector<16x128xf32> to vector<16x32xf32>
    %254 = arith.negf %253 : vector<16x32xf32>
    %255 = math.exp %254 : vector<16x32xf32>
    %cst_63 = arith.constant 1.000000e+00 : f32
    %256 = vector.broadcast %cst_63 : f32 to vector<16x32xf32>
    %257 = arith.addf %256, %255 : vector<16x32xf32>
    %258 = arith.divf %256, %257 : vector<16x32xf32>
    %259 = vector.extract_strided_slice %246 {offsets = [0, 64], sizes = [16, 32], strides = [1, 1]} : vector<16x128xf32> to vector<16x32xf32>
    %260 = math.tanh %259 : vector<16x32xf32>
    %261 = vector.extract_strided_slice %246 {offsets = [0, 96], sizes = [16, 32], strides = [1, 1]} : vector<16x128xf32> to vector<16x32xf32>
    %262 = arith.negf %261 : vector<16x32xf32>
    %263 = math.exp %262 : vector<16x32xf32>
    %cst_64 = arith.constant 1.000000e+00 : f32
    %264 = vector.broadcast %cst_64 : f32 to vector<16x32xf32>
    %265 = arith.addf %264, %263 : vector<16x32xf32>
    %266 = arith.divf %264, %265 : vector<16x32xf32>
    %267 = arith.mulf %258, %236 : vector<16x32xf32>
    %268 = arith.mulf %252, %260 : vector<16x32xf32>
    %269 = arith.addf %267, %268 : vector<16x32xf32>
    %270 = math.tanh %269 : vector<16x32xf32>
    %271 = arith.mulf %266, %270 : vector<16x32xf32>
    %272 = arith.index_cast %242 : i32 to index
    %c0_65 = arith.constant 0 : index
    %273 = vector.load %arg19[%272, %c0_65] : memref<128x32xf32, #tpu.memory_space<vmem>>, vector<16x32xf32>
    tpu.vector_store %arg19[%272, %c0_65], %271 {strides = array<i32>} : memref<128x32xf32, #tpu.memory_space<vmem>>, vector<16x32xf32>,
    %c8_i32 = arith.constant 8 : i32
    %c0_66 = arith.constant 0 : index
    %c0_67 = arith.constant 0 : index
    %c0_68 = arith.constant 0 : index
    %274 = vector.load %arg16[%c0_66, %c0_67, %c0_68] : memref<2x16x32xf32, #tpu.memory_space<vmem>>, vector<1x16x32xf32>
    %275 = vector.shape_cast %274 : vector<1x16x32xf32> to vector<16x32xf32>
    %276 = vector.shape_cast %271 : vector<16x32xf32> to vector<1x16x32xf32>
    tpu.vector_store %arg16[%c0_66, %c0_67, %c0_68], %276 {strides = array<i32>} : memref<2x16x32xf32, #tpu.memory_space<vmem>>, vector<1x16x32xf32>,
    %c0_69 = arith.constant 0 : index
    %c0_70 = arith.constant 0 : index
    %c0_71 = arith.constant 0 : index
    %277 = vector.load %arg17[%c0_69, %c0_70, %c0_71] : memref<2x16x32xf32, #tpu.memory_space<vmem>>, vector<1x16x32xf32>
    %278 = vector.shape_cast %277 : vector<1x16x32xf32> to vector<16x32xf32>
    %279 = vector.shape_cast %269 : vector<16x32xf32> to vector<1x16x32xf32>
    tpu.vector_store %arg17[%c0_69, %c0_70, %c0_71], %279 {strides = array<i32>} : memref<2x16x32xf32, #tpu.memory_space<vmem>>, vector<1x16x32xf32>,
    %c0_72 = arith.constant 0 : index
    %c0_73 = arith.constant 0 : index
    %280 = vector.load %arg19[%c0_72, %c0_73] : memref<128x32xf32, #tpu.memory_space<vmem>>, vector<128x32xf32>
    %c0_74 = arith.constant 0 : index
    %c0_75 = arith.constant 0 : index
    %281 = vector.load %arg4[%c0_74, %c0_75] : memref<32x128xf32, #tpu.memory_space<vmem>>, vector<32x128xf32>
    %cst_76 = arith.constant dense<0.000000e+00> : vector<128x128xf32>
    %282 = tpu.matmul %280, %281, %cst_76 {dimension_numbers = #tpu.dot_dimension_numbers<[1], [0], [0], [1], [0, 0, 1, 1], [], []>} : vector<128x32xf32>, vector<32x128xf32>, vector<128x128xf32> -> vector<128x128xf32>
    %c0_77 = arith.constant 0 : index
    %c0_78 = arith.constant 0 : index
    %283 = vector.load %arg6[%c0_77, %c0_78] : memref<1x128xf32, #tpu.memory_space<vmem>>, vector<1x128xf32>
    %284 = vector.broadcast %283 : vector<1x128xf32> to vector<128x128xf32>
    %285 = arith.addf %282, %284 : vector<128x128xf32>
    %c0_79 = arith.constant 0 : index
    %c0_80 = arith.constant 0 : index
    %286 = vector.load %arg20[%c0_79, %c0_80] : memref<128x128xf32, #tpu.memory_space<vmem>>, vector<128x128xf32>
    tpu.vector_store %arg20[%c0_79, %c0_80], %285 {strides = array<i32>} : memref<128x128xf32, #tpu.memory_space<vmem>>, vector<128x128xf32>,
    %c0_81 = arith.constant 0 : index
    %c0_82 = arith.constant 0 : index
    %287 = vector.load %arg5[%c0_81, %c0_82] : memref<32x128xf32, #tpu.memory_space<vmem>>, vector<32x128xf32>
    %cst_83 = arith.constant 0.000000e+00 : f32
    %288 = vector.broadcast %cst_83 : f32 to vector<16x32xf32>
    %cst_84 = arith.constant 0.000000e+00 : f32
    %289 = vector.broadcast %cst_84 : f32 to vector<16x32xf32>
    %c0_i32_85 = arith.constant 0 : i32
    %c16_i32_86 = arith.constant 16 : i32
    %290 = arith.muli %c0_i32_85, %c16_i32_86 : i32
    %291 = tpu.assume_multiple %290, 16 : i32
    %292 = arith.index_cast %291 : i32 to index
    %c0_87 = arith.constant 0 : index
    %293 = vector.load %arg20[%292, %c0_87] : memref<128x128xf32, #tpu.memory_space<vmem>>, vector<16x128xf32>
    %cst_88 = arith.constant dense<0.000000e+00> : vector<16x128xf32>
    %294 = tpu.matmul %288, %287, %cst_88 {dimension_numbers = #tpu.dot_dimension_numbers<[1], [0], [0], [1], [0, 0, 1, 1], [], []>} : vector<16x32xf32>, vector<32x128xf32>, vector<16x128xf32> -> vector<16x128xf32>
    %295 = arith.addf %293, %294 : vector<16x128xf32>
    %296 = vector.extract_strided_slice %295 {offsets = [0, 0], sizes = [16, 32], strides = [1, 1]} : vector<16x128xf32> to vector<16x32xf32>
    %297 = arith.negf %296 : vector<16x32xf32>
    %298 = math.exp %297 : vector<16x32xf32>
    %cst_89 = arith.constant 1.000000e+00 : f32
    %299 = vector.broadcast %cst_89 : f32 to vector<16x32xf32>
    %300 = arith.addf %299, %298 : vector<16x32xf32>
    %301 = arith.divf %299, %300 : vector<16x32xf32>
    %302 = vector.extract_strided_slice %295 {offsets = [0, 32], sizes = [16, 32], strides = [1, 1]} : vector<16x128xf32> to vector<16x32xf32>
    %303 = arith.negf %302 : vector<16x32xf32>
    %304 = math.exp %303 : vector<16x32xf32>
    %cst_90 = arith.constant 1.000000e+00 : f32
    %305 = vector.broadcast %cst_90 : f32 to vector<16x32xf32>
    %306 = arith.addf %305, %304 : vector<16x32xf32>
    %307 = arith.divf %305, %306 : vector<16x32xf32>
    %308 = vector.extract_strided_slice %295 {offsets = [0, 64], sizes = [16, 32], strides = [1, 1]} : vector<16x128xf32> to vector<16x32xf32>
    %309 = math.tanh %308 : vector<16x32xf32>
    %310 = vector.extract_strided_slice %295 {offsets = [0, 96], sizes = [16, 32], strides = [1, 1]} : vector<16x128xf32> to vector<16x32xf32>
    %311 = arith.negf %310 : vector<16x32xf32>
    %312 = math.exp %311 : vector<16x32xf32>
    %cst_91 = arith.constant 1.000000e+00 : f32
    %313 = vector.broadcast %cst_91 : f32 to vector<16x32xf32>
    %314 = arith.addf %313, %312 : vector<16x32xf32>
    %315 = arith.divf %313, %314 : vector<16x32xf32>
    %316 = arith.mulf %307, %289 : vector<16x32xf32>
    %317 = arith.mulf %301, %309 : vector<16x32xf32>
    %318 = arith.addf %316, %317 : vector<16x32xf32>
    %319 = math.tanh %318 : vector<16x32xf32>
    %320 = arith.mulf %315, %319 : vector<16x32xf32>
    %c1_i32_92 = arith.constant 1 : i32
    %c16_i32_93 = arith.constant 16 : i32
    %321 = arith.muli %c1_i32_92, %c16_i32_93 : i32
    %322 = tpu.assume_multiple %321, 16 : i32
    %323 = arith.index_cast %322 : i32 to index
    %c0_94 = arith.constant 0 : index
    %324 = vector.load %arg20[%323, %c0_94] : memref<128x128xf32, #tpu.memory_space<vmem>>, vector<16x128xf32>
    %cst_95 = arith.constant dense<0.000000e+00> : vector<16x128xf32>
    %325 = tpu.matmul %320, %287, %cst_95 {dimension_numbers = #tpu.dot_dimension_numbers<[1], [0], [0], [1], [0, 0, 1, 1], [], []>} : vector<16x32xf32>, vector<32x128xf32>, vector<16x128xf32> -> vector<16x128xf32>
    %326 = arith.addf %324, %325 : vector<16x128xf32>
    %327 = vector.extract_strided_slice %326 {offsets = [0, 0], sizes = [16, 32], strides = [1, 1]} : vector<16x128xf32> to vector<16x32xf32>
    %328 = arith.negf %327 : vector<16x32xf32>
    %329 = math.exp %328 : vector<16x32xf32>
    %cst_96 = arith.constant 1.000000e+00 : f32
    %330 = vector.broadcast %cst_96 : f32 to vector<16x32xf32>
    %331 = arith.addf %330, %329 : vector<16x32xf32>
    %332 = arith.divf %330, %331 : vector<16x32xf32>
    %333 = vector.extract_strided_slice %326 {offsets = [0, 32], sizes = [16, 32], strides = [1, 1]} : vector<16x128xf32> to vector<16x32xf32>
    %334 = arith.negf %333 : vector<16x32xf32>
    %335 = math.exp %334 : vector<16x32xf32>
    %cst_97 = arith.constant 1.000000e+00 : f32
    %336 = vector.broadcast %cst_97 : f32 to vector<16x32xf32>
    %337 = arith.addf %336, %335 : vector<16x32xf32>
    %338 = arith.divf %336, %337 : vector<16x32xf32>
    %339 = vector.extract_strided_slice %326 {offsets = [0, 64], sizes = [16, 32], strides = [1, 1]} : vector<16x128xf32> to vector<16x32xf32>
    %340 = math.tanh %339 : vector<16x32xf32>
    %341 = vector.extract_strided_slice %326 {offsets = [0, 96], sizes = [16, 32], strides = [1, 1]} : vector<16x128xf32> to vector<16x32xf32>
    %342 = arith.negf %341 : vector<16x32xf32>
    %343 = math.exp %342 : vector<16x32xf32>
    %cst_98 = arith.constant 1.000000e+00 : f32
    %344 = vector.broadcast %cst_98 : f32 to vector<16x32xf32>
    %345 = arith.addf %344, %343 : vector<16x32xf32>
    %346 = arith.divf %344, %345 : vector<16x32xf32>
    %347 = arith.mulf %338, %318 : vector<16x32xf32>
    %348 = arith.mulf %332, %340 : vector<16x32xf32>
    %349 = arith.addf %347, %348 : vector<16x32xf32>
    %350 = math.tanh %349 : vector<16x32xf32>
    %351 = arith.mulf %346, %350 : vector<16x32xf32>
    %c2_i32_99 = arith.constant 2 : i32
    %c16_i32_100 = arith.constant 16 : i32
    %352 = arith.muli %c2_i32_99, %c16_i32_100 : i32
    %353 = tpu.assume_multiple %352, 16 : i32
    %354 = arith.index_cast %353 : i32 to index
    %c0_101 = arith.constant 0 : index
    %355 = vector.load %arg20[%354, %c0_101] : memref<128x128xf32, #tpu.memory_space<vmem>>, vector<16x128xf32>
    %cst_102 = arith.constant dense<0.000000e+00> : vector<16x128xf32>
    %356 = tpu.matmul %351, %287, %cst_102 {dimension_numbers = #tpu.dot_dimension_numbers<[1], [0], [0], [1], [0, 0, 1, 1], [], []>} : vector<16x32xf32>, vector<32x128xf32>, vector<16x128xf32> -> vector<16x128xf32>
    %357 = arith.addf %355, %356 : vector<16x128xf32>
    %358 = vector.extract_strided_slice %357 {offsets = [0, 0], sizes = [16, 32], strides = [1, 1]} : vector<16x128xf32> to vector<16x32xf32>
    %359 = arith.negf %358 : vector<16x32xf32>
    %360 = math.exp %359 : vector<16x32xf32>
    %cst_103 = arith.constant 1.000000e+00 : f32
    %361 = vector.broadcast %cst_103 : f32 to vector<16x32xf32>
    %362 = arith.addf %361, %360 : vector<16x32xf32>
    %363 = arith.divf %361, %362 : vector<16x32xf32>
    %364 = vector.extract_strided_slice %357 {offsets = [0, 32], sizes = [16, 32], strides = [1, 1]} : vector<16x128xf32> to vector<16x32xf32>
    %365 = arith.negf %364 : vector<16x32xf32>
    %366 = math.exp %365 : vector<16x32xf32>
    %cst_104 = arith.constant 1.000000e+00 : f32
    %367 = vector.broadcast %cst_104 : f32 to vector<16x32xf32>
    %368 = arith.addf %367, %366 : vector<16x32xf32>
    %369 = arith.divf %367, %368 : vector<16x32xf32>
    %370 = vector.extract_strided_slice %357 {offsets = [0, 64], sizes = [16, 32], strides = [1, 1]} : vector<16x128xf32> to vector<16x32xf32>
    %371 = math.tanh %370 : vector<16x32xf32>
    %372 = vector.extract_strided_slice %357 {offsets = [0, 96], sizes = [16, 32], strides = [1, 1]} : vector<16x128xf32> to vector<16x32xf32>
    %373 = arith.negf %372 : vector<16x32xf32>
    %374 = math.exp %373 : vector<16x32xf32>
    %cst_105 = arith.constant 1.000000e+00 : f32
    %375 = vector.broadcast %cst_105 : f32 to vector<16x32xf32>
    %376 = arith.addf %375, %374 : vector<16x32xf32>
    %377 = arith.divf %375, %376 : vector<16x32xf32>
    %378 = arith.mulf %369, %349 : vector<16x32xf32>
    %379 = arith.mulf %363, %371 : vector<16x32xf32>
    %380 = arith.addf %378, %379 : vector<16x32xf32>
    %381 = math.tanh %380 : vector<16x32xf32>
    %382 = arith.mulf %377, %381 : vector<16x32xf32>
    %c3_i32_106 = arith.constant 3 : i32
    %c16_i32_107 = arith.constant 16 : i32
    %383 = arith.muli %c3_i32_106, %c16_i32_107 : i32
    %384 = tpu.assume_multiple %383, 16 : i32
    %385 = arith.index_cast %384 : i32 to index
    %c0_108 = arith.constant 0 : index
    %386 = vector.load %arg20[%385, %c0_108] : memref<128x128xf32, #tpu.memory_space<vmem>>, vector<16x128xf32>
    %cst_109 = arith.constant dense<0.000000e+00> : vector<16x128xf32>
    %387 = tpu.matmul %382, %287, %cst_109 {dimension_numbers = #tpu.dot_dimension_numbers<[1], [0], [0], [1], [0, 0, 1, 1], [], []>} : vector<16x32xf32>, vector<32x128xf32>, vector<16x128xf32> -> vector<16x128xf32>
    %388 = arith.addf %386, %387 : vector<16x128xf32>
    %389 = vector.extract_strided_slice %388 {offsets = [0, 0], sizes = [16, 32], strides = [1, 1]} : vector<16x128xf32> to vector<16x32xf32>
    %390 = arith.negf %389 : vector<16x32xf32>
    %391 = math.exp %390 : vector<16x32xf32>
    %cst_110 = arith.constant 1.000000e+00 : f32
    %392 = vector.broadcast %cst_110 : f32 to vector<16x32xf32>
    %393 = arith.addf %392, %391 : vector<16x32xf32>
    %394 = arith.divf %392, %393 : vector<16x32xf32>
    %395 = vector.extract_strided_slice %388 {offsets = [0, 32], sizes = [16, 32], strides = [1, 1]} : vector<16x128xf32> to vector<16x32xf32>
    %396 = arith.negf %395 : vector<16x32xf32>
    %397 = math.exp %396 : vector<16x32xf32>
    %cst_111 = arith.constant 1.000000e+00 : f32
    %398 = vector.broadcast %cst_111 : f32 to vector<16x32xf32>
    %399 = arith.addf %398, %397 : vector<16x32xf32>
    %400 = arith.divf %398, %399 : vector<16x32xf32>
    %401 = vector.extract_strided_slice %388 {offsets = [0, 64], sizes = [16, 32], strides = [1, 1]} : vector<16x128xf32> to vector<16x32xf32>
    %402 = math.tanh %401 : vector<16x32xf32>
    %403 = vector.extract_strided_slice %388 {offsets = [0, 96], sizes = [16, 32], strides = [1, 1]} : vector<16x128xf32> to vector<16x32xf32>
    %404 = arith.negf %403 : vector<16x32xf32>
    %405 = math.exp %404 : vector<16x32xf32>
    %cst_112 = arith.constant 1.000000e+00 : f32
    %406 = vector.broadcast %cst_112 : f32 to vector<16x32xf32>
    %407 = arith.addf %406, %405 : vector<16x32xf32>
    %408 = arith.divf %406, %407 : vector<16x32xf32>
    %409 = arith.mulf %400, %380 : vector<16x32xf32>
    %410 = arith.mulf %394, %402 : vector<16x32xf32>
    %411 = arith.addf %409, %410 : vector<16x32xf32>
    %412 = math.tanh %411 : vector<16x32xf32>
    %413 = arith.mulf %408, %412 : vector<16x32xf32>
    %c4_i32_113 = arith.constant 4 : i32
    %c16_i32_114 = arith.constant 16 : i32
    %414 = arith.muli %c4_i32_113, %c16_i32_114 : i32
    %415 = tpu.assume_multiple %414, 16 : i32
    %416 = arith.index_cast %415 : i32 to index
    %c0_115 = arith.constant 0 : index
    %417 = vector.load %arg20[%416, %c0_115] : memref<128x128xf32, #tpu.memory_space<vmem>>, vector<16x128xf32>
    %cst_116 = arith.constant dense<0.000000e+00> : vector<16x128xf32>
    %418 = tpu.matmul %413, %287, %cst_116 {dimension_numbers = #tpu.dot_dimension_numbers<[1], [0], [0], [1], [0, 0, 1, 1], [], []>} : vector<16x32xf32>, vector<32x128xf32>, vector<16x128xf32> -> vector<16x128xf32>
    %419 = arith.addf %417, %418 : vector<16x128xf32>
    %420 = vector.extract_strided_slice %419 {offsets = [0, 0], sizes = [16, 32], strides = [1, 1]} : vector<16x128xf32> to vector<16x32xf32>
    %421 = arith.negf %420 : vector<16x32xf32>
    %422 = math.exp %421 : vector<16x32xf32>
    %cst_117 = arith.constant 1.000000e+00 : f32
    %423 = vector.broadcast %cst_117 : f32 to vector<16x32xf32>
    %424 = arith.addf %423, %422 : vector<16x32xf32>
    %425 = arith.divf %423, %424 : vector<16x32xf32>
    %426 = vector.extract_strided_slice %419 {offsets = [0, 32], sizes = [16, 32], strides = [1, 1]} : vector<16x128xf32> to vector<16x32xf32>
    %427 = arith.negf %426 : vector<16x32xf32>
    %428 = math.exp %427 : vector<16x32xf32>
    %cst_118 = arith.constant 1.000000e+00 : f32
    %429 = vector.broadcast %cst_118 : f32 to vector<16x32xf32>
    %430 = arith.addf %429, %428 : vector<16x32xf32>
    %431 = arith.divf %429, %430 : vector<16x32xf32>
    %432 = vector.extract_strided_slice %419 {offsets = [0, 64], sizes = [16, 32], strides = [1, 1]} : vector<16x128xf32> to vector<16x32xf32>
    %433 = math.tanh %432 : vector<16x32xf32>
    %434 = vector.extract_strided_slice %419 {offsets = [0, 96], sizes = [16, 32], strides = [1, 1]} : vector<16x128xf32> to vector<16x32xf32>
    %435 = arith.negf %434 : vector<16x32xf32>
    %436 = math.exp %435 : vector<16x32xf32>
    %cst_119 = arith.constant 1.000000e+00 : f32
    %437 = vector.broadcast %cst_119 : f32 to vector<16x32xf32>
    %438 = arith.addf %437, %436 : vector<16x32xf32>
    %439 = arith.divf %437, %438 : vector<16x32xf32>
    %440 = arith.mulf %431, %411 : vector<16x32xf32>
    %441 = arith.mulf %425, %433 : vector<16x32xf32>
    %442 = arith.addf %440, %441 : vector<16x32xf32>
    %443 = math.tanh %442 : vector<16x32xf32>
    %444 = arith.mulf %439, %443 : vector<16x32xf32>
    %c5_i32_120 = arith.constant 5 : i32
    %c16_i32_121 = arith.constant 16 : i32
    %445 = arith.muli %c5_i32_120, %c16_i32_121 : i32
    %446 = tpu.assume_multiple %445, 16 : i32
    %447 = arith.index_cast %446 : i32 to index
    %c0_122 = arith.constant 0 : index
    %448 = vector.load %arg20[%447, %c0_122] : memref<128x128xf32, #tpu.memory_space<vmem>>, vector<16x128xf32>
    %cst_123 = arith.constant dense<0.000000e+00> : vector<16x128xf32>
    %449 = tpu.matmul %444, %287, %cst_123 {dimension_numbers = #tpu.dot_dimension_numbers<[1], [0], [0], [1], [0, 0, 1, 1], [], []>} : vector<16x32xf32>, vector<32x128xf32>, vector<16x128xf32> -> vector<16x128xf32>
    %450 = arith.addf %448, %449 : vector<16x128xf32>
    %451 = vector.extract_strided_slice %450 {offsets = [0, 0], sizes = [16, 32], strides = [1, 1]} : vector<16x128xf32> to vector<16x32xf32>
    %452 = arith.negf %451 : vector<16x32xf32>
    %453 = math.exp %452 : vector<16x32xf32>
    %cst_124 = arith.constant 1.000000e+00 : f32
    %454 = vector.broadcast %cst_124 : f32 to vector<16x32xf32>
    %455 = arith.addf %454, %453 : vector<16x32xf32>
    %456 = arith.divf %454, %455 : vector<16x32xf32>
    %457 = vector.extract_strided_slice %450 {offsets = [0, 32], sizes = [16, 32], strides = [1, 1]} : vector<16x128xf32> to vector<16x32xf32>
    %458 = arith.negf %457 : vector<16x32xf32>
    %459 = math.exp %458 : vector<16x32xf32>
    %cst_125 = arith.constant 1.000000e+00 : f32
    %460 = vector.broadcast %cst_125 : f32 to vector<16x32xf32>
    %461 = arith.addf %460, %459 : vector<16x32xf32>
    %462 = arith.divf %460, %461 : vector<16x32xf32>
    %463 = vector.extract_strided_slice %450 {offsets = [0, 64], sizes = [16, 32], strides = [1, 1]} : vector<16x128xf32> to vector<16x32xf32>
    %464 = math.tanh %463 : vector<16x32xf32>
    %465 = vector.extract_strided_slice %450 {offsets = [0, 96], sizes = [16, 32], strides = [1, 1]} : vector<16x128xf32> to vector<16x32xf32>
    %466 = arith.negf %465 : vector<16x32xf32>
    %467 = math.exp %466 : vector<16x32xf32>
    %cst_126 = arith.constant 1.000000e+00 : f32
    %468 = vector.broadcast %cst_126 : f32 to vector<16x32xf32>
    %469 = arith.addf %468, %467 : vector<16x32xf32>
    %470 = arith.divf %468, %469 : vector<16x32xf32>
    %471 = arith.mulf %462, %442 : vector<16x32xf32>
    %472 = arith.mulf %456, %464 : vector<16x32xf32>
    %473 = arith.addf %471, %472 : vector<16x32xf32>
    %474 = math.tanh %473 : vector<16x32xf32>
    %475 = arith.mulf %470, %474 : vector<16x32xf32>
    %c6_i32_127 = arith.constant 6 : i32
    %c16_i32_128 = arith.constant 16 : i32
    %476 = arith.muli %c6_i32_127, %c16_i32_128 : i32
    %477 = tpu.assume_multiple %476, 16 : i32
    %478 = arith.index_cast %477 : i32 to index
    %c0_129 = arith.constant 0 : index
    %479 = vector.load %arg20[%478, %c0_129] : memref<128x128xf32, #tpu.memory_space<vmem>>, vector<16x128xf32>
    %cst_130 = arith.constant dense<0.000000e+00> : vector<16x128xf32>
    %480 = tpu.matmul %475, %287, %cst_130 {dimension_numbers = #tpu.dot_dimension_numbers<[1], [0], [0], [1], [0, 0, 1, 1], [], []>} : vector<16x32xf32>, vector<32x128xf32>, vector<16x128xf32> -> vector<16x128xf32>
    %481 = arith.addf %479, %480 : vector<16x128xf32>
    %482 = vector.extract_strided_slice %481 {offsets = [0, 0], sizes = [16, 32], strides = [1, 1]} : vector<16x128xf32> to vector<16x32xf32>
    %483 = arith.negf %482 : vector<16x32xf32>
    %484 = math.exp %483 : vector<16x32xf32>
    %cst_131 = arith.constant 1.000000e+00 : f32
    %485 = vector.broadcast %cst_131 : f32 to vector<16x32xf32>
    %486 = arith.addf %485, %484 : vector<16x32xf32>
    %487 = arith.divf %485, %486 : vector<16x32xf32>
    %488 = vector.extract_strided_slice %481 {offsets = [0, 32], sizes = [16, 32], strides = [1, 1]} : vector<16x128xf32> to vector<16x32xf32>
    %489 = arith.negf %488 : vector<16x32xf32>
    %490 = math.exp %489 : vector<16x32xf32>
    %cst_132 = arith.constant 1.000000e+00 : f32
    %491 = vector.broadcast %cst_132 : f32 to vector<16x32xf32>
    %492 = arith.addf %491, %490 : vector<16x32xf32>
    %493 = arith.divf %491, %492 : vector<16x32xf32>
    %494 = vector.extract_strided_slice %481 {offsets = [0, 64], sizes = [16, 32], strides = [1, 1]} : vector<16x128xf32> to vector<16x32xf32>
    %495 = math.tanh %494 : vector<16x32xf32>
    %496 = vector.extract_strided_slice %481 {offsets = [0, 96], sizes = [16, 32], strides = [1, 1]} : vector<16x128xf32> to vector<16x32xf32>
    %497 = arith.negf %496 : vector<16x32xf32>
    %498 = math.exp %497 : vector<16x32xf32>
    %cst_133 = arith.constant 1.000000e+00 : f32
    %499 = vector.broadcast %cst_133 : f32 to vector<16x32xf32>
    %500 = arith.addf %499, %498 : vector<16x32xf32>
    %501 = arith.divf %499, %500 : vector<16x32xf32>
    %502 = arith.mulf %493, %473 : vector<16x32xf32>
    %503 = arith.mulf %487, %495 : vector<16x32xf32>
    %504 = arith.addf %502, %503 : vector<16x32xf32>
    %505 = math.tanh %504 : vector<16x32xf32>
    %506 = arith.mulf %501, %505 : vector<16x32xf32>
    %c7_i32_134 = arith.constant 7 : i32
    %c16_i32_135 = arith.constant 16 : i32
    %507 = arith.muli %c7_i32_134, %c16_i32_135 : i32
    %508 = tpu.assume_multiple %507, 16 : i32
    %509 = arith.index_cast %508 : i32 to index
    %c0_136 = arith.constant 0 : index
    %510 = vector.load %arg20[%509, %c0_136] : memref<128x128xf32, #tpu.memory_space<vmem>>, vector<16x128xf32>
    %cst_137 = arith.constant dense<0.000000e+00> : vector<16x128xf32>
    %511 = tpu.matmul %506, %287, %cst_137 {dimension_numbers = #tpu.dot_dimension_numbers<[1], [0], [0], [1], [0, 0, 1, 1], [], []>} : vector<16x32xf32>, vector<32x128xf32>, vector<16x128xf32> -> vector<16x128xf32>
    %512 = arith.addf %510, %511 : vector<16x128xf32>
    %513 = vector.extract_strided_slice %512 {offsets = [0, 0], sizes = [16, 32], strides = [1, 1]} : vector<16x128xf32> to vector<16x32xf32>
    %514 = arith.negf %513 : vector<16x32xf32>
    %515 = math.exp %514 : vector<16x32xf32>
    %cst_138 = arith.constant 1.000000e+00 : f32
    %516 = vector.broadcast %cst_138 : f32 to vector<16x32xf32>
    %517 = arith.addf %516, %515 : vector<16x32xf32>
    %518 = arith.divf %516, %517 : vector<16x32xf32>
    %519 = vector.extract_strided_slice %512 {offsets = [0, 32], sizes = [16, 32], strides = [1, 1]} : vector<16x128xf32> to vector<16x32xf32>
    %520 = arith.negf %519 : vector<16x32xf32>
    %521 = math.exp %520 : vector<16x32xf32>
    %cst_139 = arith.constant 1.000000e+00 : f32
    %522 = vector.broadcast %cst_139 : f32 to vector<16x32xf32>
    %523 = arith.addf %522, %521 : vector<16x32xf32>
    %524 = arith.divf %522, %523 : vector<16x32xf32>
    %525 = vector.extract_strided_slice %512 {offsets = [0, 64], sizes = [16, 32], strides = [1, 1]} : vector<16x128xf32> to vector<16x32xf32>
    %526 = math.tanh %525 : vector<16x32xf32>
    %527 = vector.extract_strided_slice %512 {offsets = [0, 96], sizes = [16, 32], strides = [1, 1]} : vector<16x128xf32> to vector<16x32xf32>
    %528 = arith.negf %527 : vector<16x32xf32>
    %529 = math.exp %528 : vector<16x32xf32>
    %cst_140 = arith.constant 1.000000e+00 : f32
    %530 = vector.broadcast %cst_140 : f32 to vector<16x32xf32>
    %531 = arith.addf %530, %529 : vector<16x32xf32>
    %532 = arith.divf %530, %531 : vector<16x32xf32>
    %533 = arith.mulf %524, %504 : vector<16x32xf32>
    %534 = arith.mulf %518, %526 : vector<16x32xf32>
    %535 = arith.addf %533, %534 : vector<16x32xf32>
    %536 = math.tanh %535 : vector<16x32xf32>
    %537 = arith.mulf %532, %536 : vector<16x32xf32>
    %c8_i32_141 = arith.constant 8 : i32
    %c1 = arith.constant 1 : index
    %c0_142 = arith.constant 0 : index
    %c0_143 = arith.constant 0 : index
    %538 = vector.load %arg16[%c1, %c0_142, %c0_143] : memref<2x16x32xf32, #tpu.memory_space<vmem>>, vector<1x16x32xf32>
    %539 = vector.shape_cast %538 : vector<1x16x32xf32> to vector<16x32xf32>
    %540 = vector.shape_cast %537 : vector<16x32xf32> to vector<1x16x32xf32>
    tpu.vector_store %arg16[%c1, %c0_142, %c0_143], %540 {strides = array<i32>} : memref<2x16x32xf32, #tpu.memory_space<vmem>>, vector<1x16x32xf32>,
    %c1_144 = arith.constant 1 : index
    %c0_145 = arith.constant 0 : index
    %c0_146 = arith.constant 0 : index
    %541 = vector.load %arg17[%c1_144, %c0_145, %c0_146] : memref<2x16x32xf32, #tpu.memory_space<vmem>>, vector<1x16x32xf32>
    %542 = vector.shape_cast %541 : vector<1x16x32xf32> to vector<16x32xf32>
    %543 = vector.shape_cast %535 : vector<16x32xf32> to vector<1x16x32xf32>
    tpu.vector_store %arg17[%c1_144, %c0_145, %c0_146], %543 {strides = array<i32>} : memref<2x16x32xf32, #tpu.memory_space<vmem>>, vector<1x16x32xf32>,
    %c0_147 = arith.constant 0 : index
    %c0_148 = arith.constant 0 : index
    %544 = vector.load %arg15[%c0_147, %c0_148] : memref<16x32xf32, #tpu.memory_space<vmem>>, vector<16x32xf32>
    tpu.vector_store %arg15[%c0_147, %c0_148], %537 {strides = array<i32>} : memref<16x32xf32, #tpu.memory_space<vmem>>, vector<16x32xf32>,
    %545 = vector.extract_strided_slice %537 {offsets = [0, 0], sizes = [8, 32], strides = [1, 1]} : vector<16x32xf32> to vector<8x32xf32>
    %cst_149 = arith.constant dense<0.000000e+00> : vector<32xf32>
    %546 = vector.multi_reduction <add>, %545, %cst_149 [0] : vector<8x32xf32> to vector<32xf32>
    %547 = vector.shape_cast %546 : vector<32xf32> to vector<1x32xf32>
    %cst_150 = arith.constant 8.000000e+00 : f32
    %548 = vector.broadcast %cst_150 : f32 to vector<1x32xf32>
    %549 = arith.divf %547, %548 : vector<1x32xf32>
    %550 = vector.broadcast %549 : vector<1x32xf32> to vector<8x32xf32>
    %551 = arith.subf %545, %550 : vector<8x32xf32>
    %552 = arith.mulf %551, %551 : vector<8x32xf32>
    %cst_151 = arith.constant dense<0.000000e+00> : vector<32xf32>
    %553 = vector.multi_reduction <add>, %552, %cst_151 [0] : vector<8x32xf32> to vector<32xf32>
    %554 = vector.shape_cast %553 : vector<32xf32> to vector<1x32xf32>
    %cst_152 = arith.constant 8.000000e+00 : f32
    %555 = vector.broadcast %cst_152 : f32 to vector<1x32xf32>
    %556 = arith.divf %554, %555 : vector<1x32xf32>
    %557 = vector.broadcast %549 : vector<1x32xf32> to vector<8x32xf32>
    %558 = arith.subf %545, %557 : vector<8x32xf32>
    %cst_153 = arith.constant 9.99999974E-6 : f32
    %559 = vector.broadcast %cst_153 : f32 to vector<1x32xf32>
    %560 = arith.addf %556, %559 : vector<1x32xf32>
    %561 = math.rsqrt %560 : vector<1x32xf32>
    %562 = vector.broadcast %561 : vector<1x32xf32> to vector<8x32xf32>
    %563 = arith.mulf %558, %562 : vector<8x32xf32>
    %c0_154 = arith.constant 0 : index
    %c0_155 = arith.constant 0 : index
    %564 = vector.load %arg7[%c0_154, %c0_155] : memref<1x32xf32, #tpu.memory_space<vmem>>, vector<1x32xf32>
    %565 = vector.broadcast %564 : vector<1x32xf32> to vector<8x32xf32>
    %566 = arith.mulf %563, %565 : vector<8x32xf32>
    %c0_156 = arith.constant 0 : index
    %c0_157 = arith.constant 0 : index
    %567 = vector.load %arg8[%c0_156, %c0_157] : memref<1x32xf32, #tpu.memory_space<vmem>>, vector<1x32xf32>
    %568 = vector.broadcast %567 : vector<1x32xf32> to vector<8x32xf32>
    %569 = arith.addf %566, %568 : vector<8x32xf32>
    %c0_158 = arith.constant 0 : index
    %c0_159 = arith.constant 0 : index
    %570 = vector.load %arg9[%c0_158, %c0_159] : memref<32x16xf32, #tpu.memory_space<vmem>>, vector<32x16xf32>
    %cst_160 = arith.constant dense<0.000000e+00> : vector<8x16xf32>
    %571 = tpu.matmul %569, %570, %cst_160 {dimension_numbers = #tpu.dot_dimension_numbers<[1], [0], [0], [1], [0, 0, 1, 1], [], []>} : vector<8x32xf32>, vector<32x16xf32>, vector<8x16xf32> -> vector<8x16xf32>
    %c0_161 = arith.constant 0 : index
    %c0_162 = arith.constant 0 : index
    %572 = vector.load %arg10[%c0_161, %c0_162] : memref<1x16xf32, #tpu.memory_space<vmem>>, vector<1x16xf32>
    %573 = vector.broadcast %572 : vector<1x16xf32> to vector<8x16xf32>
    %574 = arith.addf %571, %573 : vector<8x16xf32>
    %cst_163 = arith.constant dense<0.000000e+00> : vector<16xf32>
    %575 = vector.multi_reduction <add>, %574, %cst_163 [0] : vector<8x16xf32> to vector<16xf32>
    %576 = vector.shape_cast %575 : vector<16xf32> to vector<1x16xf32>
    %cst_164 = arith.constant 8.000000e+00 : f32
    %577 = vector.broadcast %cst_164 : f32 to vector<1x16xf32>
    %578 = arith.divf %576, %577 : vector<1x16xf32>
    %579 = vector.broadcast %578 : vector<1x16xf32> to vector<8x16xf32>
    %580 = arith.subf %574, %579 : vector<8x16xf32>
    %581 = arith.mulf %580, %580 : vector<8x16xf32>
    %cst_165 = arith.constant dense<0.000000e+00> : vector<16xf32>
    %582 = vector.multi_reduction <add>, %581, %cst_165 [0] : vector<8x16xf32> to vector<16xf32>
    %583 = vector.shape_cast %582 : vector<16xf32> to vector<1x16xf32>
    %cst_166 = arith.constant 8.000000e+00 : f32
    %584 = vector.broadcast %cst_166 : f32 to vector<1x16xf32>
    %585 = arith.divf %583, %584 : vector<1x16xf32>
    %586 = vector.broadcast %578 : vector<1x16xf32> to vector<8x16xf32>
    %587 = arith.subf %574, %586 : vector<8x16xf32>
    %cst_167 = arith.constant 9.99999974E-6 : f32
    %588 = vector.broadcast %cst_167 : f32 to vector<1x16xf32>
    %589 = arith.addf %585, %588 : vector<1x16xf32>
    %590 = math.rsqrt %589 : vector<1x16xf32>
    %591 = vector.broadcast %590 : vector<1x16xf32> to vector<8x16xf32>
    %592 = arith.mulf %587, %591 : vector<8x16xf32>
    %c0_168 = arith.constant 0 : index
    %c0_169 = arith.constant 0 : index
    %593 = vector.load %arg11[%c0_168, %c0_169] : memref<1x16xf32, #tpu.memory_space<vmem>>, vector<1x16xf32>
    %594 = vector.broadcast %593 : vector<1x16xf32> to vector<8x16xf32>
    %595 = arith.mulf %592, %594 : vector<8x16xf32>
    %c0_170 = arith.constant 0 : index
    %c0_171 = arith.constant 0 : index
    %596 = vector.load %arg12[%c0_170, %c0_171] : memref<1x16xf32, #tpu.memory_space<vmem>>, vector<1x16xf32>
    %597 = vector.broadcast %596 : vector<1x16xf32> to vector<8x16xf32>
    %598 = arith.addf %595, %597 : vector<8x16xf32>
    %c0_172 = arith.constant 0 : index
    %c0_173 = arith.constant 0 : index
    %599 = vector.load %arg13[%c0_172, %c0_173] : memref<16x1xf32, #tpu.memory_space<vmem>>, vector<16x1xf32>
    %cst_174 = arith.constant dense<0.000000e+00> : vector<8x1xf32>
    %600 = tpu.matmul %598, %599, %cst_174 {dimension_numbers = #tpu.dot_dimension_numbers<[1], [0], [0], [1], [0, 0, 1, 1], [], []>} : vector<8x16xf32>, vector<16x1xf32>, vector<8x1xf32> -> vector<8x1xf32>
    %c0_175 = arith.constant 0 : index
    %c0_176 = arith.constant 0 : index
    %601 = vector.load %arg14[%c0_175, %c0_176] : memref<1x1xf32, #tpu.memory_space<vmem>>, vector<1x1xf32>
    %602 = vector.broadcast %601 : vector<1x1xf32> to vector<8x1xf32>
    %603 = arith.addf %600, %602 : vector<8x1xf32>
    %c0_177 = arith.constant 0 : index
    %c0_178 = arith.constant 0 : index
    %604 = vector.load %arg18[%c0_177, %c0_178] : memref<8x1xf32, #tpu.memory_space<vmem>>, vector<8x1xf32>
    tpu.vector_store %arg18[%c0_177, %c0_178], %603 {strides = array<i32>} : memref<8x1xf32, #tpu.memory_space<vmem>>, vector<8x1xf32>,
    return
  }
}

</mosaic_0001>

<llo_original>
// kernel: custom-call.24
$region0: #{custom-call.24}
  %s0 = inlined_call_operand.vmem [shape: f32[32,32], index: 0, kind: input, shape index: {}]
  %s1 = inlined_call_operand.vmem [shape: f32[32,32], index: 1, kind: output, shape index: {0}]
  %s2 = inlined_call_operand.hbm [shape: s32[32], index: 2, kind: output, shape index: {1}]
  %s3 = inlined_call_operand.hbm [shape: s32[32], index: 3, kind: output, shape index: {2}]
  %4 = xla_tuple %s1, %s2, %s3
  $region1: #{custom-call.24} parent=0
    #allocation0 [shape = 'u8[16384]{0}', space=vmem, size = 0x4000, scoped, tag = 'operand span for operand 0']
    #allocation1 [shape = 'u8[16384]{0}', space=vmem, size = 0x4000, scoped, tag = 'operand span for operand 1']
    #allocation2 [shape = 'u8[4096]{0}', space=vmem, size = 0x1000, scoped, tag = 'operand span for operand 2']
    #allocation3 [shape = 'u8[512]{0}', space=vmem, size = 0x400, scoped, tag = 'packed  for operand 2']
    #allocation4 [shape = 's32[1]{0}', space=sflag, size = 0x4, scoped, tag = 'scoped memory for custom-call.24']
    #allocation5 [shape = 'u8[4096]{0}', space=vmem, size = 0x1000, scoped, tag = 'operand span for operand 3']
    #allocation6 [shape = 'u8[512]{0}', space=vmem, size = 0x400, scoped, tag = 'packed  for operand 3']
    #allocation7 [shape = 's32[1]{0}', space=sflag, size = 0x4, scoped, tag = 'scoped memory for custom-call.24']
    #allocation8 [shape = 's32[32,128]{1,0}', space=vmem, size = 0x4000, scoped, tag = 'scratch for permutations']
    %5 = vsyncpa [#allocation4], 0
    %6 = vsyncpa [#allocation7], 0
    %p8 = scmp.gt.s32.totalorder 32, 0
    // Predicated region
    $region2: #{custom-call.24} parent=1 // pred_check
      %p9 = pneg %p8
    $region3: #{custom-call.24} parent=1 // pred_check_branch
      %11 = sbr.rel (%p9) target = $region5
    $region4: #{custom-call.24} parent=1 // pred_region
      %s12 = sshra.s32 32, 3
      %p13 = scmp.gt.s32.totalorder %s12, 0
      // Predicated region
      $region6: #{custom-call.24} parent=4 // pred_check
        %p14 = pneg %p13
      $region7: #{custom-call.24} parent=4 // pred_check_branch
        %16 = sbr.rel (%p14) target = $region9
      $region8: #{custom-call.24} parent=4 // pred_region
        %s17 = ssub.s32 %s12, 1
        %s18 = smul.u32 %s17, 128
        %s19 = sshra.s32 %s18, 4
        %s20 = scalar_lea.vmem %s0, %s19
        %v21 = vld [vmem:[%s0] sm:$0xff]
        // While loop
        $region10: #{custom-call.24} parent=8 // loop_pre_header
          _
        $region11: #{custom-call.24} parent=8 // loop_header
          %s22 = sphi %s0, %s44
          %s23 = sphi [#allocation0], %s45
          %v24 = vphi %v21, %v46
          %s25 = ssub.s32 %s20, 64
          %p26 = scmp.gt.s32.totalorder %s22, %s25
        $region12: #{custom-call.24} parent=8 // loop_header_branch
          %28 = sbr.rel (%p26) target = $region16
        $region13: #{custom-call.24} parent=8 // loop_body
          %29 = vst [vmem:[%s23] sm:$0xff] %v24
          %v30 = vld [vmem:[%s22 + $0x8] sm:$0xff]
          %31 = vst [vmem:[%s23 + $0x8] sm:$0xff] %v30
          %v32 = vld [vmem:[%s22 + $0x10] sm:$0xff]
          %33 = vst [vmem:[%s23 + $0x10] sm:$0xff] %v32
          %v34 = vld [vmem:[%s22 + $0x18] sm:$0xff]
          %35 = vst [vmem:[%s23 + $0x18] sm:$0xff] %v34
          %v36 = vld [vmem:[%s22 + $0x20] sm:$0xff]
          %37 = vst [vmem:[%s23 + $0x20] sm:$0xff] %v36
          %v38 = vld [vmem:[%s22 + $0x28] sm:$0xff]
          %39 = vst [vmem:[%s23 + $0x28] sm:$0xff] %v38
          %v40 = vld [vmem:[%s22 + $0x30] sm:$0xff]
          %41 = vst [vmem:[%s23 + $0x30] sm:$0xff] %v40
          %v42 = vld [vmem:[%s22 + $0x38] sm:$0xff]
          %43 = vst [vmem:[%s23 + $0x38] sm:$0xff] %v42
        $region14: #{custom-call.24} parent=8 // loop_footer
          %s44 = scalar_lea.vmem %s22, 64
          %s45 = scalar_lea.vmem %s23, 64
          %v46 = vld [vmem:[%s22 + $0x40] sm:$0xff]
        $region15: #{custom-call.24} parent=8 // loop_footer_branch
          %47 = sbr.rel target = $region11
        $region16: #{custom-call.24} parent=8 // loop_exit
          _
        // While loop
        $region17: #{custom-call.24} parent=8 // loop_pre_header
          _
        $region18: #{custom-call.24} parent=8 // loop_header
          %s48 = sphi %s22, %s56
          %s49 = sphi %s23, %s57
          %v50 = vphi %v24, %v50
          %p51 = scmp.gt.s32.totalorder %s48, %s20
        $region19: #{custom-call.24} parent=8 // loop_header_branch
          %53 = sbr.rel (%p51) target = $region23
        $region20: #{custom-call.24} parent=8 // loop_body
          %v54 = vld [vmem:[%s48] sm:$0xff]
          %55 = vst [vmem:[%s49] sm:$0xff] %v54
        $region21: #{custom-call.24} parent=8 // loop_footer
          %s56 = scalar_lea.vmem %s48, 8
          %s57 = scalar_lea.vmem %s49, 8
        $region22: #{custom-call.24} parent=8 // loop_footer_branch
          %58 = sbr.rel target = $region18
        $region23: #{custom-call.24} parent=8 // loop_exit
          _
      $region9: #{custom-call.24} parent=4 // pred_fallthru
        _
      %s59 = sand.u32 32, 7
      %s60 = sshllo.u32 0, %s59
      %s61 = smul.u32 %s12, 128
      %s62 = sshra.s32 %s61, 4
      %s63 = scalar_lea.vmem [#allocation0], %s62
      %s64 = smul.u32 %s12, 128
      %s65 = sshra.s32 %s64, 4
      %s66 = scalar_lea.vmem %s0, %s65
      %v67 = vld [vmem:[%s66] sm:%s60]
      %68 = vst [vmem:[%s63] sm:%s60] %v67
    $region5: #{custom-call.24} parent=1 // pred_fallthru
      _
    %v69 = vld [vmem:[#allocation0] sm:$0xff]
    %70 = vst [vmem:[#allocation1] sm:$0xff] %v69
    %s71 = scalar_lea.vmem [#allocation1], 8
    %s72 = scalar_lea.vmem [#allocation0], 8
    %v73 = vld [vmem:[%s72] sm:$0xff]
    %74 = vst [vmem:[%s71] sm:$0xff] %v73
    %s75 = scalar_lea.vmem [#allocation1], 16
    %s76 = scalar_lea.vmem [#allocation0], 16
    %v77 = vld [vmem:[%s76] sm:$0xff]
    %78 = vst [vmem:[%s75] sm:$0xff] %v77
    %s79 = scalar_lea.vmem [#allocation1], 24
    %s80 = scalar_lea.vmem [#allocation0], 24
    %v81 = vld [vmem:[%s80] sm:$0xff]
    %82 = vst [vmem:[%s79] sm:$0xff] %v81
    %83 = vst [vmem:[#allocation2] sm:$0x1] 0
    %v84 = vlaneseq
    %v85 = vshrl.u32 %v84, 7
    %v86 = vmov %v85
    loop: start=0, step=1, limit=4
    $region24: #{custom-call.24} parent=1 // loop_pre_header
      _
    $region25: #{custom-call.24} parent=1 // loop_header
      %s88 = sphi 0, %s92
      %p89 = scmp.ge.s32.totalorder %s88, 4
    $region26: #{custom-call.24} parent=1 // loop_header_branch
      %91 = sbr.rel (%p89) target = $region30
    $region27: #{custom-call.24} parent=1 // loop_body
      %s93 = smul.addr %s88, 8
      %s94 = scalar_lea.vmem [#allocation8], %s93
      %s95 = smul.u32 %s88, 8
      %v96 = vstv %s95
      %v97 = vadd.s32 %v86, %v96
      %98 = vst [vmem:[%s94] sm:$0xff] %v97
    $region28: #{custom-call.24} parent=1 // loop_footer
      %s92 = sadd.s32 1, %s88
    $region29: #{custom-call.24} parent=1 // loop_footer_branch
      %87 = sbr.rel target = $region25
    $region30: #{custom-call.24} parent=1 // loop_exit
      _
    loop: start=0, step=1, limit=32
    $region31: #{custom-call.24} parent=1 // loop_pre_header
      _
    $region32: #{custom-call.24} parent=1 // loop_header
      %s100 = sphi 0, %s104
      %p101 = scmp.ge.s32.totalorder %s100, 32
    $region33: #{custom-call.24} parent=1 // loop_header_branch
      %103 = sbr.rel (%p101) target = $region37
    $region34: #{custom-call.24} parent=1 // loop_body
      %v105 = vstv %s100
      %v106 = vlaneseq
      %v107 = vshrl.u32 %v106, 7
      %v108 = vmov %v107
      %v109 = vld [vmem:[#allocation1] sm:$0xff]
      %v110 = vand.u32 2147483647, %v109
      %v112 = vstv %s100
      %vm113 = vcmp.ge.s32.totalorder %v108, %v112
      %vm114 = vcmp.lt.s32.totalorder %v108, 32
      %vm115 = vmand %vm113, %vm114
      %vm116 = vcmp.lt.f32.partialorder -inf, %v110
      %vm117 = vmand %vm115, %vm116
      %v118 = vsel %vm117, %v108, %v105
      %v119 = vsel %vm117, %v110, -inf
      %s120 = scalar_lea.vmem [#allocation1], 8
      %v121 = vld [vmem:[%s120] sm:$0xff]
      %v122 = vand.u32 2147483647, %v121
      %v123 = vadd.s32 %v108, 8
      %v124 = vstv %s100
      %vm125 = vcmp.ge.s32.totalorder %v123, %v124
      %vm126 = vcmp.lt.s32.totalorder %v123, 32
      %vm127 = vmand %vm125, %vm126
      %vm128 = vcmp.lt.f32.partialorder %v119, %v122
      %vm129 = vmand %vm127, %vm128
      %v130 = vsel %vm129, %v123, %v118
      %v131 = vsel %vm129, %v122, %v119
      %s132 = scalar_lea.vmem [#allocation1], 16
      %v133 = vld [vmem:[%s132] sm:$0xff]
      %v134 = vand.u32 2147483647, %v133
      %v135 = vadd.s32 %v108, 16
      %v136 = vstv %s100
      %vm137 = vcmp.ge.s32.totalorder %v135, %v136
      %vm138 = vcmp.lt.s32.totalorder %v135, 32
      %vm139 = vmand %vm137, %vm138
      %vm140 = vcmp.lt.f32.partialorder %v131, %v134
      %vm141 = vmand %vm139, %vm140
      %v142 = vsel %vm141, %v135, %v130
      %v143 = vsel %vm141, %v134, %v131
      %s144 = scalar_lea.vmem [#allocation1], 24
      %v145 = vld [vmem:[%s144] sm:$0xff]
      %v146 = vand.u32 2147483647, %v145
      %v147 = vadd.s32 %v108, 24
      %v148 = vstv %s100
      %vm149 = vcmp.ge.s32.totalorder %v147, %v148
      %vm150 = vcmp.lt.s32.totalorder %v147, 32
      %vm151 = vmand %vm149, %vm150
      %vm152 = vcmp.lt.f32.partialorder %v143, %v146
      %vm153 = vmand %vm151, %vm152
      %v154 = vsel %vm153, %v147, %v142
      %v155 = vsel %vm153, %v146, %v143
      %v156 = vrot.slane %v155, 1
      %v157 = vrot.slane %v154, 1
      %vm158 = vcmp.ge.f32.partialorder %v156, %v155
      %v159 = vsel %vm158, %v156, %v155
      %v160 = vsel %vm158, %v157, %v154
      %v161 = vrot.slane %v156, 1
      %v162 = vrot.slane %v157, 1
      %vm163 = vcmp.ge.f32.partialorder %v161, %v159
      %v164 = vsel %vm163, %v161, %v159
      %v165 = vsel %vm163, %v162, %v160
      %v166 = vrot.slane %v161, 1
      %v167 = vrot.slane %v162, 1
      %vm168 = vcmp.ge.f32.partialorder %v166, %v164
      %v169 = vsel %vm168, %v166, %v164
      %v170 = vsel %vm168, %v167, %v165
      %v171 = vrot.slane %v166, 1
      %v172 = vrot.slane %v167, 1
      %vm173 = vcmp.ge.f32.partialorder %v171, %v169
      %v174 = vsel %vm173, %v171, %v169
      %v175 = vsel %vm173, %v172, %v170
      %v176 = vrot.slane %v171, 1
      %v177 = vrot.slane %v172, 1
      %vm178 = vcmp.ge.f32.partialorder %v176, %v174
      %v179 = vsel %vm178, %v176, %v174
      %v180 = vsel %vm178, %v177, %v175
      %v181 = vrot.slane %v176, 1
      %v182 = vrot.slane %v177, 1
      %vm183 = vcmp.ge.f32.partialorder %v181, %v179
      %v184 = vsel %vm183, %v181, %v179
      %v185 = vsel %vm183, %v182, %v180
      %v186 = vrot.slane %v181, 1
      %v187 = vrot.slane %v182, 1
      %vm188 = vcmp.ge.f32.partialorder %v186, %v184
      %v189 = vsel %vm188, %v186, %v184
      %v190 = vsel %vm188, %v187, %v185
      %s191 = ssub.s32 128, %s100
      %192 = vrot.lane.b32.xlu0 %v190, %s191
      %v193 = vpop.permute.xlu0 %192
      %s194 = vtos %v193
      %v195 = vstv %s100
      %v196 = vlaneseq
      %v197 = vand.u32 %v196, 127
      %vm198 = vcmp.eq.s32.totalorder %v197, %v195
      %v199 = vstv %s194
      %v200 = vld [vmem:[#allocation2] ss:$0 sm:$0xff]
      %v201 = vsel %vm198, %v199, %v200
      %202 = vst [vmem:[#allocation2] sm:$0x1] %v201
      %s203 = scalar_lea.vmem [#allocation1], %s100
      %s204 = scalar_lea.vmem [#allocation1], %s194
      %v205 = vld [vmem:[%s203] ss:$0 sm:$0xff]
      %v206 = vld [vmem:[%s204] ss:$0 sm:$0xff]
      %207 = vst [vmem:[%s204] sm:$0x1] %v205
      %208 = vst [vmem:[%s203] sm:$0x1] %v206
      %s209 = scalar_lea.vmem [#allocation8], %s100
      %s210 = scalar_lea.vmem [#allocation8], %s194
      %v211 = vld [vmem:[%s209] ss:$0 sm:$0xff]
      %v212 = vld [vmem:[%s210] ss:$0 sm:$0xff]
      %213 = vst [vmem:[%s210] sm:$0x1] %v211
      %214 = vst [vmem:[%s209] sm:$0x1] %v212
      %vm215 = vcmp.ne.f32.partialorder %v206, 0.0
      %vm216 = vmand %vm198, %vm215
      %v217 = vsel %vm216, %v206, 1.0
      %v218 = vlaneseq
      %v219 = vand.u32 %v218, 127
      %v220 = vstv %s100
      %vm221 = vcmp.gt.s32.totalorder %v219, %v220
      %v222 = vsel %vm221, %v206, 0.0
      %v223 = vlaneseq
      %v224 = vshrl.u32 %v223, 7
      %v225 = vmov %v224
      %v226 = vld [vmem:[#allocation1] sm:$0xff]
      %v228 = vstv %s100
      %vm229 = vcmp.gt.s32.totalorder %v225, %v228
      %v230 = vsel %vm229, %v217, 1.0
      %v231 = vrcp.pop %v230
      %v232 = vmul.f32 %v226, %v231
      %vm233 = vmand %vm229, %vm198
      %v234 = vsel %vm233, %v232, 0.0
      %235 = vadd.xlane.f32.xlu0 %v234
      %v236 = vpop.xlane.xlu0 %235
      %v237 = vmul.f32 %v236, %v222
      %v238 = vsub.f32 %v232, %v237
      %239 = vst [vmem:[#allocation1] sm:$0xff] %v238
      %s240 = scalar_lea.vmem [#allocation1], 8
      %v241 = vld [vmem:[%s240] sm:$0xff]
      %v242 = vadd.s32 %v225, 8
      %v243 = vstv %s100
      %vm244 = vcmp.gt.s32.totalorder %v242, %v243
      %v245 = vsel %vm244, %v217, 1.0
      %v246 = vrcp.pop %v245
      %v247 = vmul.f32 %v241, %v246
      %vm248 = vmand %vm244, %vm198
      %v249 = vsel %vm248, %v247, 0.0
      %250 = vadd.xlane.f32.xlu0 %v249
      %v251 = vpop.xlane.xlu0 %250
      %v252 = vmul.f32 %v251, %v222
      %v253 = vsub.f32 %v247, %v252
      %254 = vst [vmem:[%s240] sm:$0xff] %v253
      %s255 = scalar_lea.vmem [#allocation1], 16
      %v256 = vld [vmem:[%s255] sm:$0xff]
      %v257 = vadd.s32 %v225, 16
      %v258 = vstv %s100
      %vm259 = vcmp.gt.s32.totalorder %v257, %v258
      %v260 = vsel %vm259, %v217, 1.0
      %v261 = vrcp.pop %v260
      %v262 = vmul.f32 %v256, %v261
      %vm263 = vmand %vm259, %vm198
      %v264 = vsel %vm263, %v262, 0.0
      %265 = vadd.xlane.f32.xlu0 %v264
      %v266 = vpop.xlane.xlu0 %265
      %v267 = vmul.f32 %v266, %v222
      %v268 = vsub.f32 %v262, %v267
      %269 = vst [vmem:[%s255] sm:$0xff] %v268
      %s270 = scalar_lea.vmem [#allocation1], 24
      %v271 = vld [vmem:[%s270] sm:$0xff]
      %v272 = vadd.s32 %v225, 24
      %v273 = vstv %s100
      %vm274 = vcmp.gt.s32.totalorder %v272, %v273
      %v275 = vsel %vm274, %v217, 1.0
      %v276 = vrcp.pop %v275
      %v277 = vmul.f32 %v271, %v276
      %vm278 = vmand %vm274, %vm198
      %v279 = vsel %vm278, %v277, 0.0
      %280 = vadd.xlane.f32.xlu0 %v279
      %v281 = vpop.xlane.xlu0 %280
      %v282 = vmul.f32 %v281, %v222
      %v283 = vsub.f32 %v277, %v282
      %284 = vst [vmem:[%s270] sm:$0xff] %v283
    $region35: #{custom-call.24} parent=1 // loop_footer
      %s104 = sadd.s32 1, %s100
    $region36: #{custom-call.24} parent=1 // loop_footer_branch
      %99 = sbr.rel target = $region32
    $region37: #{custom-call.24} parent=1 // loop_exit
      _
    %v285 = vld [vmem:[#allocation8] sm:$0xff]
    %s286 = scalar_lea.vmem [#allocation8], 8
    %v287 = vld [vmem:[%s286] sm:$0xff]
    %s288 = scalar_lea.vmem [#allocation8], 16
    %v289 = vld [vmem:[%s288] sm:$0xff]
    %s290 = scalar_lea.vmem [#allocation8], 24
    %v291 = vld [vmem:[%s290] sm:$0xff]
    %s292 = scalar_lea.vmem [#allocation8], 32
    %s293 = scalar_lea.vmem [#allocation8], 40
    %s294 = scalar_lea.vmem [#allocation8], 48
    %s295 = scalar_lea.vmem [#allocation8], 56
    %s296 = scalar_lea.vmem [#allocation8], 64
    %s297 = scalar_lea.vmem [#allocation8], 72
    %s298 = scalar_lea.vmem [#allocation8], 80
    %s299 = scalar_lea.vmem [#allocation8], 88
    %s300 = scalar_lea.vmem [#allocation8], 96
    %s301 = scalar_lea.vmem [#allocation8], 104
    %s302 = scalar_lea.vmem [#allocation8], 112
    %s303 = scalar_lea.vmem [#allocation8], 120
    %304 = vxpose.xlu0.b32.start [1/16] %v285, 128
    %305 = vxpose.xlu0.b32.cont [2/16] %v287, 128
    %306 = vxpose.xlu0.b32.cont [3/16] %v289, 128
    %307 = vxpose.xlu0.b32.cont [4/16] %v291, 128
    %308 = vxpose.xlu0.b32.cont [5/16] 0, 128
    %309 = vxpose.xlu0.b32.cont [6/16] 0, 128
    %310 = vxpose.xlu0.b32.cont [7/16] 0, 128
    %311 = vxpose.xlu0.b32.cont [8/16] 0, 128
    %312 = vxpose.xlu0.b32.cont [9/16] 0, 128
    %313 = vxpose.xlu0.b32.cont [10/16] 0, 128
    %314 = vxpose.xlu0.b32.cont [11/16] 0, 128
    %315 = vxpose.xlu0.b32.cont [12/16] 0, 128
    %316 = vxpose.xlu0.b32.cont [13/16] 0, 128
    %317 = vxpose.xlu0.b32.cont [14/16] 0, 128
    %318 = vxpose.xlu0.b32.cont [15/16] 0, 128
    %319 = vxpose.xlu0.b32.end [16/16] 0, 128
    %v320 = vpop.trf.xlu0
    %v321 = vpop.trf.xlu0
    %v322 = vpop.trf.xlu0
    %v323 = vpop.trf.xlu0
    %v324 = vpop.trf.xlu0
    %v325 = vpop.trf.xlu0
    %v326 = vpop.trf.xlu0
    %v327 = vpop.trf.xlu0
    %v328 = vpop.trf.xlu0
    %v329 = vpop.trf.xlu0
    %v330 = vpop.trf.xlu0
    %v331 = vpop.trf.xlu0
    %v332 = vpop.trf.xlu0
    %v333 = vpop.trf.xlu0
    %v334 = vpop.trf.xlu0
    %v335 = vpop.trf.xlu0
    %336 = vst [vmem:[#allocation5] sm:$0x1] %v320
    %s338 = sshllo.u32 0, 1
    %v340 = vld [vmem:[#allocation2] sm:%s338]
    %s341 = sshllo.u32 0, 1
    %342 = vst [vmem:[#allocation3] sm:%s341] %v340
    %s344 = sshllo.u32 0, 1
    %v346 = vld [vmem:[#allocation5] sm:%s344]
    %s347 = sshllo.u32 0, 1
    %348 = vst [vmem:[#allocation6] sm:%s347] %v346
    %p350 = scmp.gt.s32.totalorder 32, 0
    // Predicated region
    $region38: #{custom-call.24} parent=1 // pred_check
      %p351 = pneg %p350
    $region39: #{custom-call.24} parent=1 // pred_check_branch
      %353 = sbr.rel (%p351) target = $region41
    $region40: #{custom-call.24} parent=1 // pred_region
      %s354 = sshra.s32 32, 3
      %p355 = scmp.gt.s32.totalorder %s354, 0
      // Predicated region
      $region42: #{custom-call.24} parent=40 // pred_check
        %p356 = pneg %p355
      $region43: #{custom-call.24} parent=40 // pred_check_branch
        %358 = sbr.rel (%p356) target = $region45
      $region44: #{custom-call.24} parent=40 // pred_region
        %s359 = ssub.s32 %s354, 1
        %s360 = smul.u32 %s359, 128
        %s361 = sshra.s32 %s360, 4
        %s362 = scalar_lea.vmem [#allocation1], %s361
        %v363 = vld [vmem:[#allocation1] sm:$0xff]
        // While loop
        $region46: #{custom-call.24} parent=44 // loop_pre_header
          _
        $region47: #{custom-call.24} parent=44 // loop_header
          %s364 = sphi [#allocation1], %s386
          %s365 = sphi %s1, %s387
          %v366 = vphi %v363, %v388
          %s367 = ssub.s32 %s362, 64
          %p368 = scmp.gt.s32.totalorder %s364, %s367
        $region48: #{custom-call.24} parent=44 // loop_header_branch
          %370 = sbr.rel (%p368) target = $region52
        $region49: #{custom-call.24} parent=44 // loop_body
          %371 = vst [vmem:[%s365] sm:$0xff] %v366
          %v372 = vld [vmem:[%s364 + $0x8] sm:$0xff]
          %373 = vst [vmem:[%s365 + $0x8] sm:$0xff] %v372
          %v374 = vld [vmem:[%s364 + $0x10] sm:$0xff]
          %375 = vst [vmem:[%s365 + $0x10] sm:$0xff] %v374
          %v376 = vld [vmem:[%s364 + $0x18] sm:$0xff]
          %377 = vst [vmem:[%s365 + $0x18] sm:$0xff] %v376
          %v378 = vld [vmem:[%s364 + $0x20] sm:$0xff]
          %379 = vst [vmem:[%s365 + $0x20] sm:$0xff] %v378
          %v380 = vld [vmem:[%s364 + $0x28] sm:$0xff]
          %381 = vst [vmem:[%s365 + $0x28] sm:$0xff] %v380
          %v382 = vld [vmem:[%s364 + $0x30] sm:$0xff]
          %383 = vst [vmem:[%s365 + $0x30] sm:$0xff] %v382
          %v384 = vld [vmem:[%s364 + $0x38] sm:$0xff]
          %385 = vst [vmem:[%s365 + $0x38] sm:$0xff] %v384
        $region50: #{custom-call.24} parent=44 // loop_footer
          %s386 = scalar_lea.vmem %s364, 64
          %s387 = scalar_lea.vmem %s365, 64
          %v388 = vld [vmem:[%s364 + $0x40] sm:$0xff]
        $region51: #{custom-call.24} parent=44 // loop_footer_branch
          %389 = sbr.rel target = $region47
        $region52: #{custom-call.24} parent=44 // loop_exit
          _
        // While loop
        $region53: #{custom-call.24} parent=44 // loop_pre_header
          _
        $region54: #{custom-call.24} parent=44 // loop_header
          %s390 = sphi %s364, %s398
          %s391 = sphi %s365, %s399
          %v392 = vphi %v366, %v392
          %p393 = scmp.gt.s32.totalorder %s390, %s362
        $region55: #{custom-call.24} parent=44 // loop_header_branch
          %395 = sbr.rel (%p393) target = $region59
        $region56: #{custom-call.24} parent=44 // loop_body
          %v396 = vld [vmem:[%s390] sm:$0xff]
          %397 = vst [vmem:[%s391] sm:$0xff] %v396
        $region57: #{custom-call.24} parent=44 // loop_footer
          %s398 = scalar_lea.vmem %s390, 8
          %s399 = scalar_lea.vmem %s391, 8
        $region58: #{custom-call.24} parent=44 // loop_footer_branch
          %400 = sbr.rel target = $region54
        $region59: #{custom-call.24} parent=44 // loop_exit
          _
      $region45: #{custom-call.24} parent=40 // pred_fallthru
        _
      %s401 = sand.u32 32, 7
      %s402 = sshllo.u32 0, %s401
      %s403 = smul.u32 %s354, 128
      %s404 = sshra.s32 %s403, 4
      %s405 = scalar_lea.vmem %s1, %s404
      %s406 = smul.u32 %s354, 128
      %s407 = sshra.s32 %s406, 4
      %s408 = scalar_lea.vmem [#allocation1], %s407
      %v409 = vld [vmem:[%s408] sm:%s402]
      %410 = vst [vmem:[%s405] sm:%s402] %v409
    $region41: #{custom-call.24} parent=1 // pred_fallthru
      _
    // Predicated region
    $region60: #{custom-call.24} parent=1 // pred_check
      _
    $region61: #{custom-call.24} parent=1 // pred_check_branch
      %412 = sbr.rel (0) target = $region63
    $region62: #{custom-call.24} parent=1 // pred_region
      %s414 = ssub.s32 16, 16
      %415 = vsyncadd [#allocation4], %s414
      %s416 = sshll.u32 [#allocation3], 4
      %s417 = int_to_ptr.vmem [resolvable:$true] %s416
      %419 = dma.vmem_to_hbm [thread:$0]  %s417, 16, %s2, [#allocation4]
    $region63: #{custom-call.24} parent=1 // pred_fallthru
      _
    // Predicated region
    $region64: #{custom-call.24} parent=1 // pred_check
      _
    $region65: #{custom-call.24} parent=1 // pred_check_branch
      %421 = sbr.rel (0) target = $region67
    $region66: #{custom-call.24} parent=1 // pred_region
      %s423 = ssub.s32 16, 16
      %424 = vsyncadd [#allocation7], %s423
      %s425 = sshll.u32 [#allocation6], 4
      %s426 = int_to_ptr.vmem [resolvable:$true] %s425
      %428 = dma.vmem_to_hbm [thread:$0]  %s426, 16, %s3, [#allocation7]
    $region67: #{custom-call.24} parent=1 // pred_fallthru
      _
    // Predicated region
    $region68: #{custom-call.24} parent=1 // pred_check
      _
    $region69: #{custom-call.24} parent=1 // pred_check_branch
      %430 = sbr.rel (0) target = $region71
    $region70: #{custom-call.24} parent=1 // pred_region
      %431 = dma.done [#allocation4], 16
    $region71: #{custom-call.24} parent=1 // pred_fallthru
      _
    // Predicated region
    $region72: #{custom-call.24} parent=1 // pred_check
      _
    $region73: #{custom-call.24} parent=1 // pred_check_branch
      %433 = sbr.rel (0) target = $region75
    $region74: #{custom-call.24} parent=1 // pred_region
      %434 = dma.done [#allocation7], 16
    $region75: #{custom-call.24} parent=1 // pred_fallthru
      _
    %435 = vsyncpa [#allocation4], 1
    %436 = vsyncpa [#allocation7], 1

// kernel: custom-call.21
$region0: #{custom-call.21}
  %s0 = inlined_call_operand.vmem [shape: f32[32,32], index: 0, kind: input, shape index: {}]
  %s1 = inlined_call_operand.vmem [shape: f32[32,32], index: 1, kind: output, shape index: {0}]
  %s2 = inlined_call_operand.hbm [shape: s32[32], index: 2, kind: output, shape index: {1}]
  %s3 = inlined_call_operand.vmem [shape: s32[32], index: 3, kind: output, shape index: {2}]
  %4 = xla_tuple %s1, %s2, %s3
  $region1: #{custom-call.21} parent=0
    #allocation0 [shape = 'u8[16384]{0}', space=vmem, size = 0x4000, scoped, tag = 'operand span for operand 0']
    #allocation1 [shape = 'u8[16384]{0}', space=vmem, size = 0x4000, scoped, tag = 'operand span for operand 1']
    #allocation2 [shape = 'u8[4096]{0}', space=vmem, size = 0x1000, scoped, tag = 'operand span for operand 2']
    #allocation3 [shape = 'u8[512]{0}', space=vmem, size = 0x400, scoped, tag = 'packed  for operand 2']
    #allocation4 [shape = 's32[1]{0}', space=sflag, size = 0x4, scoped, tag = 'scoped memory for custom-call.21']
    #allocation5 [shape = 'u8[4096]{0}', space=vmem, size = 0x1000, scoped, tag = 'operand span for operand 3']
    #allocation6 [shape = 'u8[512]{0}', space=vmem, size = 0x400, scoped, tag = 'packed  for operand 3']
    #allocation7 [shape = 's32[32,128]{1,0}', space=vmem, size = 0x4000, scoped, tag = 'scratch for permutations']
    %5 = vsyncpa [#allocation4], 0
    %p7 = scmp.gt.s32.totalorder 32, 0
    // Predicated region
    $region2: #{custom-call.21} parent=1 // pred_check
      %p8 = pneg %p7
    $region3: #{custom-call.21} parent=1 // pred_check_branch
      %10 = sbr.rel (%p8) target = $region5
    $region4: #{custom-call.21} parent=1 // pred_region
      %s11 = sshra.s32 32, 3
      %p12 = scmp.gt.s32.totalorder %s11, 0
      // Predicated region
      $region6: #{custom-call.21} parent=4 // pred_check
        %p13 = pneg %p12
      $region7: #{custom-call.21} parent=4 // pred_check_branch
        %15 = sbr.rel (%p13) target = $region9
      $region8: #{custom-call.21} parent=4 // pred_region
        %s16 = ssub.s32 %s11, 1
        %s17 = smul.u32 %s16, 128
        %s18 = sshra.s32 %s17, 4
        %s19 = scalar_lea.vmem %s0, %s18
        %v20 = vld [vmem:[%s0] sm:$0xff]
        // While loop
        $region10: #{custom-call.21} parent=8 // loop_pre_header
          _
        $region11: #{custom-call.21} parent=8 // loop_header
          %s21 = sphi %s0, %s43
          %s22 = sphi [#allocation0], %s44
          %v23 = vphi %v20, %v45
          %s24 = ssub.s32 %s19, 64
          %p25 = scmp.gt.s32.totalorder %s21, %s24
        $region12: #{custom-call.21} parent=8 // loop_header_branch
          %27 = sbr.rel (%p25) target = $region16
        $region13: #{custom-call.21} parent=8 // loop_body
          %28 = vst [vmem:[%s22] sm:$0xff] %v23
          %v29 = vld [vmem:[%s21 + $0x8] sm:$0xff]
          %30 = vst [vmem:[%s22 + $0x8] sm:$0xff] %v29
          %v31 = vld [vmem:[%s21 + $0x10] sm:$0xff]
          %32 = vst [vmem:[%s22 + $0x10] sm:$0xff] %v31
          %v33 = vld [vmem:[%s21 + $0x18] sm:$0xff]
          %34 = vst [vmem:[%s22 + $0x18] sm:$0xff] %v33
          %v35 = vld [vmem:[%s21 + $0x20] sm:$0xff]
          %36 = vst [vmem:[%s22 + $0x20] sm:$0xff] %v35
          %v37 = vld [vmem:[%s21 + $0x28] sm:$0xff]
          %38 = vst [vmem:[%s22 + $0x28] sm:$0xff] %v37
          %v39 = vld [vmem:[%s21 + $0x30] sm:$0xff]
          %40 = vst [vmem:[%s22 + $0x30] sm:$0xff] %v39
          %v41 = vld [vmem:[%s21 + $0x38] sm:$0xff]
          %42 = vst [vmem:[%s22 + $0x38] sm:$0xff] %v41
        $region14: #{custom-call.21} parent=8 // loop_footer
          %s43 = scalar_lea.vmem %s21, 64
          %s44 = scalar_lea.vmem %s22, 64
          %v45 = vld [vmem:[%s21 + $0x40] sm:$0xff]
        $region15: #{custom-call.21} parent=8 // loop_footer_branch
          %46 = sbr.rel target = $region11
        $region16: #{custom-call.21} parent=8 // loop_exit
          _
        // While loop
        $region17: #{custom-call.21} parent=8 // loop_pre_header
          _
        $region18: #{custom-call.21} parent=8 // loop_header
          %s47 = sphi %s21, %s55
          %s48 = sphi %s22, %s56
          %v49 = vphi %v23, %v49
          %p50 = scmp.gt.s32.totalorder %s47, %s19
        $region19: #{custom-call.21} parent=8 // loop_header_branch
          %52 = sbr.rel (%p50) target = $region23
        $region20: #{custom-call.21} parent=8 // loop_body
          %v53 = vld [vmem:[%s47] sm:$0xff]
          %54 = vst [vmem:[%s48] sm:$0xff] %v53
        $region21: #{custom-call.21} parent=8 // loop_footer
          %s55 = scalar_lea.vmem %s47, 8
          %s56 = scalar_lea.vmem %s48, 8
        $region22: #{custom-call.21} parent=8 // loop_footer_branch
          %57 = sbr.rel target = $region18
        $region23: #{custom-call.21} parent=8 // loop_exit
          _
      $region9: #{custom-call.21} parent=4 // pred_fallthru
        _
      %s58 = sand.u32 32, 7
      %s59 = sshllo.u32 0, %s58
      %s60 = smul.u32 %s11, 128
      %s61 = sshra.s32 %s60, 4
      %s62 = scalar_lea.vmem [#allocation0], %s61
      %s63 = smul.u32 %s11, 128
      %s64 = sshra.s32 %s63, 4
      %s65 = scalar_lea.vmem %s0, %s64
      %v66 = vld [vmem:[%s65] sm:%s59]
      %67 = vst [vmem:[%s62] sm:%s59] %v66
    $region5: #{custom-call.21} parent=1 // pred_fallthru
      _
    %v68 = vld [vmem:[#allocation0] sm:$0xff]
    %69 = vst [vmem:[#allocation1] sm:$0xff] %v68
    %s70 = scalar_lea.vmem [#allocation1], 8
    %s71 = scalar_lea.vmem [#allocation0], 8
    %v72 = vld [vmem:[%s71] sm:$0xff]
    %73 = vst [vmem:[%s70] sm:$0xff] %v72
    %s74 = scalar_lea.vmem [#allocation1], 16
    %s75 = scalar_lea.vmem [#allocation0], 16
    %v76 = vld [vmem:[%s75] sm:$0xff]
    %77 = vst [vmem:[%s74] sm:$0xff] %v76
    %s78 = scalar_lea.vmem [#allocation1], 24
    %s79 = scalar_lea.vmem [#allocation0], 24
    %v80 = vld [vmem:[%s79] sm:$0xff]
    %81 = vst [vmem:[%s78] sm:$0xff] %v80
    %82 = vst [vmem:[#allocation2] sm:$0x1] 0
    %v83 = vlaneseq
    %v84 = vshrl.u32 %v83, 7
    %v85 = vmov %v84
    loop: start=0, step=1, limit=4
    $region24: #{custom-call.21} parent=1 // loop_pre_header
      _
    $region25: #{custom-call.21} parent=1 // loop_header
      %s87 = sphi 0, %s91
      %p88 = scmp.ge.s32.totalorder %s87, 4
    $region26: #{custom-call.21} parent=1 // loop_header_branch
      %90 = sbr.rel (%p88) target = $region30
    $region27: #{custom-call.21} parent=1 // loop_body
      %s92 = smul.addr %s87, 8
      %s93 = scalar_lea.vmem [#allocation7], %s92
      %s94 = smul.u32 %s87, 8
      %v95 = vstv %s94
      %v96 = vadd.s32 %v85, %v95
      %97 = vst [vmem:[%s93] sm:$0xff] %v96
    $region28: #{custom-call.21} parent=1 // loop_footer
      %s91 = sadd.s32 1, %s87
    $region29: #{custom-call.21} parent=1 // loop_footer_branch
      %86 = sbr.rel target = $region25
    $region30: #{custom-call.21} parent=1 // loop_exit
      _
    loop: start=0, step=1, limit=32
    $region31: #{custom-call.21} parent=1 // loop_pre_header
      _
    $region32: #{custom-call.21} parent=1 // loop_header
      %s99 = sphi 0, %s103
      %p100 = scmp.ge.s32.totalorder %s99, 32
    $region33: #{custom-call.21} parent=1 // loop_header_branch
      %102 = sbr.rel (%p100) target = $region37
    $region34: #{custom-call.21} parent=1 // loop_body
      %v104 = vstv %s99
      %v105 = vlaneseq
      %v106 = vshrl.u32 %v105, 7
      %v107 = vmov %v106
      %v108 = vld [vmem:[#allocation1] sm:$0xff]
      %v109 = vand.u32 2147483647, %v108
      %v111 = vstv %s99
      %vm112 = vcmp.ge.s32.totalorder %v107, %v111
      %vm113 = vcmp.lt.s32.totalorder %v107, 32
      %vm114 = vmand %vm112, %vm113
      %vm115 = vcmp.lt.f32.partialorder -inf, %v109
      %vm116 = vmand %vm114, %vm115
      %v117 = vsel %vm116, %v107, %v104
      %v118 = vsel %vm116, %v109, -inf
      %s119 = scalar_lea.vmem [#allocation1], 8
      %v120 = vld [vmem:[%s119] sm:$0xff]
      %v121 = vand.u32 2147483647, %v120
      %v122 = vadd.s32 %v107, 8
      %v123 = vstv %s99
      %vm124 = vcmp.ge.s32.totalorder %v122, %v123
      %vm125 = vcmp.lt.s32.totalorder %v122, 32
      %vm126 = vmand %vm124, %vm125
      %vm127 = vcmp.lt.f32.partialorder %v118, %v121
      %vm128 = vmand %vm126, %vm127
      %v129 = vsel %vm128, %v122, %v117
      %v130 = vsel %vm128, %v121, %v118
      %s131 = scalar_lea.vmem [#allocation1], 16
      %v132 = vld [vmem:[%s131] sm:$0xff]
      %v133 = vand.u32 2147483647, %v132
      %v134 = vadd.s32 %v107, 16
      %v135 = vstv %s99
      %vm136 = vcmp.ge.s32.totalorder %v134, %v135
      %vm137 = vcmp.lt.s32.totalorder %v134, 32
      %vm138 = vmand %vm136, %vm137
      %vm139 = vcmp.lt.f32.partialorder %v130, %v133
      %vm140 = vmand %vm138, %vm139
      %v141 = vsel %vm140, %v134, %v129
      %v142 = vsel %vm140, %v133, %v130
      %s143 = scalar_lea.vmem [#allocation1], 24
      %v144 = vld [vmem:[%s143] sm:$0xff]
      %v145 = vand.u32 2147483647, %v144
      %v146 = vadd.s32 %v107, 24
      %v147 = vstv %s99
      %vm148 = vcmp.ge.s32.totalorder %v146, %v147
      %vm149 = vcmp.lt.s32.totalorder %v146, 32
      %vm150 = vmand %vm148, %vm149
      %vm151 = vcmp.lt.f32.partialorder %v142, %v145
      %vm152 = vmand %vm150, %vm151
      %v153 = vsel %vm152, %v146, %v141
      %v154 = vsel %vm152, %v145, %v142
      %v155 = vrot.slane %v154, 1
      %v156 = vrot.slane %v153, 1
      %vm157 = vcmp.ge.f32.partialorder %v155, %v154
      %v158 = vsel %vm157, %v155, %v154
      %v159 = vsel %vm157, %v156, %v153
      %v160 = vrot.slane %v155, 1
      %v161 = vrot.slane %v156, 1
      %vm162 = vcmp.ge.f32.partialorder %v160, %v158
      %v163 = vsel %vm162, %v160, %v158
      %v164 = vsel %vm162, %v161, %v159
      %v165 = vrot.slane %v160, 1
      %v166 = vrot.slane %v161, 1
      %vm167 = vcmp.ge.f32.partialorder %v165, %v163
      %v168 = vsel %vm167, %v165, %v163
      %v169 = vsel %vm167, %v166, %v164
      %v170 = vrot.slane %v165, 1
      %v171 = vrot.slane %v166, 1
      %vm172 = vcmp.ge.f32.partialorder %v170, %v168
      %v173 = vsel %vm172, %v170, %v168
      %v174 = vsel %vm172, %v171, %v169
      %v175 = vrot.slane %v170, 1
      %v176 = vrot.slane %v171, 1
      %vm177 = vcmp.ge.f32.partialorder %v175, %v173
      %v178 = vsel %vm177, %v175, %v173
      %v179 = vsel %vm177, %v176, %v174
      %v180 = vrot.slane %v175, 1
      %v181 = vrot.slane %v176, 1
      %vm182 = vcmp.ge.f32.partialorder %v180, %v178
      %v183 = vsel %vm182, %v180, %v178
      %v184 = vsel %vm182, %v181, %v179
      %v185 = vrot.slane %v180, 1
      %v186 = vrot.slane %v181, 1
      %vm187 = vcmp.ge.f32.partialorder %v185, %v183
      %v188 = vsel %vm187, %v185, %v183
      %v189 = vsel %vm187, %v186, %v184
      %s190 = ssub.s32 128, %s99
      %191 = vrot.lane.b32.xlu0 %v189, %s190
      %v192 = vpop.permute.xlu0 %191
      %s193 = vtos %v192
      %v194 = vstv %s99
      %v195 = vlaneseq
      %v196 = vand.u32 %v195, 127
      %vm197 = vcmp.eq.s32.totalorder %v196, %v194
      %v198 = vstv %s193
      %v199 = vld [vmem:[#allocation2] ss:$0 sm:$0xff]
      %v200 = vsel %vm197, %v198, %v199
      %201 = vst [vmem:[#allocation2] sm:$0x1] %v200
      %s202 = scalar_lea.vmem [#allocation1], %s99
      %s203 = scalar_lea.vmem [#allocation1], %s193
      %v204 = vld [vmem:[%s202] ss:$0 sm:$0xff]
      %v205 = vld [vmem:[%s203] ss:$0 sm:$0xff]
      %206 = vst [vmem:[%s203] sm:$0x1] %v204
      %207 = vst [vmem:[%s202] sm:$0x1] %v205
      %s208 = scalar_lea.vmem [#allocation7], %s99
      %s209 = scalar_lea.vmem [#allocation7], %s193
      %v210 = vld [vmem:[%s208] ss:$0 sm:$0xff]
      %v211 = vld [vmem:[%s209] ss:$0 sm:$0xff]
      %212 = vst [vmem:[%s209] sm:$0x1] %v210
      %213 = vst [vmem:[%s208] sm:$0x1] %v211
      %vm214 = vcmp.ne.f32.partialorder %v205, 0.0
      %vm215 = vmand %vm197, %vm214
      %v216 = vsel %vm215, %v205, 1.0
      %v217 = vlaneseq
      %v218 = vand.u32 %v217, 127
      %v219 = vstv %s99
      %vm220 = vcmp.gt.s32.totalorder %v218, %v219
      %v221 = vsel %vm220, %v205, 0.0
      %v222 = vlaneseq
      %v223 = vshrl.u32 %v222, 7
      %v224 = vmov %v223
      %v225 = vld [vmem:[#allocation1] sm:$0xff]
      %v227 = vstv %s99
      %vm228 = vcmp.gt.s32.totalorder %v224, %v227
      %v229 = vsel %vm228, %v216, 1.0
      %v230 = vrcp.pop %v229
      %v231 = vmul.f32 %v225, %v230
      %vm232 = vmand %vm228, %vm197
      %v233 = vsel %vm232, %v231, 0.0
      %234 = vadd.xlane.f32.xlu0 %v233
      %v235 = vpop.xlane.xlu0 %234
      %v236 = vmul.f32 %v235, %v221
      %v237 = vsub.f32 %v231, %v236
      %238 = vst [vmem:[#allocation1] sm:$0xff] %v237
      %s239 = scalar_lea.vmem [#allocation1], 8
      %v240 = vld [vmem:[%s239] sm:$0xff]
      %v241 = vadd.s32 %v224, 8
      %v242 = vstv %s99
      %vm243 = vcmp.gt.s32.totalorder %v241, %v242
      %v244 = vsel %vm243, %v216, 1.0
      %v245 = vrcp.pop %v244
      %v246 = vmul.f32 %v240, %v245
      %vm247 = vmand %vm243, %vm197
      %v248 = vsel %vm247, %v246, 0.0
      %249 = vadd.xlane.f32.xlu0 %v248
      %v250 = vpop.xlane.xlu0 %249
      %v251 = vmul.f32 %v250, %v221
      %v252 = vsub.f32 %v246, %v251
      %253 = vst [vmem:[%s239] sm:$0xff] %v252
      %s254 = scalar_lea.vmem [#allocation1], 16
      %v255 = vld [vmem:[%s254] sm:$0xff]
      %v256 = vadd.s32 %v224, 16
      %v257 = vstv %s99
      %vm258 = vcmp.gt.s32.totalorder %v256, %v257
      %v259 = vsel %vm258, %v216, 1.0
      %v260 = vrcp.pop %v259
      %v261 = vmul.f32 %v255, %v260
      %vm262 = vmand %vm258, %vm197
      %v263 = vsel %vm262, %v261, 0.0
      %264 = vadd.xlane.f32.xlu0 %v263
      %v265 = vpop.xlane.xlu0 %264
      %v266 = vmul.f32 %v265, %v221
      %v267 = vsub.f32 %v261, %v266
      %268 = vst [vmem:[%s254] sm:$0xff] %v267
      %s269 = scalar_lea.vmem [#allocation1], 24
      %v270 = vld [vmem:[%s269] sm:$0xff]
      %v271 = vadd.s32 %v224, 24
      %v272 = vstv %s99
      %vm273 = vcmp.gt.s32.totalorder %v271, %v272
      %v274 = vsel %vm273, %v216, 1.0
      %v275 = vrcp.pop %v274
      %v276 = vmul.f32 %v270, %v275
      %vm277 = vmand %vm273, %vm197
      %v278 = vsel %vm277, %v276, 0.0
      %279 = vadd.xlane.f32.xlu0 %v278
      %v280 = vpop.xlane.xlu0 %279
      %v281 = vmul.f32 %v280, %v221
      %v282 = vsub.f32 %v276, %v281
      %283 = vst [vmem:[%s269] sm:$0xff] %v282
    $region35: #{custom-call.21} parent=1 // loop_footer
      %s103 = sadd.s32 1, %s99
    $region36: #{custom-call.21} parent=1 // loop_footer_branch
      %98 = sbr.rel target = $region32
    $region37: #{custom-call.21} parent=1 // loop_exit
      _
    %v284 = vld [vmem:[#allocation7] sm:$0xff]
    %s285 = scalar_lea.vmem [#allocation7], 8
    %v286 = vld [vmem:[%s285] sm:$0xff]
    %s287 = scalar_lea.vmem [#allocation7], 16
    %v288 = vld [vmem:[%s287] sm:$0xff]
    %s289 = scalar_lea.vmem [#allocation7], 24
    %v290 = vld [vmem:[%s289] sm:$0xff]
    %s291 = scalar_lea.vmem [#allocation7], 32
    %s292 = scalar_lea.vmem [#allocation7], 40
    %s293 = scalar_lea.vmem [#allocation7], 48
    %s294 = scalar_lea.vmem [#allocation7], 56
    %s295 = scalar_lea.vmem [#allocation7], 64
    %s296 = scalar_lea.vmem [#allocation7], 72
    %s297 = scalar_lea.vmem [#allocation7], 80
    %s298 = scalar_lea.vmem [#allocation7], 88
    %s299 = scalar_lea.vmem [#allocation7], 96
    %s300 = scalar_lea.vmem [#allocation7], 104
    %s301 = scalar_lea.vmem [#allocation7], 112
    %s302 = scalar_lea.vmem [#allocation7], 120
    %303 = vxpose.xlu0.b32.start [1/16] %v284, 128
    %304 = vxpose.xlu0.b32.cont [2/16] %v286, 128
    %305 = vxpose.xlu0.b32.cont [3/16] %v288, 128
    %306 = vxpose.xlu0.b32.cont [4/16] %v290, 128
    %307 = vxpose.xlu0.b32.cont [5/16] 0, 128
    %308 = vxpose.xlu0.b32.cont [6/16] 0, 128
    %309 = vxpose.xlu0.b32.cont [7/16] 0, 128
    %310 = vxpose.xlu0.b32.cont [8/16] 0, 128
    %311 = vxpose.xlu0.b32.cont [9/16] 0, 128
    %312 = vxpose.xlu0.b32.cont [10/16] 0, 128
    %313 = vxpose.xlu0.b32.cont [11/16] 0, 128
    %314 = vxpose.xlu0.b32.cont [12/16] 0, 128
    %315 = vxpose.xlu0.b32.cont [13/16] 0, 128
    %316 = vxpose.xlu0.b32.cont [14/16] 0, 128
    %317 = vxpose.xlu0.b32.cont [15/16] 0, 128
    %318 = vxpose.xlu0.b32.end [16/16] 0, 128
    %v319 = vpop.trf.xlu0
    %v320 = vpop.trf.xlu0
    %v321 = vpop.trf.xlu0
    %v322 = vpop.trf.xlu0
    %v323 = vpop.trf.xlu0
    %v324 = vpop.trf.xlu0
    %v325 = vpop.trf.xlu0
    %v326 = vpop.trf.xlu0
    %v327 = vpop.trf.xlu0
    %v328 = vpop.trf.xlu0
    %v329 = vpop.trf.xlu0
    %v330 = vpop.trf.xlu0
    %v331 = vpop.trf.xlu0
    %v332 = vpop.trf.xlu0
    %v333 = vpop.trf.xlu0
    %v334 = vpop.trf.xlu0
    %335 = vst [vmem:[#allocation5] sm:$0x1] %v319
    %s337 = sshllo.u32 0, 1
    %v339 = vld [vmem:[#allocation2] sm:%s337]
    %s340 = sshllo.u32 0, 1
    %341 = vst [vmem:[#allocation3] sm:%s340] %v339
    %s343 = sshllo.u32 0, 1
    %v345 = vld [vmem:[#allocation5] sm:%s343]
    %s346 = sshllo.u32 0, 1
    %347 = vst [vmem:[#allocation6] sm:%s346] %v345
    %p349 = scmp.gt.s32.totalorder 32, 0
    // Predicated region
    $region38: #{custom-call.21} parent=1 // pred_check
      %p350 = pneg %p349
    $region39: #{custom-call.21} parent=1 // pred_check_branch
      %352 = sbr.rel (%p350) target = $region41
    $region40: #{custom-call.21} parent=1 // pred_region
      %s353 = sshra.s32 32, 3
      %p354 = scmp.gt.s32.totalorder %s353, 0
      // Predicated region
      $region42: #{custom-call.21} parent=40 // pred_check
        %p355 = pneg %p354
      $region43: #{custom-call.21} parent=40 // pred_check_branch
        %357 = sbr.rel (%p355) target = $region45
      $region44: #{custom-call.21} parent=40 // pred_region
        %s358 = ssub.s32 %s353, 1
        %s359 = smul.u32 %s358, 128
        %s360 = sshra.s32 %s359, 4
        %s361 = scalar_lea.vmem [#allocation1], %s360
        %v362 = vld [vmem:[#allocation1] sm:$0xff]
        // While loop
        $region46: #{custom-call.21} parent=44 // loop_pre_header
          _
        $region47: #{custom-call.21} parent=44 // loop_header
          %s363 = sphi [#allocation1], %s385
          %s364 = sphi %s1, %s386
          %v365 = vphi %v362, %v387
          %s366 = ssub.s32 %s361, 64
          %p367 = scmp.gt.s32.totalorder %s363, %s366
        $region48: #{custom-call.21} parent=44 // loop_header_branch
          %369 = sbr.rel (%p367) target = $region52
        $region49: #{custom-call.21} parent=44 // loop_body
          %370 = vst [vmem:[%s364] sm:$0xff] %v365
          %v371 = vld [vmem:[%s363 + $0x8] sm:$0xff]
          %372 = vst [vmem:[%s364 + $0x8] sm:$0xff] %v371
          %v373 = vld [vmem:[%s363 + $0x10] sm:$0xff]
          %374 = vst [vmem:[%s364 + $0x10] sm:$0xff] %v373
          %v375 = vld [vmem:[%s363 + $0x18] sm:$0xff]
          %376 = vst [vmem:[%s364 + $0x18] sm:$0xff] %v375
          %v377 = vld [vmem:[%s363 + $0x20] sm:$0xff]
          %378 = vst [vmem:[%s364 + $0x20] sm:$0xff] %v377
          %v379 = vld [vmem:[%s363 + $0x28] sm:$0xff]
          %380 = vst [vmem:[%s364 + $0x28] sm:$0xff] %v379
          %v381 = vld [vmem:[%s363 + $0x30] sm:$0xff]
          %382 = vst [vmem:[%s364 + $0x30] sm:$0xff] %v381
          %v383 = vld [vmem:[%s363 + $0x38] sm:$0xff]
          %384 = vst [vmem:[%s364 + $0x38] sm:$0xff] %v383
        $region50: #{custom-call.21} parent=44 // loop_footer
          %s385 = scalar_lea.vmem %s363, 64
          %s386 = scalar_lea.vmem %s364, 64
          %v387 = vld [vmem:[%s363 + $0x40] sm:$0xff]
        $region51: #{custom-call.21} parent=44 // loop_footer_branch
          %388 = sbr.rel target = $region47
        $region52: #{custom-call.21} parent=44 // loop_exit
          _
        // While loop
        $region53: #{custom-call.21} parent=44 // loop_pre_header
          _
        $region54: #{custom-call.21} parent=44 // loop_header
          %s389 = sphi %s363, %s397
          %s390 = sphi %s364, %s398
          %v391 = vphi %v365, %v391
          %p392 = scmp.gt.s32.totalorder %s389, %s361
        $region55: #{custom-call.21} parent=44 // loop_header_branch
          %394 = sbr.rel (%p392) target = $region59
        $region56: #{custom-call.21} parent=44 // loop_body
          %v395 = vld [vmem:[%s389] sm:$0xff]
          %396 = vst [vmem:[%s390] sm:$0xff] %v395
        $region57: #{custom-call.21} parent=44 // loop_footer
          %s397 = scalar_lea.vmem %s389, 8
          %s398 = scalar_lea.vmem %s390, 8
        $region58: #{custom-call.21} parent=44 // loop_footer_branch
          %399 = sbr.rel target = $region54
        $region59: #{custom-call.21} parent=44 // loop_exit
          _
      $region45: #{custom-call.21} parent=40 // pred_fallthru
        _
      %s400 = sand.u32 32, 7
      %s401 = sshllo.u32 0, %s400
      %s402 = smul.u32 %s353, 128
      %s403 = sshra.s32 %s402, 4
      %s404 = scalar_lea.vmem %s1, %s403
      %s405 = smul.u32 %s353, 128
      %s406 = sshra.s32 %s405, 4
      %s407 = scalar_lea.vmem [#allocation1], %s406
      %v408 = vld [vmem:[%s407] sm:%s401]
      %409 = vst [vmem:[%s404] sm:%s401] %v408
    $region41: #{custom-call.21} parent=1 // pred_fallthru
      _
    // Predicated region
    $region60: #{custom-call.21} parent=1 // pred_check
      _
    $region61: #{custom-call.21} parent=1 // pred_check_branch
      %411 = sbr.rel (0) target = $region63
    $region62: #{custom-call.21} parent=1 // pred_region
      %s413 = ssub.s32 16, 16
      %414 = vsyncadd [#allocation4], %s413
      %s415 = sshll.u32 [#allocation3], 4
      %s416 = int_to_ptr.vmem [resolvable:$true] %s415
      %418 = dma.vmem_to_hbm [thread:$0]  %s416, 16, %s2, [#allocation4]
    $region63: #{custom-call.21} parent=1 // pred_fallthru
      _
    // Predicated region
    $region64: #{custom-call.21} parent=1 // pred_check
      _
    $region65: #{custom-call.21} parent=1 // pred_check_branch
      %420 = sbr.rel (0) target = $region67
    $region66: #{custom-call.21} parent=1 // pred_region
      %p422 = scmp.gt.s32.totalorder 1, 0
      // Predicated region
      $region68: #{custom-call.21} parent=66 // pred_check
        %p423 = pneg %p422
      $region69: #{custom-call.21} parent=66 // pred_check_branch
        %425 = sbr.rel (%p423) target = $region71
      $region70: #{custom-call.21} parent=66 // pred_region
        %s426 = sshra.s32 1, 3
        %p427 = scmp.gt.s32.totalorder %s426, 0
        // Predicated region
        $region72: #{custom-call.21} parent=70 // pred_check
          %p428 = pneg %p427
        $region73: #{custom-call.21} parent=70 // pred_check_branch
          %430 = sbr.rel (%p428) target = $region75
        $region74: #{custom-call.21} parent=70 // pred_region
          %s431 = ssub.s32 %s426, 1
          %s432 = smul.u32 %s431, 128
          %s433 = sshra.s32 %s432, 4
          %s434 = scalar_lea.vmem [#allocation6], %s433
          %v435 = vld [vmem:[#allocation6] sm:$0xff]
          // While loop
          $region76: #{custom-call.21} parent=74 // loop_pre_header
            _
          $region77: #{custom-call.21} parent=74 // loop_header
            %s436 = sphi [#allocation6], %s458
            %s437 = sphi %s3, %s459
            %v438 = vphi %v435, %v460
            %s439 = ssub.s32 %s434, 64
            %p440 = scmp.gt.s32.totalorder %s436, %s439
          $region78: #{custom-call.21} parent=74 // loop_header_branch
            %442 = sbr.rel (%p440) target = $region82
          $region79: #{custom-call.21} parent=74 // loop_body
            %443 = vst [vmem:[%s437] sm:$0xff] %v438
            %v444 = vld [vmem:[%s436 + $0x8] sm:$0xff]
            %445 = vst [vmem:[%s437 + $0x8] sm:$0xff] %v444
            %v446 = vld [vmem:[%s436 + $0x10] sm:$0xff]
            %447 = vst [vmem:[%s437 + $0x10] sm:$0xff] %v446
            %v448 = vld [vmem:[%s436 + $0x18] sm:$0xff]
            %449 = vst [vmem:[%s437 + $0x18] sm:$0xff] %v448
            %v450 = vld [vmem:[%s436 + $0x20] sm:$0xff]
            %451 = vst [vmem:[%s437 + $0x20] sm:$0xff] %v450
            %v452 = vld [vmem:[%s436 + $0x28] sm:$0xff]
            %453 = vst [vmem:[%s437 + $0x28] sm:$0xff] %v452
            %v454 = vld [vmem:[%s436 + $0x30] sm:$0xff]
            %455 = vst [vmem:[%s437 + $0x30] sm:$0xff] %v454
            %v456 = vld [vmem:[%s436 + $0x38] sm:$0xff]
            %457 = vst [vmem:[%s437 + $0x38] sm:$0xff] %v456
          $region80: #{custom-call.21} parent=74 // loop_footer
            %s458 = scalar_lea.vmem %s436, 64
            %s459 = scalar_lea.vmem %s437, 64
            %v460 = vld [vmem:[%s436 + $0x40] sm:$0xff]
          $region81: #{custom-call.21} parent=74 // loop_footer_branch
            %461 = sbr.rel target = $region77
          $region82: #{custom-call.21} parent=74 // loop_exit
            _
          // While loop
          $region83: #{custom-call.21} parent=74 // loop_pre_header
            _
          $region84: #{custom-call.21} parent=74 // loop_header
            %s462 = sphi %s436, %s470
            %s463 = sphi %s437, %s471
            %v464 = vphi %v438, %v464
            %p465 = scmp.gt.s32.totalorder %s462, %s434
          $region85: #{custom-call.21} parent=74 // loop_header_branch
            %467 = sbr.rel (%p465) target = $region89
          $region86: #{custom-call.21} parent=74 // loop_body
            %v468 = vld [vmem:[%s462] sm:$0xff]
            %469 = vst [vmem:[%s463] sm:$0xff] %v468
          $region87: #{custom-call.21} parent=74 // loop_footer
            %s470 = scalar_lea.vmem %s462, 8
            %s471 = scalar_lea.vmem %s463, 8
          $region88: #{custom-call.21} parent=74 // loop_footer_branch
            %472 = sbr.rel target = $region84
          $region89: #{custom-call.21} parent=74 // loop_exit
            _
        $region75: #{custom-call.21} parent=70 // pred_fallthru
          _
        %s473 = sand.u32 1, 7
        %s474 = sshllo.u32 0, %s473
        %s475 = smul.u32 %s426, 128
        %s476 = sshra.s32 %s475, 4
        %s477 = scalar_lea.vmem %s3, %s476
        %s478 = smul.u32 %s426, 128
        %s479 = sshra.s32 %s478, 4
        %s480 = scalar_lea.vmem [#allocation6], %s479
        %v481 = vld [vmem:[%s480] sm:%s474]
        %482 = vst [vmem:[%s477] sm:%s474] %v481
      $region71: #{custom-call.21} parent=66 // pred_fallthru
        _
    $region67: #{custom-call.21} parent=1 // pred_fallthru
      _
    // Predicated region
    $region90: #{custom-call.21} parent=1 // pred_check
      _
    $region91: #{custom-call.21} parent=1 // pred_check_branch
      %484 = sbr.rel (0) target = $region93
    $region92: #{custom-call.21} parent=1 // pred_region
      %485 = dma.done [#allocation4], 16
    $region93: #{custom-call.21} parent=1 // pred_fallthru
      _
    // Predicated region
    $region94: #{custom-call.21} parent=1 // pred_check
      _
    $region95: #{custom-call.21} parent=1 // pred_check_branch
      %487 = sbr.rel (0) target = $region97
    $region96: #{custom-call.21} parent=1 // pred_region
      _
    $region97: #{custom-call.21} parent=1 // pred_fallthru
      _
    %488 = vsyncpa [#allocation4], 1

// kernel: custom-call.8
$region0: #{custom-call.8}
  %s0 = inlined_call_operand.vmem [shape: f32[1,32,32], index: 0, kind: input, shape index: {}]
  %s1 = inlined_call_operand.vmem [shape: f32[1,32,32], index: 1, kind: output, shape index: {}]
  $region1: #{custom-call.8} parent=0
    #allocation0 [shape = 'u8[16384]{0}', space=vmem, size = 0x4000, scoped, tag = 'operand span for operand 0']
    #allocation1 [shape = 'u8[16384]{0}', space=vmem, size = 0x4000, scoped, tag = 'operand span for operand 1']
    #allocation2 [shape = 'f32[32,32]{1,0}', space=vmem, size = 0x4000, scoped, tag = 'rescaled input a']
    // Predicated region
    $region2: #{custom-call.8} parent=1 // pred_check
      _
    $region3: #{custom-call.8} parent=1 // pred_check_branch
      %3 = sbr.rel (0) target = $region5
    $region4: #{custom-call.8} parent=1 // pred_region
      // Predicated region
      $region6: #{custom-call.8} parent=4 // pred_check
        _
      $region7: #{custom-call.8} parent=4 // pred_check_branch
        %5 = sbr.rel (0) target = $region9
      $region8: #{custom-call.8} parent=4 // pred_region
        // Predicated region
        $region21: #{custom-call.8} parent=8 // pred_check
          _
        $region22: #{custom-call.8} parent=8 // pred_check_branch
          %26 = sbr.rel (0) target = $region24
        $region23: #{custom-call.8} parent=8 // pred_region
          loop: start=0, step=1, limit=1
          $region25: #{custom-call.8} parent=23 // loop_pre_header
            _
          $region26: #{custom-call.8} parent=23 // loop_header
            %s28 = sphi 0, %s32
            %p29 = scmp.ge.s32.totalorder %s28, 1
            %s33 = sphi %s0, %s0
            %s34 = sphi [#allocation0], [#allocation0]
          $region27: #{custom-call.8} parent=23 // loop_header_branch
            %31 = sbr.rel (%p29) target = $region31
          $region28: #{custom-call.8} parent=23 // loop_body
            %v35 = vld [vmem:[%s33] sm:$0xff]
            %36 = vst [vmem:[%s34] sm:$0xff] %v35
            %v37 = vld [vmem:[%s33 + $0x8] sm:$0xff]
            %38 = vst [vmem:[%s34 + $0x8] sm:$0xff] %v37
            %v39 = vld [vmem:[%s33 + $0x10] sm:$0xff]
            %40 = vst [vmem:[%s34 + $0x10] sm:$0xff] %v39
            %v41 = vld [vmem:[%s33 + $0x18] sm:$0xff]
            %42 = vst [vmem:[%s34 + $0x18] sm:$0xff] %v41
          $region29: #{custom-call.8} parent=23 // loop_footer
            %s32 = sadd.s32 1, %s28
          $region30: #{custom-call.8} parent=23 // loop_footer_branch
            %27 = sbr.rel target = $region26
          $region31: #{custom-call.8} parent=23 // loop_exit
            _
        $region24: #{custom-call.8} parent=8 // pred_fallthru
          _
        // Predicated region
        $region32: #{custom-call.8} parent=8 // pred_check
          _
        $region33: #{custom-call.8} parent=8 // pred_check_branch
          %44 = sbr.rel target = $region35
        $region34: #{custom-call.8} parent=8 // pred_region
          _
        $region35: #{custom-call.8} parent=8 // pred_fallthru
          _
      $region9: #{custom-call.8} parent=4 // pred_fallthru
        _
      // Predicated region
      $region10: #{custom-call.8} parent=4 // pred_check
        _
      $region11: #{custom-call.8} parent=4 // pred_check_branch
        %7 = sbr.rel target = $region13
      $region12: #{custom-call.8} parent=4 // pred_region
        loop: start=0, step=1, limit=1
        $region14: #{custom-call.8} parent=12 // loop_pre_header
          _
        $region15: #{custom-call.8} parent=12 // loop_header
          %s10 = sphi 0, %s14
          %p11 = scmp.ge.s32.totalorder %s10, 1
          %s15 = sphi %s0, %s0
          %s16 = sphi [#allocation0], [#allocation0]
        $region16: #{custom-call.8} parent=12 // loop_header_branch
          %13 = sbr.rel (%p11) target = $region20
        $region17: #{custom-call.8} parent=12 // loop_body
          %v17 = vld [vmem:[%s15] sm:$0xff]
          %18 = vst [vmem:[%s16] sm:$0xff] %v17
          %v19 = vld [vmem:[%s15 + $0x8] sm:$0xff]
          %20 = vst [vmem:[%s16 + $0x8] sm:$0xff] %v19
          %v21 = vld [vmem:[%s15 + $0x10] sm:$0xff]
          %22 = vst [vmem:[%s16 + $0x10] sm:$0xff] %v21
          %v23 = vld [vmem:[%s15 + $0x18] sm:$0xff]
          %24 = vst [vmem:[%s16 + $0x18] sm:$0xff] %v23
        $region18: #{custom-call.8} parent=12 // loop_footer
          %s14 = sadd.s32 1, %s10
        $region19: #{custom-call.8} parent=12 // loop_footer_branch
          %9 = sbr.rel target = $region15
        $region20: #{custom-call.8} parent=12 // loop_exit
          _
      $region13: #{custom-call.8} parent=4 // pred_fallthru
        _
    $region5: #{custom-call.8} parent=1 // pred_fallthru
      _
    %45 = vnop
    %v46 = vlaneseq
    %v47 = vand.u32 %v46, 127
    %vm48 = vcmp.lt.s32.totalorder %v47, 32
    %v49 = vlaneseq
    %v50 = vshrl.u32 %v49, 7
    %vm52 = vcmp.eq.s32.totalorder %v50, %v47
    %v53 = vld [vmem:[#allocation0] sm:$0xff]
    %v54 = vsel %vm52, %v53, 0.0
    %55 = vadd.xlane.f32.xlu0 %v54
    %v56 = vpop.xlane.xlu0 %55
    %vm57 = vcmp.ge.s32.totalorder %v50, %v47
    %vm58 = vmand %vm57, %vm48
    %v59 = vsel %vm58, %v53, 0.0
    %v60 = vrcp.pop %v56
    %v61 = vmul.f32 %v59, %v60
    %62 = vst [vmem:[#allocation2] sm:$0xff] %v61
    %s63 = scalar_lea.vmem [#allocation0], 8
    %s64 = scalar_lea.vmem [#allocation2], 8
    %v65 = vlaneseq
    %v66 = vshrl.u32 %v65, 7
    %v67 = vadd.s32 %v66, 8
    %vm68 = vcmp.eq.s32.totalorder %v67, %v47
    %v69 = vld [vmem:[%s63] sm:$0xff]
    %v70 = vsel %vm68, %v69, 0.0
    %71 = vadd.xlane.f32.xlu0 %v70
    %v72 = vpop.xlane.xlu0 %71
    %vm73 = vcmp.ge.s32.totalorder %v67, %v47
    %vm74 = vmand %vm73, %vm48
    %v75 = vsel %vm74, %v69, 0.0
    %v76 = vrcp.pop %v72
    %v77 = vmul.f32 %v75, %v76
    %78 = vst [vmem:[%s64] sm:$0xff] %v77
    %s79 = scalar_lea.vmem [#allocation0], 16
    %s80 = scalar_lea.vmem [#allocation2], 16
    %v81 = vlaneseq
    %v82 = vshrl.u32 %v81, 7
    %v83 = vadd.s32 %v82, 16
    %vm84 = vcmp.eq.s32.totalorder %v83, %v47
    %v85 = vld [vmem:[%s79] sm:$0xff]
    %v86 = vsel %vm84, %v85, 0.0
    %87 = vadd.xlane.f32.xlu0 %v86
    %v88 = vpop.xlane.xlu0 %87
    %vm89 = vcmp.ge.s32.totalorder %v83, %v47
    %vm90 = vmand %vm89, %vm48
    %v91 = vsel %vm90, %v85, 0.0
    %v92 = vrcp.pop %v88
    %v93 = vmul.f32 %v91, %v92
    %94 = vst [vmem:[%s80] sm:$0xff] %v93
    %s95 = scalar_lea.vmem [#allocation0], 24
    %s96 = scalar_lea.vmem [#allocation2], 24
    %v97 = vlaneseq
    %v98 = vshrl.u32 %v97, 7
    %v99 = vadd.s32 %v98, 24
    %vm100 = vcmp.eq.s32.totalorder %v99, %v47
    %v101 = vld [vmem:[%s95] sm:$0xff]
    %v102 = vsel %vm100, %v101, 0.0
    %103 = vadd.xlane.f32.xlu0 %v102
    %v104 = vpop.xlane.xlu0 %103
    %vm105 = vcmp.ge.s32.totalorder %v99, %v47
    %vm106 = vmand %vm105, %vm48
    %v107 = vsel %vm106, %v101, 0.0
    %v108 = vrcp.pop %v104
    %v109 = vmul.f32 %v107, %v108
    %110 = vst [vmem:[%s96] sm:$0xff] %v109
    %v111 = vlaneseq
    %v112 = vand.u32 %v111, 127
    %v113 = vlaneseq
    %v114 = vshrl.u32 %v113, 7
    %vm116 = vcmp.eq.s32.totalorder %v112, %v114
    %v117 = vlaneseq
    %v118 = vand.u32 %v117, 127
    %vm119 = vcmp.eq.s32.totalorder %v118, 0
    %v120 = vsel %vm119, 1.0, -1.0
    %v121 = vsel %vm116, %v120, 0.0
    %v122 = vlaneseq
    %v123 = vand.u32 %v122, 127
    %v124 = vlaneseq
    %v125 = vshrl.u32 %v124, 7
    %v126 = vadd.s32 %v125, 8
    %vm127 = vcmp.eq.s32.totalorder %v123, %v126
    %v128 = vsel %vm127, -1.0, 0.0
    %v129 = vlaneseq
    %v130 = vand.u32 %v129, 127
    %v131 = vlaneseq
    %v132 = vshrl.u32 %v131, 7
    %v133 = vadd.s32 %v132, 16
    %vm134 = vcmp.eq.s32.totalorder %v130, %v133
    %v135 = vsel %vm134, -1.0, 0.0
    %v136 = vlaneseq
    %v137 = vand.u32 %v136, 127
    %v138 = vlaneseq
    %v139 = vshrl.u32 %v138, 7
    %v140 = vadd.s32 %v139, 24
    %vm141 = vcmp.eq.s32.totalorder %v137, %v140
    %v142 = vsel %vm141, -1.0, 0.0
    %s143 = scalar_lea.vmem [#allocation2], 1
    %v144 = vld [vmem:[%s143] ss:$0 sm:$0xff]
    %v145 = vxor.u32 %v144, 2147483648
    %v146 = vlaneseq
    %v147 = vand.u32 %v146, 127
    %vm148 = vcmp.eq.s32.totalorder %v147, 1
    %v149 = vmul.f32 %v145, %v121
    %150 = vadd.xlane.f32.xlu0 %v149
    %v151 = vpop.xlane.xlu0 %150
    %v152 = vsel %vm148, %v151, %v121
    %s153 = scalar_lea.vmem [#allocation2], 2
    %v154 = vld [vmem:[%s153] ss:$0 sm:$0xff]
    %v155 = vxor.u32 %v154, 2147483648
    %v156 = vlaneseq
    %v157 = vand.u32 %v156, 127
    %vm158 = vcmp.eq.s32.totalorder %v157, 2
    %v159 = vmul.f32 %v155, %v152
    %160 = vadd.xlane.f32.xlu0 %v159
    %v161 = vpop.xlane.xlu0 %160
    %v162 = vsel %vm158, %v161, %v152
    %s163 = scalar_lea.vmem [#allocation2], 3
    %v164 = vld [vmem:[%s163] ss:$0 sm:$0xff]
    %v165 = vxor.u32 %v164, 2147483648
    %v166 = vlaneseq
    %v167 = vand.u32 %v166, 127
    %vm168 = vcmp.eq.s32.totalorder %v167, 3
    %v169 = vmul.f32 %v165, %v162
    %170 = vadd.xlane.f32.xlu0 %v169
    %v171 = vpop.xlane.xlu0 %170
    %v172 = vsel %vm168, %v171, %v162
    %s173 = scalar_lea.vmem [#allocation2], 4
    %v174 = vld [vmem:[%s173] ss:$0 sm:$0xff]
    %v175 = vxor.u32 %v174, 2147483648
    %v176 = vlaneseq
    %v177 = vand.u32 %v176, 127
    %vm178 = vcmp.eq.s32.totalorder %v177, 4
    %v179 = vmul.f32 %v175, %v172
    %180 = vadd.xlane.f32.xlu0 %v179
    %v181 = vpop.xlane.xlu0 %180
    %v182 = vsel %vm178, %v181, %v172
    %s183 = scalar_lea.vmem [#allocation2], 5
    %v184 = vld [vmem:[%s183] ss:$0 sm:$0xff]
    %v185 = vxor.u32 %v184, 2147483648
    %v186 = vlaneseq
    %v187 = vand.u32 %v186, 127
    %vm188 = vcmp.eq.s32.totalorder %v187, 5
    %v189 = vmul.f32 %v185, %v182
    %190 = vadd.xlane.f32.xlu0 %v189
    %v191 = vpop.xlane.xlu0 %190
    %v192 = vsel %vm188, %v191, %v182
    %s193 = scalar_lea.vmem [#allocation2], 6
    %v194 = vld [vmem:[%s193] ss:$0 sm:$0xff]
    %v195 = vxor.u32 %v194, 2147483648
    %v196 = vlaneseq
    %v197 = vand.u32 %v196, 127
    %vm198 = vcmp.eq.s32.totalorder %v197, 6
    %v199 = vmul.f32 %v195, %v192
    %200 = vadd.xlane.f32.xlu0 %v199
    %v201 = vpop.xlane.xlu0 %200
    %v202 = vsel %vm198, %v201, %v192
    %s203 = scalar_lea.vmem [#allocation2], 7
    %v204 = vld [vmem:[%s203] ss:$0 sm:$0xff]
    %v205 = vxor.u32 %v204, 2147483648
    %v206 = vlaneseq
    %v207 = vand.u32 %v206, 127
    %vm208 = vcmp.eq.s32.totalorder %v207, 7
    %v209 = vmul.f32 %v205, %v202
    %210 = vadd.xlane.f32.xlu0 %v209
    %v211 = vpop.xlane.xlu0 %210
    %v212 = vsel %vm208, %v211, %v202
    %s213 = scalar_lea.vmem [#allocation2], 8
    %v214 = vld [vmem:[%s213] ss:$0 sm:$0xff]
    %v215 = vxor.u32 %v214, 2147483648
    %v216 = vlaneseq
    %v217 = vand.u32 %v216, 127
    %vm218 = vcmp.eq.s32.totalorder %v217, 8
    %v219 = vmul.f32 %v215, %v212
    %220 = vadd.xlane.f32.xlu0 %v219
    %v221 = vpop.xlane.xlu0 %220
    %v222 = vsel %vm218, %v221, %v212
    %v223 = vmul.f32 %v215, %v128
    %224 = vadd.xlane.f32.xlu0 %v223
    %v225 = vpop.xlane.xlu0 %224
    %v226 = vsel %vm218, %v225, %v128
    %s227 = scalar_lea.vmem [#allocation2], 9
    %v228 = vld [vmem:[%s227] ss:$0 sm:$0xff]
    %v229 = vxor.u32 %v228, 2147483648
    %v230 = vlaneseq
    %v231 = vand.u32 %v230, 127
    %vm232 = vcmp.eq.s32.totalorder %v231, 9
    %v233 = vmul.f32 %v229, %v222
    %234 = vadd.xlane.f32.xlu0 %v233
    %v235 = vpop.xlane.xlu0 %234
    %v236 = vsel %vm232, %v235, %v222
    %v237 = vmul.f32 %v229, %v226
    %238 = vadd.xlane.f32.xlu0 %v237
    %v239 = vpop.xlane.xlu0 %238
    %v240 = vsel %vm232, %v239, %v226
    %s241 = scalar_lea.vmem [#allocation2], 10
    %v242 = vld [vmem:[%s241] ss:$0 sm:$0xff]
    %v243 = vxor.u32 %v242, 2147483648
    %v244 = vlaneseq
    %v245 = vand.u32 %v244, 127
    %vm246 = vcmp.eq.s32.totalorder %v245, 10
    %v247 = vmul.f32 %v243, %v236
    %248 = vadd.xlane.f32.xlu0 %v247
    %v249 = vpop.xlane.xlu0 %248
    %v250 = vsel %vm246, %v249, %v236
    %v251 = vmul.f32 %v243, %v240
    %252 = vadd.xlane.f32.xlu0 %v251
    %v253 = vpop.xlane.xlu0 %252
    %v254 = vsel %vm246, %v253, %v240
    %s255 = scalar_lea.vmem [#allocation2], 11
    %v256 = vld [vmem:[%s255] ss:$0 sm:$0xff]
    %v257 = vxor.u32 %v256, 2147483648
    %v258 = vlaneseq
    %v259 = vand.u32 %v258, 127
    %vm260 = vcmp.eq.s32.totalorder %v259, 11
    %v261 = vmul.f32 %v257, %v250
    %262 = vadd.xlane.f32.xlu0 %v261
    %v263 = vpop.xlane.xlu0 %262
    %v264 = vsel %vm260, %v263, %v250
    %v265 = vmul.f32 %v257, %v254
    %266 = vadd.xlane.f32.xlu0 %v265
    %v267 = vpop.xlane.xlu0 %266
    %v268 = vsel %vm260, %v267, %v254
    %s269 = scalar_lea.vmem [#allocation2], 12
    %v270 = vld [vmem:[%s269] ss:$0 sm:$0xff]
    %v271 = vxor.u32 %v270, 2147483648
    %v272 = vlaneseq
    %v273 = vand.u32 %v272, 127
    %vm274 = vcmp.eq.s32.totalorder %v273, 12
    %v275 = vmul.f32 %v271, %v264
    %276 = vadd.xlane.f32.xlu0 %v275
    %v277 = vpop.xlane.xlu0 %276
    %v278 = vsel %vm274, %v277, %v264
    %v279 = vmul.f32 %v271, %v268
    %280 = vadd.xlane.f32.xlu0 %v279
    %v281 = vpop.xlane.xlu0 %280
    %v282 = vsel %vm274, %v281, %v268
    %s283 = scalar_lea.vmem [#allocation2], 13
    %v284 = vld [vmem:[%s283] ss:$0 sm:$0xff]
    %v285 = vxor.u32 %v284, 2147483648
    %v286 = vlaneseq
    %v287 = vand.u32 %v286, 127
    %vm288 = vcmp.eq.s32.totalorder %v287, 13
    %v289 = vmul.f32 %v285, %v278
    %290 = vadd.xlane.f32.xlu0 %v289
    %v291 = vpop.xlane.xlu0 %290
    %v292 = vsel %vm288, %v291, %v278
    %v293 = vmul.f32 %v285, %v282
    %294 = vadd.xlane.f32.xlu0 %v293
    %v295 = vpop.xlane.xlu0 %294
    %v296 = vsel %vm288, %v295, %v282
    %s297 = scalar_lea.vmem [#allocation2], 14
    %v298 = vld [vmem:[%s297] ss:$0 sm:$0xff]
    %v299 = vxor.u32 %v298, 2147483648
    %v300 = vlaneseq
    %v301 = vand.u32 %v300, 127
    %vm302 = vcmp.eq.s32.totalorder %v301, 14
    %v303 = vmul.f32 %v299, %v292
    %304 = vadd.xlane.f32.xlu0 %v303
    %v305 = vpop.xlane.xlu0 %304
    %v306 = vsel %vm302, %v305, %v292
    %v307 = vmul.f32 %v299, %v296
    %308 = vadd.xlane.f32.xlu0 %v307
    %v309 = vpop.xlane.xlu0 %308
    %v310 = vsel %vm302, %v309, %v296
    %s311 = scalar_lea.vmem [#allocation2], 15
    %v312 = vld [vmem:[%s311] ss:$0 sm:$0xff]
    %v313 = vxor.u32 %v312, 2147483648
    %v314 = vlaneseq
    %v315 = vand.u32 %v314, 127
    %vm316 = vcmp.eq.s32.totalorder %v315, 15
    %v317 = vmul.f32 %v313, %v306
    %318 = vadd.xlane.f32.xlu0 %v317
    %v319 = vpop.xlane.xlu0 %318
    %v320 = vsel %vm316, %v319, %v306
    %v321 = vmul.f32 %v313, %v310
    %322 = vadd.xlane.f32.xlu0 %v321
    %v323 = vpop.xlane.xlu0 %322
    %v324 = vsel %vm316, %v323, %v310
    %s325 = scalar_lea.vmem [#allocation2], 16
    %v326 = vld [vmem:[%s325] ss:$0 sm:$0xff]
    %v327 = vxor.u32 %v326, 2147483648
    %v328 = vlaneseq
    %v329 = vand.u32 %v328, 127
    %vm330 = vcmp.eq.s32.totalorder %v329, 16
    %v331 = vmul.f32 %v327, %v320
    %332 = vadd.xlane.f32.xlu0 %v331
    %v333 = vpop.xlane.xlu0 %332
    %v334 = vsel %vm330, %v333, %v320
    %v335 = vmul.f32 %v327, %v324
    %336 = vadd.xlane.f32.xlu0 %v335
    %v337 = vpop.xlane.xlu0 %336
    %v338 = vsel %vm330, %v337, %v324
    %v339 = vmul.f32 %v327, %v135
    %340 = vadd.xlane.f32.xlu0 %v339
    %v341 = vpop.xlane.xlu0 %340
    %v342 = vsel %vm330, %v341, %v135
    %s343 = scalar_lea.vmem [#allocation2], 17
    %v344 = vld [vmem:[%s343] ss:$0 sm:$0xff]
    %v345 = vxor.u32 %v344, 2147483648
    %v346 = vlaneseq
    %v347 = vand.u32 %v346, 127
    %vm348 = vcmp.eq.s32.totalorder %v347, 17
    %v349 = vmul.f32 %v345, %v334
    %350 = vadd.xlane.f32.xlu0 %v349
    %v351 = vpop.xlane.xlu0 %350
    %v352 = vsel %vm348, %v351, %v334
    %v353 = vmul.f32 %v345, %v338
    %354 = vadd.xlane.f32.xlu0 %v353
    %v355 = vpop.xlane.xlu0 %354
    %v356 = vsel %vm348, %v355, %v338
    %v357 = vmul.f32 %v345, %v342
    %358 = vadd.xlane.f32.xlu0 %v357
    %v359 = vpop.xlane.xlu0 %358
    %v360 = vsel %vm348, %v359, %v342
    %s361 = scalar_lea.vmem [#allocation2], 18
    %v362 = vld [vmem:[%s361] ss:$0 sm:$0xff]
    %v363 = vxor.u32 %v362, 2147483648
    %v364 = vlaneseq
    %v365 = vand.u32 %v364, 127
    %vm366 = vcmp.eq.s32.totalorder %v365, 18
    %v367 = vmul.f32 %v363, %v352
    %368 = vadd.xlane.f32.xlu0 %v367
    %v369 = vpop.xlane.xlu0 %368
    %v370 = vsel %vm366, %v369, %v352
    %v371 = vmul.f32 %v363, %v356
    %372 = vadd.xlane.f32.xlu0 %v371
    %v373 = vpop.xlane.xlu0 %372
    %v374 = vsel %vm366, %v373, %v356
    %v375 = vmul.f32 %v363, %v360
    %376 = vadd.xlane.f32.xlu0 %v375
    %v377 = vpop.xlane.xlu0 %376
    %v378 = vsel %vm366, %v377, %v360
    %s379 = scalar_lea.vmem [#allocation2], 19
    %v380 = vld [vmem:[%s379] ss:$0 sm:$0xff]
    %v381 = vxor.u32 %v380, 2147483648
    %v382 = vlaneseq
    %v383 = vand.u32 %v382, 127
    %vm384 = vcmp.eq.s32.totalorder %v383, 19
    %v385 = vmul.f32 %v381, %v370
    %386 = vadd.xlane.f32.xlu0 %v385
    %v387 = vpop.xlane.xlu0 %386
    %v388 = vsel %vm384, %v387, %v370
    %v389 = vmul.f32 %v381, %v374
    %390 = vadd.xlane.f32.xlu0 %v389
    %v391 = vpop.xlane.xlu0 %390
    %v392 = vsel %vm384, %v391, %v374
    %v393 = vmul.f32 %v381, %v378
    %394 = vadd.xlane.f32.xlu0 %v393
    %v395 = vpop.xlane.xlu0 %394
    %v396 = vsel %vm384, %v395, %v378
    %s397 = scalar_lea.vmem [#allocation2], 20
    %v398 = vld [vmem:[%s397] ss:$0 sm:$0xff]
    %v399 = vxor.u32 %v398, 2147483648
    %v400 = vlaneseq
    %v401 = vand.u32 %v400, 127
    %vm402 = vcmp.eq.s32.totalorder %v401, 20
    %v403 = vmul.f32 %v399, %v388
    %404 = vadd.xlane.f32.xlu0 %v403
    %v405 = vpop.xlane.xlu0 %404
    %v406 = vsel %vm402, %v405, %v388
    %v407 = vmul.f32 %v399, %v392
    %408 = vadd.xlane.f32.xlu0 %v407
    %v409 = vpop.xlane.xlu0 %408
    %v410 = vsel %vm402, %v409, %v392
    %v411 = vmul.f32 %v399, %v396
    %412 = vadd.xlane.f32.xlu0 %v411
    %v413 = vpop.xlane.xlu0 %412
    %v414 = vsel %vm402, %v413, %v396
    %s415 = scalar_lea.vmem [#allocation2], 21
    %v416 = vld [vmem:[%s415] ss:$0 sm:$0xff]
    %v417 = vxor.u32 %v416, 2147483648
    %v418 = vlaneseq
    %v419 = vand.u32 %v418, 127
    %vm420 = vcmp.eq.s32.totalorder %v419, 21
    %v421 = vmul.f32 %v417, %v406
    %422 = vadd.xlane.f32.xlu0 %v421
    %v423 = vpop.xlane.xlu0 %422
    %v424 = vsel %vm420, %v423, %v406
    %v425 = vmul.f32 %v417, %v410
    %426 = vadd.xlane.f32.xlu0 %v425
    %v427 = vpop.xlane.xlu0 %426
    %v428 = vsel %vm420, %v427, %v410
    %v429 = vmul.f32 %v417, %v414
    %430 = vadd.xlane.f32.xlu0 %v429
    %v431 = vpop.xlane.xlu0 %430
    %v432 = vsel %vm420, %v431, %v414
    %s433 = scalar_lea.vmem [#allocation2], 22
    %v434 = vld [vmem:[%s433] ss:$0 sm:$0xff]
    %v435 = vxor.u32 %v434, 2147483648
    %v436 = vlaneseq
    %v437 = vand.u32 %v436, 127
    %vm438 = vcmp.eq.s32.totalorder %v437, 22
    %v439 = vmul.f32 %v435, %v424
    %440 = vadd.xlane.f32.xlu0 %v439
    %v441 = vpop.xlane.xlu0 %440
    %v442 = vsel %vm438, %v441, %v424
    %v443 = vmul.f32 %v435, %v428
    %444 = vadd.xlane.f32.xlu0 %v443
    %v445 = vpop.xlane.xlu0 %444
    %v446 = vsel %vm438, %v445, %v428
    %v447 = vmul.f32 %v435, %v432
    %448 = vadd.xlane.f32.xlu0 %v447
    %v449 = vpop.xlane.xlu0 %448
    %v450 = vsel %vm438, %v449, %v432
    %s451 = scalar_lea.vmem [#allocation2], 23
    %v452 = vld [vmem:[%s451] ss:$0 sm:$0xff]
    %v453 = vxor.u32 %v452, 2147483648
    %v454 = vlaneseq
    %v455 = vand.u32 %v454, 127
    %vm456 = vcmp.eq.s32.totalorder %v455, 23
    %v457 = vmul.f32 %v453, %v442
    %458 = vadd.xlane.f32.xlu0 %v457
    %v459 = vpop.xlane.xlu0 %458
    %v460 = vsel %vm456, %v459, %v442
    %v461 = vmul.f32 %v453, %v446
    %462 = vadd.xlane.f32.xlu0 %v461
    %v463 = vpop.xlane.xlu0 %462
    %v464 = vsel %vm456, %v463, %v446
    %v465 = vmul.f32 %v453, %v450
    %466 = vadd.xlane.f32.xlu0 %v465
    %v467 = vpop.xlane.xlu0 %466
    %v468 = vsel %vm456, %v467, %v450
    %s469 = scalar_lea.vmem [#allocation2], 24
    %v470 = vld [vmem:[%s469] ss:$0 sm:$0xff]
    %v471 = vxor.u32 %v470, 2147483648
    %v472 = vlaneseq
    %v473 = vand.u32 %v472, 127
    %vm474 = vcmp.eq.s32.totalorder %v473, 24
    %v475 = vmul.f32 %v471, %v460
    %476 = vadd.xlane.f32.xlu0 %v475
    %v477 = vpop.xlane.xlu0 %476
    %v478 = vsel %vm474, %v477, %v460
    %v479 = vmul.f32 %v471, %v464
    %480 = vadd.xlane.f32.xlu0 %v479
    %v481 = vpop.xlane.xlu0 %480
    %v482 = vsel %vm474, %v481, %v464
    %v483 = vmul.f32 %v471, %v468
    %484 = vadd.xlane.f32.xlu0 %v483
    %v485 = vpop.xlane.xlu0 %484
    %v486 = vsel %vm474, %v485, %v468
    %v487 = vmul.f32 %v471, %v142
    %488 = vadd.xlane.f32.xlu0 %v487
    %v489 = vpop.xlane.xlu0 %488
    %v490 = vsel %vm474, %v489, %v142
    %s491 = scalar_lea.vmem [#allocation2], 25
    %v492 = vld [vmem:[%s491] ss:$0 sm:$0xff]
    %v493 = vxor.u32 %v492, 2147483648
    %v494 = vlaneseq
    %v495 = vand.u32 %v494, 127
    %vm496 = vcmp.eq.s32.totalorder %v495, 25
    %v497 = vmul.f32 %v493, %v478
    %498 = vadd.xlane.f32.xlu0 %v497
    %v499 = vpop.xlane.xlu0 %498
    %v500 = vsel %vm496, %v499, %v478
    %v501 = vmul.f32 %v493, %v482
    %502 = vadd.xlane.f32.xlu0 %v501
    %v503 = vpop.xlane.xlu0 %502
    %v504 = vsel %vm496, %v503, %v482
    %v505 = vmul.f32 %v493, %v486
    %506 = vadd.xlane.f32.xlu0 %v505
    %v507 = vpop.xlane.xlu0 %506
    %v508 = vsel %vm496, %v507, %v486
    %v509 = vmul.f32 %v493, %v490
    %510 = vadd.xlane.f32.xlu0 %v509
    %v511 = vpop.xlane.xlu0 %510
    %v512 = vsel %vm496, %v511, %v490
    %s513 = scalar_lea.vmem [#allocation2], 26
    %v514 = vld [vmem:[%s513] ss:$0 sm:$0xff]
    %v515 = vxor.u32 %v514, 2147483648
    %v516 = vlaneseq
    %v517 = vand.u32 %v516, 127
    %vm518 = vcmp.eq.s32.totalorder %v517, 26
    %v519 = vmul.f32 %v515, %v500
    %520 = vadd.xlane.f32.xlu0 %v519
    %v521 = vpop.xlane.xlu0 %520
    %v522 = vsel %vm518, %v521, %v500
    %v523 = vmul.f32 %v515, %v504
    %524 = vadd.xlane.f32.xlu0 %v523
    %v525 = vpop.xlane.xlu0 %524
    %v526 = vsel %vm518, %v525, %v504
    %v527 = vmul.f32 %v515, %v508
    %528 = vadd.xlane.f32.xlu0 %v527
    %v529 = vpop.xlane.xlu0 %528
    %v530 = vsel %vm518, %v529, %v508
    %v531 = vmul.f32 %v515, %v512
    %532 = vadd.xlane.f32.xlu0 %v531
    %v533 = vpop.xlane.xlu0 %532
    %v534 = vsel %vm518, %v533, %v512
    %s535 = scalar_lea.vmem [#allocation2], 27
    %v536 = vld [vmem:[%s535] ss:$0 sm:$0xff]
    %v537 = vxor.u32 %v536, 2147483648
    %v538 = vlaneseq
    %v539 = vand.u32 %v538, 127
    %vm540 = vcmp.eq.s32.totalorder %v539, 27
    %v541 = vmul.f32 %v537, %v522
    %542 = vadd.xlane.f32.xlu0 %v541
    %v543 = vpop.xlane.xlu0 %542
    %v544 = vsel %vm540, %v543, %v522
    %v545 = vmul.f32 %v537, %v526
    %546 = vadd.xlane.f32.xlu0 %v545
    %v547 = vpop.xlane.xlu0 %546
    %v548 = vsel %vm540, %v547, %v526
    %v549 = vmul.f32 %v537, %v530
    %550 = vadd.xlane.f32.xlu0 %v549
    %v551 = vpop.xlane.xlu0 %550
    %v552 = vsel %vm540, %v551, %v530
    %v553 = vmul.f32 %v537, %v534
    %554 = vadd.xlane.f32.xlu0 %v553
    %v555 = vpop.xlane.xlu0 %554
    %v556 = vsel %vm540, %v555, %v534
    %s557 = scalar_lea.vmem [#allocation2], 28
    %v558 = vld [vmem:[%s557] ss:$0 sm:$0xff]
    %v559 = vxor.u32 %v558, 2147483648
    %v560 = vlaneseq
    %v561 = vand.u32 %v560, 127
    %vm562 = vcmp.eq.s32.totalorder %v561, 28
    %v563 = vmul.f32 %v559, %v544
    %564 = vadd.xlane.f32.xlu0 %v563
    %v565 = vpop.xlane.xlu0 %564
    %v566 = vsel %vm562, %v565, %v544
    %v567 = vmul.f32 %v559, %v548
    %568 = vadd.xlane.f32.xlu0 %v567
    %v569 = vpop.xlane.xlu0 %568
    %v570 = vsel %vm562, %v569, %v548
    %v571 = vmul.f32 %v559, %v552
    %572 = vadd.xlane.f32.xlu0 %v571
    %v573 = vpop.xlane.xlu0 %572
    %v574 = vsel %vm562, %v573, %v552
    %v575 = vmul.f32 %v559, %v556
    %576 = vadd.xlane.f32.xlu0 %v575
    %v577 = vpop.xlane.xlu0 %576
    %v578 = vsel %vm562, %v577, %v556
    %s579 = scalar_lea.vmem [#allocation2], 29
    %v580 = vld [vmem:[%s579] ss:$0 sm:$0xff]
    %v581 = vxor.u32 %v580, 2147483648
    %v582 = vlaneseq
    %v583 = vand.u32 %v582, 127
    %vm584 = vcmp.eq.s32.totalorder %v583, 29
    %v585 = vmul.f32 %v581, %v566
    %586 = vadd.xlane.f32.xlu0 %v585
    %v587 = vpop.xlane.xlu0 %586
    %v588 = vsel %vm584, %v587, %v566
    %v589 = vmul.f32 %v581, %v570
    %590 = vadd.xlane.f32.xlu0 %v589
    %v591 = vpop.xlane.xlu0 %590
    %v592 = vsel %vm584, %v591, %v570
    %v593 = vmul.f32 %v581, %v574
    %594 = vadd.xlane.f32.xlu0 %v593
    %v595 = vpop.xlane.xlu0 %594
    %v596 = vsel %vm584, %v595, %v574
    %v597 = vmul.f32 %v581, %v578
    %598 = vadd.xlane.f32.xlu0 %v597
    %v599 = vpop.xlane.xlu0 %598
    %v600 = vsel %vm584, %v599, %v578
    %s601 = scalar_lea.vmem [#allocation2], 30
    %v602 = vld [vmem:[%s601] ss:$0 sm:$0xff]
    %v603 = vxor.u32 %v602, 2147483648
    %v604 = vlaneseq
    %v605 = vand.u32 %v604, 127
    %vm606 = vcmp.eq.s32.totalorder %v605, 30
    %v607 = vmul.f32 %v603, %v588
    %608 = vadd.xlane.f32.xlu0 %v607
    %v609 = vpop.xlane.xlu0 %608
    %v610 = vsel %vm606, %v609, %v588
    %v611 = vmul.f32 %v603, %v592
    %612 = vadd.xlane.f32.xlu0 %v611
    %v613 = vpop.xlane.xlu0 %612
    %v614 = vsel %vm606, %v613, %v592
    %v615 = vmul.f32 %v603, %v596
    %616 = vadd.xlane.f32.xlu0 %v615
    %v617 = vpop.xlane.xlu0 %616
    %v618 = vsel %vm606, %v617, %v596
    %v619 = vmul.f32 %v603, %v600
    %620 = vadd.xlane.f32.xlu0 %v619
    %v621 = vpop.xlane.xlu0 %620
    %v622 = vsel %vm606, %v621, %v600
    %s623 = scalar_lea.vmem [#allocation2], 31
    %v624 = vld [vmem:[%s623] ss:$0 sm:$0xff]
    %v625 = vxor.u32 %v624, 2147483648
    %v626 = vlaneseq
    %v627 = vand.u32 %v626, 127
    %vm628 = vcmp.eq.s32.totalorder %v627, 31
    %v629 = vmul.f32 %v625, %v610
    %630 = vadd.xlane.f32.xlu0 %v629
    %v631 = vpop.xlane.xlu0 %630
    %v632 = vsel %vm628, %v631, %v610
    %v633 = vmul.f32 %v625, %v614
    %634 = vadd.xlane.f32.xlu0 %v633
    %v635 = vpop.xlane.xlu0 %634
    %v636 = vsel %vm628, %v635, %v614
    %v637 = vmul.f32 %v625, %v618
    %638 = vadd.xlane.f32.xlu0 %v637
    %v639 = vpop.xlane.xlu0 %638
    %v640 = vsel %vm628, %v639, %v618
    %v641 = vmul.f32 %v625, %v622
    %642 = vadd.xlane.f32.xlu0 %v641
    %v643 = vpop.xlane.xlu0 %642
    %v644 = vsel %vm628, %v643, %v622
    %v645 = vrcp.pop %v56
    %v646 = vmul.f32 %v632, %v645
    %vm647 = vweird.f32 %v56
    %v648 = vsel %vm647, %v632, %v646
    %649 = vst [vmem:[#allocation1] sm:$0xff] %v648
    %v650 = vrcp.pop %v72
    %v651 = vmul.f32 %v636, %v650
    %vm652 = vweird.f32 %v72
    %v653 = vsel %vm652, %v636, %v651
    %s654 = scalar_lea.vmem [#allocation1], 8
    %655 = vst [vmem:[%s654] sm:$0xff] %v653
    %v656 = vrcp.pop %v88
    %v657 = vmul.f32 %v640, %v656
    %vm658 = vweird.f32 %v88
    %v659 = vsel %vm658, %v640, %v657
    %s660 = scalar_lea.vmem [#allocation1], 16
    %661 = vst [vmem:[%s660] sm:$0xff] %v659
    %v662 = vrcp.pop %v104
    %v663 = vmul.f32 %v644, %v662
    %vm664 = vweird.f32 %v104
    %v665 = vsel %vm664, %v644, %v663
    %s666 = scalar_lea.vmem [#allocation1], 24
    %667 = vst [vmem:[%s666] sm:$0xff] %v665
    // Predicated region
    $region36: #{custom-call.8} parent=1 // pred_check
      _
    $region37: #{custom-call.8} parent=1 // pred_check_branch
      %669 = sbr.rel (0) target = $region39
    $region38: #{custom-call.8} parent=1 // pred_region
      // Predicated region
      $region40: #{custom-call.8} parent=38 // pred_check
        _
      $region41: #{custom-call.8} parent=38 // pred_check_branch
        %671 = sbr.rel (0) target = $region43
      $region42: #{custom-call.8} parent=38 // pred_region
        // Predicated region
        $region55: #{custom-call.8} parent=42 // pred_check
          _
        $region56: #{custom-call.8} parent=42 // pred_check_branch
          %692 = sbr.rel (0) target = $region58
        $region57: #{custom-call.8} parent=42 // pred_region
          loop: start=0, step=1, limit=1
          $region59: #{custom-call.8} parent=57 // loop_pre_header
            _
          $region60: #{custom-call.8} parent=57 // loop_header
            %s694 = sphi 0, %s698
            %p695 = scmp.ge.s32.totalorder %s694, 1
            %s699 = sphi [#allocation1], [#allocation1]
            %s700 = sphi %s1, %s1
          $region61: #{custom-call.8} parent=57 // loop_header_branch
            %697 = sbr.rel (%p695) target = $region65
          $region62: #{custom-call.8} parent=57 // loop_body
            %v701 = vld [vmem:[%s699] sm:$0xff]
            %702 = vst [vmem:[%s700] sm:$0xff] %v701
            %v703 = vld [vmem:[%s699 + $0x8] sm:$0xff]
            %704 = vst [vmem:[%s700 + $0x8] sm:$0xff] %v703
            %v705 = vld [vmem:[%s699 + $0x10] sm:$0xff]
            %706 = vst [vmem:[%s700 + $0x10] sm:$0xff] %v705
            %v707 = vld [vmem:[%s699 + $0x18] sm:$0xff]
            %708 = vst [vmem:[%s700 + $0x18] sm:$0xff] %v707
          $region63: #{custom-call.8} parent=57 // loop_footer
            %s698 = sadd.s32 1, %s694
          $region64: #{custom-call.8} parent=57 // loop_footer_branch
            %693 = sbr.rel target = $region60
          $region65: #{custom-call.8} parent=57 // loop_exit
            _
        $region58: #{custom-call.8} parent=42 // pred_fallthru
          _
        // Predicated region
        $region66: #{custom-call.8} parent=42 // pred_check
          _
        $region67: #{custom-call.8} parent=42 // pred_check_branch
          %710 = sbr.rel target = $region69
        $region68: #{custom-call.8} parent=42 // pred_region
          _
        $region69: #{custom-call.8} parent=42 // pred_fallthru
          _
      $region43: #{custom-call.8} parent=38 // pred_fallthru
        _
      // Predicated region
      $region44: #{custom-call.8} parent=38 // pred_check
        _
      $region45: #{custom-call.8} parent=38 // pred_check_branch
        %673 = sbr.rel target = $region47
      $region46: #{custom-call.8} parent=38 // pred_region
        loop: start=0, step=1, limit=1
        $region48: #{custom-call.8} parent=46 // loop_pre_header
          _
        $region49: #{custom-call.8} parent=46 // loop_header
          %s676 = sphi 0, %s680
          %p677 = scmp.ge.s32.totalorder %s676, 1
          %s681 = sphi [#allocation1], [#allocation1]
          %s682 = sphi %s1, %s1
        $region50: #{custom-call.8} parent=46 // loop_header_branch
          %679 = sbr.rel (%p677) target = $region54
        $region51: #{custom-call.8} parent=46 // loop_body
          %v683 = vld [vmem:[%s681] sm:$0xff]
          %684 = vst [vmem:[%s682] sm:$0xff] %v683
          %v685 = vld [vmem:[%s681 + $0x8] sm:$0xff]
          %686 = vst [vmem:[%s682 + $0x8] sm:$0xff] %v685
          %v687 = vld [vmem:[%s681 + $0x10] sm:$0xff]
          %688 = vst [vmem:[%s682 + $0x10] sm:$0xff] %v687
          %v689 = vld [vmem:[%s681 + $0x18] sm:$0xff]
          %690 = vst [vmem:[%s682 + $0x18] sm:$0xff] %v689
        $region52: #{custom-call.8} parent=46 // loop_footer
          %s680 = sadd.s32 1, %s676
        $region53: #{custom-call.8} parent=46 // loop_footer_branch
          %675 = sbr.rel target = $region49
        $region54: #{custom-call.8} parent=46 // loop_exit
          _
      $region47: #{custom-call.8} parent=38 // pred_fallthru
        _
    $region39: #{custom-call.8} parent=1 // pred_fallthru
      _
    %711 = vnop

// kernel: custom-call.7
$region0: #{custom-call.7}
  %s0 = inlined_call_operand.vmem [shape: f32[1,32,32], index: 0, kind: input, shape index: {}]
  %s1 = inlined_call_operand.vmem [shape: f32[1,32,32], index: 1, kind: output, shape index: {}]
  $region1: #{custom-call.7} parent=0
    #allocation0 [shape = 'u8[16384]{0}', space=vmem, size = 0x4000, scoped, tag = 'operand span for operand 0']
    #allocation1 [shape = 'u8[16384]{0}', space=vmem, size = 0x4000, scoped, tag = 'operand span for operand 1']
    #allocation2 [shape = 'f32[32,32]{1,0}', space=vmem, size = 0x4000, scoped, tag = 'rescaled input a']
    // Predicated region
    $region2: #{custom-call.7} parent=1 // pred_check
      _
    $region3: #{custom-call.7} parent=1 // pred_check_branch
      %3 = sbr.rel (0) target = $region5
    $region4: #{custom-call.7} parent=1 // pred_region
      // Predicated region
      $region6: #{custom-call.7} parent=4 // pred_check
        _
      $region7: #{custom-call.7} parent=4 // pred_check_branch
        %5 = sbr.rel (0) target = $region9
      $region8: #{custom-call.7} parent=4 // pred_region
        // Predicated region
        $region21: #{custom-call.7} parent=8 // pred_check
          _
        $region22: #{custom-call.7} parent=8 // pred_check_branch
          %26 = sbr.rel (0) target = $region24
        $region23: #{custom-call.7} parent=8 // pred_region
          loop: start=0, step=1, limit=1
          $region25: #{custom-call.7} parent=23 // loop_pre_header
            _
          $region26: #{custom-call.7} parent=23 // loop_header
            %s28 = sphi 0, %s32
            %p29 = scmp.ge.s32.totalorder %s28, 1
            %s33 = sphi %s0, %s0
            %s34 = sphi [#allocation0], [#allocation0]
          $region27: #{custom-call.7} parent=23 // loop_header_branch
            %31 = sbr.rel (%p29) target = $region31
          $region28: #{custom-call.7} parent=23 // loop_body
            %v35 = vld [vmem:[%s33] sm:$0xff]
            %36 = vst [vmem:[%s34] sm:$0xff] %v35
            %v37 = vld [vmem:[%s33 + $0x8] sm:$0xff]
            %38 = vst [vmem:[%s34 + $0x8] sm:$0xff] %v37
            %v39 = vld [vmem:[%s33 + $0x10] sm:$0xff]
            %40 = vst [vmem:[%s34 + $0x10] sm:$0xff] %v39
            %v41 = vld [vmem:[%s33 + $0x18] sm:$0xff]
            %42 = vst [vmem:[%s34 + $0x18] sm:$0xff] %v41
          $region29: #{custom-call.7} parent=23 // loop_footer
            %s32 = sadd.s32 1, %s28
          $region30: #{custom-call.7} parent=23 // loop_footer_branch
            %27 = sbr.rel target = $region26
          $region31: #{custom-call.7} parent=23 // loop_exit
            _
        $region24: #{custom-call.7} parent=8 // pred_fallthru
          _
        // Predicated region
        $region32: #{custom-call.7} parent=8 // pred_check
          _
        $region33: #{custom-call.7} parent=8 // pred_check_branch
          %44 = sbr.rel target = $region35
        $region34: #{custom-call.7} parent=8 // pred_region
          _
        $region35: #{custom-call.7} parent=8 // pred_fallthru
          _
      $region9: #{custom-call.7} parent=4 // pred_fallthru
        _
      // Predicated region
      $region10: #{custom-call.7} parent=4 // pred_check
        _
      $region11: #{custom-call.7} parent=4 // pred_check_branch
        %7 = sbr.rel target = $region13
      $region12: #{custom-call.7} parent=4 // pred_region
        loop: start=0, step=1, limit=1
        $region14: #{custom-call.7} parent=12 // loop_pre_header
          _
        $region15: #{custom-call.7} parent=12 // loop_header
          %s10 = sphi 0, %s14
          %p11 = scmp.ge.s32.totalorder %s10, 1
          %s15 = sphi %s0, %s0
          %s16 = sphi [#allocation0], [#allocation0]
        $region16: #{custom-call.7} parent=12 // loop_header_branch
          %13 = sbr.rel (%p11) target = $region20
        $region17: #{custom-call.7} parent=12 // loop_body
          %v17 = vld [vmem:[%s15] sm:$0xff]
          %18 = vst [vmem:[%s16] sm:$0xff] %v17
          %v19 = vld [vmem:[%s15 + $0x8] sm:$0xff]
          %20 = vst [vmem:[%s16 + $0x8] sm:$0xff] %v19
          %v21 = vld [vmem:[%s15 + $0x10] sm:$0xff]
          %22 = vst [vmem:[%s16 + $0x10] sm:$0xff] %v21
          %v23 = vld [vmem:[%s15 + $0x18] sm:$0xff]
          %24 = vst [vmem:[%s16 + $0x18] sm:$0xff] %v23
        $region18: #{custom-call.7} parent=12 // loop_footer
          %s14 = sadd.s32 1, %s10
        $region19: #{custom-call.7} parent=12 // loop_footer_branch
          %9 = sbr.rel target = $region15
        $region20: #{custom-call.7} parent=12 // loop_exit
          _
      $region13: #{custom-call.7} parent=4 // pred_fallthru
        _
    $region5: #{custom-call.7} parent=1 // pred_fallthru
      _
    %45 = vnop
    %v46 = vlaneseq
    %v47 = vand.u32 %v46, 127
    %vm48 = vcmp.lt.s32.totalorder %v47, 32
    %v49 = vlaneseq
    %v50 = vshrl.u32 %v49, 7
    %vm52 = vcmp.eq.s32.totalorder %v50, %v47
    %v53 = vld [vmem:[#allocation0] sm:$0xff]
    %v54 = vsel %vm52, %v53, 0.0
    %55 = vadd.xlane.f32.xlu0 %v54
    %v56 = vpop.xlane.xlu0 %55
    %vm57 = vcmp.le.s32.totalorder %v50, %v47
    %vm58 = vmand %vm57, %vm48
    %v59 = vsel %vm58, %v53, 0.0
    %v60 = vrcp.pop %v56
    %v61 = vmul.f32 %v59, %v60
    %62 = vst [vmem:[#allocation2] sm:$0xff] %v61
    %s63 = scalar_lea.vmem [#allocation0], 8
    %s64 = scalar_lea.vmem [#allocation2], 8
    %v65 = vlaneseq
    %v66 = vshrl.u32 %v65, 7
    %v67 = vadd.s32 %v66, 8
    %vm68 = vcmp.eq.s32.totalorder %v67, %v47
    %v69 = vld [vmem:[%s63] sm:$0xff]
    %v70 = vsel %vm68, %v69, 0.0
    %71 = vadd.xlane.f32.xlu0 %v70
    %v72 = vpop.xlane.xlu0 %71
    %vm73 = vcmp.le.s32.totalorder %v67, %v47
    %vm74 = vmand %vm73, %vm48
    %v75 = vsel %vm74, %v69, 0.0
    %v76 = vrcp.pop %v72
    %v77 = vmul.f32 %v75, %v76
    %78 = vst [vmem:[%s64] sm:$0xff] %v77
    %s79 = scalar_lea.vmem [#allocation0], 16
    %s80 = scalar_lea.vmem [#allocation2], 16
    %v81 = vlaneseq
    %v82 = vshrl.u32 %v81, 7
    %v83 = vadd.s32 %v82, 16
    %vm84 = vcmp.eq.s32.totalorder %v83, %v47
    %v85 = vld [vmem:[%s79] sm:$0xff]
    %v86 = vsel %vm84, %v85, 0.0
    %87 = vadd.xlane.f32.xlu0 %v86
    %v88 = vpop.xlane.xlu0 %87
    %vm89 = vcmp.le.s32.totalorder %v83, %v47
    %vm90 = vmand %vm89, %vm48
    %v91 = vsel %vm90, %v85, 0.0
    %v92 = vrcp.pop %v88
    %v93 = vmul.f32 %v91, %v92
    %94 = vst [vmem:[%s80] sm:$0xff] %v93
    %s95 = scalar_lea.vmem [#allocation0], 24
    %s96 = scalar_lea.vmem [#allocation2], 24
    %v97 = vlaneseq
    %v98 = vshrl.u32 %v97, 7
    %v99 = vadd.s32 %v98, 24
    %vm100 = vcmp.eq.s32.totalorder %v99, %v47
    %v101 = vld [vmem:[%s95] sm:$0xff]
    %v102 = vsel %vm100, %v101, 0.0
    %103 = vadd.xlane.f32.xlu0 %v102
    %v104 = vpop.xlane.xlu0 %103
    %vm105 = vcmp.le.s32.totalorder %v99, %v47
    %vm106 = vmand %vm105, %vm48
    %v107 = vsel %vm106, %v101, 0.0
    %v108 = vrcp.pop %v104
    %v109 = vmul.f32 %v107, %v108
    %110 = vst [vmem:[%s96] sm:$0xff] %v109
    %v111 = vlaneseq
    %v112 = vand.u32 %v111, 127
    %v113 = vlaneseq
    %v114 = vshrl.u32 %v113, 7
    %vm116 = vcmp.eq.s32.totalorder %v112, %v114
    %v117 = vsel %vm116, -1.0, 0.0
    %v118 = vlaneseq
    %v119 = vand.u32 %v118, 127
    %v120 = vlaneseq
    %v121 = vshrl.u32 %v120, 7
    %v122 = vadd.s32 %v121, 8
    %vm123 = vcmp.eq.s32.totalorder %v119, %v122
    %v124 = vsel %vm123, -1.0, 0.0
    %v125 = vlaneseq
    %v126 = vand.u32 %v125, 127
    %v127 = vlaneseq
    %v128 = vshrl.u32 %v127, 7
    %v129 = vadd.s32 %v128, 16
    %vm130 = vcmp.eq.s32.totalorder %v126, %v129
    %v131 = vsel %vm130, -1.0, 0.0
    %v132 = vlaneseq
    %v133 = vand.u32 %v132, 127
    %v134 = vlaneseq
    %v135 = vshrl.u32 %v134, 7
    %v136 = vadd.s32 %v135, 24
    %vm137 = vcmp.eq.s32.totalorder %v133, %v136
    %v138 = vlaneseq
    %v139 = vand.u32 %v138, 127
    %vm140 = vcmp.eq.s32.totalorder %v139, 31
    %v141 = vsel %vm140, 1.0, -1.0
    %v142 = vsel %vm137, %v141, 0.0
    %s143 = scalar_lea.vmem [#allocation2], 30
    %v144 = vld [vmem:[%s143] ss:$0 sm:$0xff]
    %v145 = vxor.u32 %v144, 2147483648
    %v146 = vlaneseq
    %v147 = vand.u32 %v146, 127
    %vm148 = vcmp.eq.s32.totalorder %v147, 30
    %v149 = vmul.f32 %v145, %v142
    %150 = vadd.xlane.f32.xlu0 %v149
    %v151 = vpop.xlane.xlu0 %150
    %v152 = vsel %vm148, %v151, %v142
    %s153 = scalar_lea.vmem [#allocation2], 29
    %v154 = vld [vmem:[%s153] ss:$0 sm:$0xff]
    %v155 = vxor.u32 %v154, 2147483648
    %v156 = vlaneseq
    %v157 = vand.u32 %v156, 127
    %vm158 = vcmp.eq.s32.totalorder %v157, 29
    %v159 = vmul.f32 %v155, %v152
    %160 = vadd.xlane.f32.xlu0 %v159
    %v161 = vpop.xlane.xlu0 %160
    %v162 = vsel %vm158, %v161, %v152
    %s163 = scalar_lea.vmem [#allocation2], 28
    %v164 = vld [vmem:[%s163] ss:$0 sm:$0xff]
    %v165 = vxor.u32 %v164, 2147483648
    %v166 = vlaneseq
    %v167 = vand.u32 %v166, 127
    %vm168 = vcmp.eq.s32.totalorder %v167, 28
    %v169 = vmul.f32 %v165, %v162
    %170 = vadd.xlane.f32.xlu0 %v169
    %v171 = vpop.xlane.xlu0 %170
    %v172 = vsel %vm168, %v171, %v162
    %s173 = scalar_lea.vmem [#allocation2], 27
    %v174 = vld [vmem:[%s173] ss:$0 sm:$0xff]
    %v175 = vxor.u32 %v174, 2147483648
    %v176 = vlaneseq
    %v177 = vand.u32 %v176, 127
    %vm178 = vcmp.eq.s32.totalorder %v177, 27
    %v179 = vmul.f32 %v175, %v172
    %180 = vadd.xlane.f32.xlu0 %v179
    %v181 = vpop.xlane.xlu0 %180
    %v182 = vsel %vm178, %v181, %v172
    %s183 = scalar_lea.vmem [#allocation2], 26
    %v184 = vld [vmem:[%s183] ss:$0 sm:$0xff]
    %v185 = vxor.u32 %v184, 2147483648
    %v186 = vlaneseq
    %v187 = vand.u32 %v186, 127
    %vm188 = vcmp.eq.s32.totalorder %v187, 26
    %v189 = vmul.f32 %v185, %v182
    %190 = vadd.xlane.f32.xlu0 %v189
    %v191 = vpop.xlane.xlu0 %190
    %v192 = vsel %vm188, %v191, %v182
    %s193 = scalar_lea.vmem [#allocation2], 25
    %v194 = vld [vmem:[%s193] ss:$0 sm:$0xff]
    %v195 = vxor.u32 %v194, 2147483648
    %v196 = vlaneseq
    %v197 = vand.u32 %v196, 127
    %vm198 = vcmp.eq.s32.totalorder %v197, 25
    %v199 = vmul.f32 %v195, %v192
    %200 = vadd.xlane.f32.xlu0 %v199
    %v201 = vpop.xlane.xlu0 %200
    %v202 = vsel %vm198, %v201, %v192
    %s203 = scalar_lea.vmem [#allocation2], 24
    %v204 = vld [vmem:[%s203] ss:$0 sm:$0xff]
    %v205 = vxor.u32 %v204, 2147483648
    %v206 = vlaneseq
    %v207 = vand.u32 %v206, 127
    %vm208 = vcmp.eq.s32.totalorder %v207, 24
    %v209 = vmul.f32 %v205, %v202
    %210 = vadd.xlane.f32.xlu0 %v209
    %v211 = vpop.xlane.xlu0 %210
    %v212 = vsel %vm208, %v211, %v202
    %s213 = scalar_lea.vmem [#allocation2], 23
    %v214 = vld [vmem:[%s213] ss:$0 sm:$0xff]
    %v215 = vxor.u32 %v214, 2147483648
    %v216 = vlaneseq
    %v217 = vand.u32 %v216, 127
    %vm218 = vcmp.eq.s32.totalorder %v217, 23
    %v219 = vmul.f32 %v215, %v131
    %220 = vadd.xlane.f32.xlu0 %v219
    %v221 = vpop.xlane.xlu0 %220
    %v222 = vsel %vm218, %v221, %v131
    %v223 = vmul.f32 %v215, %v212
    %224 = vadd.xlane.f32.xlu0 %v223
    %v225 = vpop.xlane.xlu0 %224
    %v226 = vsel %vm218, %v225, %v212
    %s227 = scalar_lea.vmem [#allocation2], 22
    %v228 = vld [vmem:[%s227] ss:$0 sm:$0xff]
    %v229 = vxor.u32 %v228, 2147483648
    %v230 = vlaneseq
    %v231 = vand.u32 %v230, 127
    %vm232 = vcmp.eq.s32.totalorder %v231, 22
    %v233 = vmul.f32 %v229, %v222
    %234 = vadd.xlane.f32.xlu0 %v233
    %v235 = vpop.xlane.xlu0 %234
    %v236 = vsel %vm232, %v235, %v222
    %v237 = vmul.f32 %v229, %v226
    %238 = vadd.xlane.f32.xlu0 %v237
    %v239 = vpop.xlane.xlu0 %238
    %v240 = vsel %vm232, %v239, %v226
    %s241 = scalar_lea.vmem [#allocation2], 21
    %v242 = vld [vmem:[%s241] ss:$0 sm:$0xff]
    %v243 = vxor.u32 %v242, 2147483648
    %v244 = vlaneseq
    %v245 = vand.u32 %v244, 127
    %vm246 = vcmp.eq.s32.totalorder %v245, 21
    %v247 = vmul.f32 %v243, %v236
    %248 = vadd.xlane.f32.xlu0 %v247
    %v249 = vpop.xlane.xlu0 %248
    %v250 = vsel %vm246, %v249, %v236
    %v251 = vmul.f32 %v243, %v240
    %252 = vadd.xlane.f32.xlu0 %v251
    %v253 = vpop.xlane.xlu0 %252
    %v254 = vsel %vm246, %v253, %v240
    %s255 = scalar_lea.vmem [#allocation2], 20
    %v256 = vld [vmem:[%s255] ss:$0 sm:$0xff]
    %v257 = vxor.u32 %v256, 2147483648
    %v258 = vlaneseq
    %v259 = vand.u32 %v258, 127
    %vm260 = vcmp.eq.s32.totalorder %v259, 20
    %v261 = vmul.f32 %v257, %v250
    %262 = vadd.xlane.f32.xlu0 %v261
    %v263 = vpop.xlane.xlu0 %262
    %v264 = vsel %vm260, %v263, %v250
    %v265 = vmul.f32 %v257, %v254
    %266 = vadd.xlane.f32.xlu0 %v265
    %v267 = vpop.xlane.xlu0 %266
    %v268 = vsel %vm260, %v267, %v254
    %s269 = scalar_lea.vmem [#allocation2], 19
    %v270 = vld [vmem:[%s269] ss:$0 sm:$0xff]
    %v271 = vxor.u32 %v270, 2147483648
    %v272 = vlaneseq
    %v273 = vand.u32 %v272, 127
    %vm274 = vcmp.eq.s32.totalorder %v273, 19
    %v275 = vmul.f32 %v271, %v264
    %276 = vadd.xlane.f32.xlu0 %v275
    %v277 = vpop.xlane.xlu0 %276
    %v278 = vsel %vm274, %v277, %v264
    %v279 = vmul.f32 %v271, %v268
    %280 = vadd.xlane.f32.xlu0 %v279
    %v281 = vpop.xlane.xlu0 %280
    %v282 = vsel %vm274, %v281, %v268
    %s283 = scalar_lea.vmem [#allocation2], 18
    %v284 = vld [vmem:[%s283] ss:$0 sm:$0xff]
    %v285 = vxor.u32 %v284, 2147483648
    %v286 = vlaneseq
    %v287 = vand.u32 %v286, 127
    %vm288 = vcmp.eq.s32.totalorder %v287, 18
    %v289 = vmul.f32 %v285, %v278
    %290 = vadd.xlane.f32.xlu0 %v289
    %v291 = vpop.xlane.xlu0 %290
    %v292 = vsel %vm288, %v291, %v278
    %v293 = vmul.f32 %v285, %v282
    %294 = vadd.xlane.f32.xlu0 %v293
    %v295 = vpop.xlane.xlu0 %294
    %v296 = vsel %vm288, %v295, %v282
    %s297 = scalar_lea.vmem [#allocation2], 17
    %v298 = vld [vmem:[%s297] ss:$0 sm:$0xff]
    %v299 = vxor.u32 %v298, 2147483648
    %v300 = vlaneseq
    %v301 = vand.u32 %v300, 127
    %vm302 = vcmp.eq.s32.totalorder %v301, 17
    %v303 = vmul.f32 %v299, %v292
    %304 = vadd.xlane.f32.xlu0 %v303
    %v305 = vpop.xlane.xlu0 %304
    %v306 = vsel %vm302, %v305, %v292
    %v307 = vmul.f32 %v299, %v296
    %308 = vadd.xlane.f32.xlu0 %v307
    %v309 = vpop.xlane.xlu0 %308
    %v310 = vsel %vm302, %v309, %v296
    %s311 = scalar_lea.vmem [#allocation2], 16
    %v312 = vld [vmem:[%s311] ss:$0 sm:$0xff]
    %v313 = vxor.u32 %v312, 2147483648
    %v314 = vlaneseq
    %v315 = vand.u32 %v314, 127
    %vm316 = vcmp.eq.s32.totalorder %v315, 16
    %v317 = vmul.f32 %v313, %v306
    %318 = vadd.xlane.f32.xlu0 %v317
    %v319 = vpop.xlane.xlu0 %318
    %v320 = vsel %vm316, %v319, %v306
    %v321 = vmul.f32 %v313, %v310
    %322 = vadd.xlane.f32.xlu0 %v321
    %v323 = vpop.xlane.xlu0 %322
    %v324 = vsel %vm316, %v323, %v310
    %s325 = scalar_lea.vmem [#allocation2], 15
    %v326 = vld [vmem:[%s325] ss:$0 sm:$0xff]
    %v327 = vxor.u32 %v326, 2147483648
    %v328 = vlaneseq
    %v329 = vand.u32 %v328, 127
    %vm330 = vcmp.eq.s32.totalorder %v329, 15
    %v331 = vmul.f32 %v327, %v124
    %332 = vadd.xlane.f32.xlu0 %v331
    %v333 = vpop.xlane.xlu0 %332
    %v334 = vsel %vm330, %v333, %v124
    %v335 = vmul.f32 %v327, %v320
    %336 = vadd.xlane.f32.xlu0 %v335
    %v337 = vpop.xlane.xlu0 %336
    %v338 = vsel %vm330, %v337, %v320
    %v339 = vmul.f32 %v327, %v324
    %340 = vadd.xlane.f32.xlu0 %v339
    %v341 = vpop.xlane.xlu0 %340
    %v342 = vsel %vm330, %v341, %v324
    %s343 = scalar_lea.vmem [#allocation2], 14
    %v344 = vld [vmem:[%s343] ss:$0 sm:$0xff]
    %v345 = vxor.u32 %v344, 2147483648
    %v346 = vlaneseq
    %v347 = vand.u32 %v346, 127
    %vm348 = vcmp.eq.s32.totalorder %v347, 14
    %v349 = vmul.f32 %v345, %v334
    %350 = vadd.xlane.f32.xlu0 %v349
    %v351 = vpop.xlane.xlu0 %350
    %v352 = vsel %vm348, %v351, %v334
    %v353 = vmul.f32 %v345, %v338
    %354 = vadd.xlane.f32.xlu0 %v353
    %v355 = vpop.xlane.xlu0 %354
    %v356 = vsel %vm348, %v355, %v338
    %v357 = vmul.f32 %v345, %v342
    %358 = vadd.xlane.f32.xlu0 %v357
    %v359 = vpop.xlane.xlu0 %358
    %v360 = vsel %vm348, %v359, %v342
    %s361 = scalar_lea.vmem [#allocation2], 13
    %v362 = vld [vmem:[%s361] ss:$0 sm:$0xff]
    %v363 = vxor.u32 %v362, 2147483648
    %v364 = vlaneseq
    %v365 = vand.u32 %v364, 127
    %vm366 = vcmp.eq.s32.totalorder %v365, 13
    %v367 = vmul.f32 %v363, %v352
    %368 = vadd.xlane.f32.xlu0 %v367
    %v369 = vpop.xlane.xlu0 %368
    %v370 = vsel %vm366, %v369, %v352
    %v371 = vmul.f32 %v363, %v356
    %372 = vadd.xlane.f32.xlu0 %v371
    %v373 = vpop.xlane.xlu0 %372
    %v374 = vsel %vm366, %v373, %v356
    %v375 = vmul.f32 %v363, %v360
    %376 = vadd.xlane.f32.xlu0 %v375
    %v377 = vpop.xlane.xlu0 %376
    %v378 = vsel %vm366, %v377, %v360
    %s379 = scalar_lea.vmem [#allocation2], 12
    %v380 = vld [vmem:[%s379] ss:$0 sm:$0xff]
    %v381 = vxor.u32 %v380, 2147483648
    %v382 = vlaneseq
    %v383 = vand.u32 %v382, 127
    %vm384 = vcmp.eq.s32.totalorder %v383, 12
    %v385 = vmul.f32 %v381, %v370
    %386 = vadd.xlane.f32.xlu0 %v385
    %v387 = vpop.xlane.xlu0 %386
    %v388 = vsel %vm384, %v387, %v370
    %v389 = vmul.f32 %v381, %v374
    %390 = vadd.xlane.f32.xlu0 %v389
    %v391 = vpop.xlane.xlu0 %390
    %v392 = vsel %vm384, %v391, %v374
    %v393 = vmul.f32 %v381, %v378
    %394 = vadd.xlane.f32.xlu0 %v393
    %v395 = vpop.xlane.xlu0 %394
    %v396 = vsel %vm384, %v395, %v378
    %s397 = scalar_lea.vmem [#allocation2], 11
    %v398 = vld [vmem:[%s397] ss:$0 sm:$0xff]
    %v399 = vxor.u32 %v398, 2147483648
    %v400 = vlaneseq
    %v401 = vand.u32 %v400, 127
    %vm402 = vcmp.eq.s32.totalorder %v401, 11
    %v403 = vmul.f32 %v399, %v388
    %404 = vadd.xlane.f32.xlu0 %v403
    %v405 = vpop.xlane.xlu0 %404
    %v406 = vsel %vm402, %v405, %v388
    %v407 = vmul.f32 %v399, %v392
    %408 = vadd.xlane.f32.xlu0 %v407
    %v409 = vpop.xlane.xlu0 %408
    %v410 = vsel %vm402, %v409, %v392
    %v411 = vmul.f32 %v399, %v396
    %412 = vadd.xlane.f32.xlu0 %v411
    %v413 = vpop.xlane.xlu0 %412
    %v414 = vsel %vm402, %v413, %v396
    %s415 = scalar_lea.vmem [#allocation2], 10
    %v416 = vld [vmem:[%s415] ss:$0 sm:$0xff]
    %v417 = vxor.u32 %v416, 2147483648
    %v418 = vlaneseq
    %v419 = vand.u32 %v418, 127
    %vm420 = vcmp.eq.s32.totalorder %v419, 10
    %v421 = vmul.f32 %v417, %v406
    %422 = vadd.xlane.f32.xlu0 %v421
    %v423 = vpop.xlane.xlu0 %422
    %v424 = vsel %vm420, %v423, %v406
    %v425 = vmul.f32 %v417, %v410
    %426 = vadd.xlane.f32.xlu0 %v425
    %v427 = vpop.xlane.xlu0 %426
    %v428 = vsel %vm420, %v427, %v410
    %v429 = vmul.f32 %v417, %v414
    %430 = vadd.xlane.f32.xlu0 %v429
    %v431 = vpop.xlane.xlu0 %430
    %v432 = vsel %vm420, %v431, %v414
    %s433 = scalar_lea.vmem [#allocation2], 9
    %v434 = vld [vmem:[%s433] ss:$0 sm:$0xff]
    %v435 = vxor.u32 %v434, 2147483648
    %v436 = vlaneseq
    %v437 = vand.u32 %v436, 127
    %vm438 = vcmp.eq.s32.totalorder %v437, 9
    %v439 = vmul.f32 %v435, %v424
    %440 = vadd.xlane.f32.xlu0 %v439
    %v441 = vpop.xlane.xlu0 %440
    %v442 = vsel %vm438, %v441, %v424
    %v443 = vmul.f32 %v435, %v428
    %444 = vadd.xlane.f32.xlu0 %v443
    %v445 = vpop.xlane.xlu0 %444
    %v446 = vsel %vm438, %v445, %v428
    %v447 = vmul.f32 %v435, %v432
    %448 = vadd.xlane.f32.xlu0 %v447
    %v449 = vpop.xlane.xlu0 %448
    %v450 = vsel %vm438, %v449, %v432
    %s451 = scalar_lea.vmem [#allocation2], 8
    %v452 = vld [vmem:[%s451] ss:$0 sm:$0xff]
    %v453 = vxor.u32 %v452, 2147483648
    %v454 = vlaneseq
    %v455 = vand.u32 %v454, 127
    %vm456 = vcmp.eq.s32.totalorder %v455, 8
    %v457 = vmul.f32 %v453, %v442
    %458 = vadd.xlane.f32.xlu0 %v457
    %v459 = vpop.xlane.xlu0 %458
    %v460 = vsel %vm456, %v459, %v442
    %v461 = vmul.f32 %v453, %v446
    %462 = vadd.xlane.f32.xlu0 %v461
    %v463 = vpop.xlane.xlu0 %462
    %v464 = vsel %vm456, %v463, %v446
    %v465 = vmul.f32 %v453, %v450
    %466 = vadd.xlane.f32.xlu0 %v465
    %v467 = vpop.xlane.xlu0 %466
    %v468 = vsel %vm456, %v467, %v450
    %s469 = scalar_lea.vmem [#allocation2], 7
    %v470 = vld [vmem:[%s469] ss:$0 sm:$0xff]
    %v471 = vxor.u32 %v470, 2147483648
    %v472 = vlaneseq
    %v473 = vand.u32 %v472, 127
    %vm474 = vcmp.eq.s32.totalorder %v473, 7
    %v475 = vmul.f32 %v471, %v117
    %476 = vadd.xlane.f32.xlu0 %v475
    %v477 = vpop.xlane.xlu0 %476
    %v478 = vsel %vm474, %v477, %v117
    %v479 = vmul.f32 %v471, %v460
    %480 = vadd.xlane.f32.xlu0 %v479
    %v481 = vpop.xlane.xlu0 %480
    %v482 = vsel %vm474, %v481, %v460
    %v483 = vmul.f32 %v471, %v464
    %484 = vadd.xlane.f32.xlu0 %v483
    %v485 = vpop.xlane.xlu0 %484
    %v486 = vsel %vm474, %v485, %v464
    %v487 = vmul.f32 %v471, %v468
    %488 = vadd.xlane.f32.xlu0 %v487
    %v489 = vpop.xlane.xlu0 %488
    %v490 = vsel %vm474, %v489, %v468
    %s491 = scalar_lea.vmem [#allocation2], 6
    %v492 = vld [vmem:[%s491] ss:$0 sm:$0xff]
    %v493 = vxor.u32 %v492, 2147483648
    %v494 = vlaneseq
    %v495 = vand.u32 %v494, 127
    %vm496 = vcmp.eq.s32.totalorder %v495, 6
    %v497 = vmul.f32 %v493, %v478
    %498 = vadd.xlane.f32.xlu0 %v497
    %v499 = vpop.xlane.xlu0 %498
    %v500 = vsel %vm496, %v499, %v478
    %v501 = vmul.f32 %v493, %v482
    %502 = vadd.xlane.f32.xlu0 %v501
    %v503 = vpop.xlane.xlu0 %502
    %v504 = vsel %vm496, %v503, %v482
    %v505 = vmul.f32 %v493, %v486
    %506 = vadd.xlane.f32.xlu0 %v505
    %v507 = vpop.xlane.xlu0 %506
    %v508 = vsel %vm496, %v507, %v486
    %v509 = vmul.f32 %v493, %v490
    %510 = vadd.xlane.f32.xlu0 %v509
    %v511 = vpop.xlane.xlu0 %510
    %v512 = vsel %vm496, %v511, %v490
    %s513 = scalar_lea.vmem [#allocation2], 5
    %v514 = vld [vmem:[%s513] ss:$0 sm:$0xff]
    %v515 = vxor.u32 %v514, 2147483648
    %v516 = vlaneseq
    %v517 = vand.u32 %v516, 127
    %vm518 = vcmp.eq.s32.totalorder %v517, 5
    %v519 = vmul.f32 %v515, %v500
    %520 = vadd.xlane.f32.xlu0 %v519
    %v521 = vpop.xlane.xlu0 %520
    %v522 = vsel %vm518, %v521, %v500
    %v523 = vmul.f32 %v515, %v504
    %524 = vadd.xlane.f32.xlu0 %v523
    %v525 = vpop.xlane.xlu0 %524
    %v526 = vsel %vm518, %v525, %v504
    %v527 = vmul.f32 %v515, %v508
    %528 = vadd.xlane.f32.xlu0 %v527
    %v529 = vpop.xlane.xlu0 %528
    %v530 = vsel %vm518, %v529, %v508
    %v531 = vmul.f32 %v515, %v512
    %532 = vadd.xlane.f32.xlu0 %v531
    %v533 = vpop.xlane.xlu0 %532
    %v534 = vsel %vm518, %v533, %v512
    %s535 = scalar_lea.vmem [#allocation2], 4
    %v536 = vld [vmem:[%s535] ss:$0 sm:$0xff]
    %v537 = vxor.u32 %v536, 2147483648
    %v538 = vlaneseq
    %v539 = vand.u32 %v538, 127
    %vm540 = vcmp.eq.s32.totalorder %v539, 4
    %v541 = vmul.f32 %v537, %v522
    %542 = vadd.xlane.f32.xlu0 %v541
    %v543 = vpop.xlane.xlu0 %542
    %v544 = vsel %vm540, %v543, %v522
    %v545 = vmul.f32 %v537, %v526
    %546 = vadd.xlane.f32.xlu0 %v545
    %v547 = vpop.xlane.xlu0 %546
    %v548 = vsel %vm540, %v547, %v526
    %v549 = vmul.f32 %v537, %v530
    %550 = vadd.xlane.f32.xlu0 %v549
    %v551 = vpop.xlane.xlu0 %550
    %v552 = vsel %vm540, %v551, %v530
    %v553 = vmul.f32 %v537, %v534
    %554 = vadd.xlane.f32.xlu0 %v553
    %v555 = vpop.xlane.xlu0 %554
    %v556 = vsel %vm540, %v555, %v534
    %s557 = scalar_lea.vmem [#allocation2], 3
    %v558 = vld [vmem:[%s557] ss:$0 sm:$0xff]
    %v559 = vxor.u32 %v558, 2147483648
    %v560 = vlaneseq
    %v561 = vand.u32 %v560, 127
    %vm562 = vcmp.eq.s32.totalorder %v561, 3
    %v563 = vmul.f32 %v559, %v544
    %564 = vadd.xlane.f32.xlu0 %v563
    %v565 = vpop.xlane.xlu0 %564
    %v566 = vsel %vm562, %v565, %v544
    %v567 = vmul.f32 %v559, %v548
    %568 = vadd.xlane.f32.xlu0 %v567
    %v569 = vpop.xlane.xlu0 %568
    %v570 = vsel %vm562, %v569, %v548
    %v571 = vmul.f32 %v559, %v552
    %572 = vadd.xlane.f32.xlu0 %v571
    %v573 = vpop.xlane.xlu0 %572
    %v574 = vsel %vm562, %v573, %v552
    %v575 = vmul.f32 %v559, %v556
    %576 = vadd.xlane.f32.xlu0 %v575
    %v577 = vpop.xlane.xlu0 %576
    %v578 = vsel %vm562, %v577, %v556
    %s579 = scalar_lea.vmem [#allocation2], 2
    %v580 = vld [vmem:[%s579] ss:$0 sm:$0xff]
    %v581 = vxor.u32 %v580, 2147483648
    %v582 = vlaneseq
    %v583 = vand.u32 %v582, 127
    %vm584 = vcmp.eq.s32.totalorder %v583, 2
    %v585 = vmul.f32 %v581, %v566
    %586 = vadd.xlane.f32.xlu0 %v585
    %v587 = vpop.xlane.xlu0 %586
    %v588 = vsel %vm584, %v587, %v566
    %v589 = vmul.f32 %v581, %v570
    %590 = vadd.xlane.f32.xlu0 %v589
    %v591 = vpop.xlane.xlu0 %590
    %v592 = vsel %vm584, %v591, %v570
    %v593 = vmul.f32 %v581, %v574
    %594 = vadd.xlane.f32.xlu0 %v593
    %v595 = vpop.xlane.xlu0 %594
    %v596 = vsel %vm584, %v595, %v574
    %v597 = vmul.f32 %v581, %v578
    %598 = vadd.xlane.f32.xlu0 %v597
    %v599 = vpop.xlane.xlu0 %598
    %v600 = vsel %vm584, %v599, %v578
    %s601 = scalar_lea.vmem [#allocation2], 1
    %v602 = vld [vmem:[%s601] ss:$0 sm:$0xff]
    %v603 = vxor.u32 %v602, 2147483648
    %v604 = vlaneseq
    %v605 = vand.u32 %v604, 127
    %vm606 = vcmp.eq.s32.totalorder %v605, 1
    %v607 = vmul.f32 %v603, %v588
    %608 = vadd.xlane.f32.xlu0 %v607
    %v609 = vpop.xlane.xlu0 %608
    %v610 = vsel %vm606, %v609, %v588
    %v611 = vmul.f32 %v603, %v592
    %612 = vadd.xlane.f32.xlu0 %v611
    %v613 = vpop.xlane.xlu0 %612
    %v614 = vsel %vm606, %v613, %v592
    %v615 = vmul.f32 %v603, %v596
    %616 = vadd.xlane.f32.xlu0 %v615
    %v617 = vpop.xlane.xlu0 %616
    %v618 = vsel %vm606, %v617, %v596
    %v619 = vmul.f32 %v603, %v600
    %620 = vadd.xlane.f32.xlu0 %v619
    %v621 = vpop.xlane.xlu0 %620
    %v622 = vsel %vm606, %v621, %v600
    %v623 = vld [vmem:[#allocation2] ss:$0 sm:$0xff]
    %v624 = vxor.u32 %v623, 2147483648
    %v625 = vlaneseq
    %v626 = vand.u32 %v625, 127
    %vm627 = vcmp.eq.s32.totalorder %v626, 0
    %v628 = vmul.f32 %v624, %v610
    %629 = vadd.xlane.f32.xlu0 %v628
    %v630 = vpop.xlane.xlu0 %629
    %v631 = vsel %vm627, %v630, %v610
    %v632 = vmul.f32 %v624, %v614
    %633 = vadd.xlane.f32.xlu0 %v632
    %v634 = vpop.xlane.xlu0 %633
    %v635 = vsel %vm627, %v634, %v614
    %v636 = vmul.f32 %v624, %v618
    %637 = vadd.xlane.f32.xlu0 %v636
    %v638 = vpop.xlane.xlu0 %637
    %v639 = vsel %vm627, %v638, %v618
    %v640 = vmul.f32 %v624, %v622
    %641 = vadd.xlane.f32.xlu0 %v640
    %v642 = vpop.xlane.xlu0 %641
    %v643 = vsel %vm627, %v642, %v622
    %v644 = vrcp.pop %v56
    %v645 = vmul.f32 %v631, %v644
    %vm646 = vweird.f32 %v56
    %v647 = vsel %vm646, %v631, %v645
    %648 = vst [vmem:[#allocation1] sm:$0xff] %v647
    %v649 = vrcp.pop %v72
    %v650 = vmul.f32 %v635, %v649
    %vm651 = vweird.f32 %v72
    %v652 = vsel %vm651, %v635, %v650
    %s653 = scalar_lea.vmem [#allocation1], 8
    %654 = vst [vmem:[%s653] sm:$0xff] %v652
    %v655 = vrcp.pop %v88
    %v656 = vmul.f32 %v639, %v655
    %vm657 = vweird.f32 %v88
    %v658 = vsel %vm657, %v639, %v656
    %s659 = scalar_lea.vmem [#allocation1], 16
    %660 = vst [vmem:[%s659] sm:$0xff] %v658
    %v661 = vrcp.pop %v104
    %v662 = vmul.f32 %v643, %v661
    %vm663 = vweird.f32 %v104
    %v664 = vsel %vm663, %v643, %v662
    %s665 = scalar_lea.vmem [#allocation1], 24
    %666 = vst [vmem:[%s665] sm:$0xff] %v664
    // Predicated region
    $region36: #{custom-call.7} parent=1 // pred_check
      _
    $region37: #{custom-call.7} parent=1 // pred_check_branch
      %668 = sbr.rel (0) target = $region39
    $region38: #{custom-call.7} parent=1 // pred_region
      // Predicated region
      $region40: #{custom-call.7} parent=38 // pred_check
        _
      $region41: #{custom-call.7} parent=38 // pred_check_branch
        %670 = sbr.rel (0) target = $region43
      $region42: #{custom-call.7} parent=38 // pred_region
        // Predicated region
        $region55: #{custom-call.7} parent=42 // pred_check
          _
        $region56: #{custom-call.7} parent=42 // pred_check_branch
          %691 = sbr.rel (0) target = $region58
        $region57: #{custom-call.7} parent=42 // pred_region
          loop: start=0, step=1, limit=1
          $region59: #{custom-call.7} parent=57 // loop_pre_header
            _
          $region60: #{custom-call.7} parent=57 // loop_header
            %s693 = sphi 0, %s697
            %p694 = scmp.ge.s32.totalorder %s693, 1
            %s698 = sphi [#allocation1], [#allocation1]
            %s699 = sphi %s1, %s1
          $region61: #{custom-call.7} parent=57 // loop_header_branch
            %696 = sbr.rel (%p694) target = $region65
          $region62: #{custom-call.7} parent=57 // loop_body
            %v700 = vld [vmem:[%s698] sm:$0xff]
            %701 = vst [vmem:[%s699] sm:$0xff] %v700
            %v702 = vld [vmem:[%s698 + $0x8] sm:$0xff]
            %703 = vst [vmem:[%s699 + $0x8] sm:$0xff] %v702
            %v704 = vld [vmem:[%s698 + $0x10] sm:$0xff]
            %705 = vst [vmem:[%s699 + $0x10] sm:$0xff] %v704
            %v706 = vld [vmem:[%s698 + $0x18] sm:$0xff]
            %707 = vst [vmem:[%s699 + $0x18] sm:$0xff] %v706
          $region63: #{custom-call.7} parent=57 // loop_footer
            %s697 = sadd.s32 1, %s693
          $region64: #{custom-call.7} parent=57 // loop_footer_branch
            %692 = sbr.rel target = $region60
          $region65: #{custom-call.7} parent=57 // loop_exit
            _
        $region58: #{custom-call.7} parent=42 // pred_fallthru
          _
        // Predicated region
        $region66: #{custom-call.7} parent=42 // pred_check
          _
        $region67: #{custom-call.7} parent=42 // pred_check_branch
          %709 = sbr.rel target = $region69
        $region68: #{custom-call.7} parent=42 // pred_region
          _
        $region69: #{custom-call.7} parent=42 // pred_fallthru
          _
      $region43: #{custom-call.7} parent=38 // pred_fallthru
        _
      // Predicated region
      $region44: #{custom-call.7} parent=38 // pred_check
        _
      $region45: #{custom-call.7} parent=38 // pred_check_branch
        %672 = sbr.rel target = $region47
      $region46: #{custom-call.7} parent=38 // pred_region
        loop: start=0, step=1, limit=1
        $region48: #{custom-call.7} parent=46 // loop_pre_header
          _
        $region49: #{custom-call.7} parent=46 // loop_header
          %s675 = sphi 0, %s679
          %p676 = scmp.ge.s32.totalorder %s675, 1
          %s680 = sphi [#allocation1], [#allocation1]
          %s681 = sphi %s1, %s1
        $region50: #{custom-call.7} parent=46 // loop_header_branch
          %678 = sbr.rel (%p676) target = $region54
        $region51: #{custom-call.7} parent=46 // loop_body
          %v682 = vld [vmem:[%s680] sm:$0xff]
          %683 = vst [vmem:[%s681] sm:$0xff] %v682
          %v684 = vld [vmem:[%s680 + $0x8] sm:$0xff]
          %685 = vst [vmem:[%s681 + $0x8] sm:$0xff] %v684
          %v686 = vld [vmem:[%s680 + $0x10] sm:$0xff]
          %687 = vst [vmem:[%s681 + $0x10] sm:$0xff] %v686
          %v688 = vld [vmem:[%s680 + $0x18] sm:$0xff]
          %689 = vst [vmem:[%s681 + $0x18] sm:$0xff] %v688
        $region52: #{custom-call.7} parent=46 // loop_footer
          %s679 = sadd.s32 1, %s675
        $region53: #{custom-call.7} parent=46 // loop_footer_branch
          %674 = sbr.rel target = $region49
        $region54: #{custom-call.7} parent=46 // loop_exit
          _
      $region47: #{custom-call.7} parent=38 // pred_fallthru
        _
    $region39: #{custom-call.7} parent=1 // pred_fallthru
      _
    %710 = vnop

// kernel: gclstm_forward.1
$region0: #{gclstm_forward.1}
  #allocation0 [shape = 'u32[]', space=smem, size = 0x4, offset = 0x4, fixed_abs, tag = 'smem constant byte address 0x4 - core index']
  #allocation1 [shape = 'u32[144,128]{1,0:T(1,128)}', space=vmem, size = 0x12000, scoped, tag = 'internal scratch']
  #allocation2 [shape = 'f32[128,32]{1,0:T(8,128)}', space=vmem, size = 0x10000, scoped, tag = 'scratch operand']
  #allocation3 [shape = 'f32[128,128]{1,0:T(8,128)}', space=vmem, size = 0x10000, scoped, tag = 'scratch operand']
  #allocation4 [shape = 'f32[1,1]{1,0:T(1,128)S(1)}', space=vmem, size = 0x200, scoped, tag = 'scoped memory for gclstm_forward.1']
  %s0 = inlined_call_operand.vmem [shape: f32[128,8], index: 0, kind: input, shape index: {}]
  %s1 = inlined_call_operand.vmem [shape: f32[8,128], index: 1, kind: input, shape index: {}]
  %s2 = inlined_call_operand.vmem [shape: f32[32,128], index: 2, kind: input, shape index: {}]
  %s3 = inlined_call_operand.vmem [shape: f32[1,128], index: 3, kind: input, shape index: {}]
  %s4 = inlined_call_operand.vmem [shape: f32[32,128], index: 4, kind: input, shape index: {}]
  %s5 = inlined_call_operand.vmem [shape: f32[32,128], index: 5, kind: input, shape index: {}]
  %s6 = inlined_call_operand.vmem [shape: f32[1,128], index: 6, kind: input, shape index: {}]
  %s7 = inlined_call_operand.vmem [shape: f32[1,32], index: 7, kind: input, shape index: {}]
  %s8 = inlined_call_operand.vmem [shape: f32[1,32], index: 8, kind: input, shape index: {}]
  %s9 = inlined_call_operand.vmem [shape: f32[32,16], index: 9, kind: input, shape index: {}]
  %s10 = inlined_call_operand.vmem [shape: f32[1,16], index: 10, kind: input, shape index: {}]
  %s11 = inlined_call_operand.vmem [shape: f32[1,16], index: 11, kind: input, shape index: {}]
  %s12 = inlined_call_operand.vmem [shape: f32[1,16], index: 12, kind: input, shape index: {}]
  %s13 = inlined_call_operand.vmem [shape: f32[16,1], index: 13, kind: input, shape index: {}]
  %s14 = inlined_call_operand.<no memory space> [shape: f32[1,1], index: 14, kind: input, shape index: {}]
  %s15 = inlined_call_operand.vmem [shape: f32[16,32], index: 15, kind: output, shape index: {0}]
  %s16 = inlined_call_operand.vmem [shape: f32[2,16,32], index: 16, kind: output, shape index: {1}]
  %s17 = inlined_call_operand.vmem [shape: f32[2,16,32], index: 17, kind: output, shape index: {2}]
  %s18 = inlined_call_operand.vmem [shape: f32[8,1], index: 18, kind: output, shape index: {3}]
  %19 = xla_tuple %s15, %s16, %s17, %s18
  %s20 = sld [smem:[#allocation0]]
  $region94: #{gclstm_forward.1} parent=0
    _
  %s22 = ssub.s32 1, %s20
  %s23 = scalar_select 0, %s22, %s20
  %v24 = vstv %s14
  %25 = vst [vmem:[#allocation4] sm:$0x1] %v24
  // Predicated region
  $region2: #{gclstm_forward.1} parent=0 // pred_check
    _
  $region3: #{gclstm_forward.1} parent=0 // pred_check_branch
    %27 = sbr.rel (0) target = $region5
  $region4: #{gclstm_forward.1} parent=0 // pred_region
    _
  $region5: #{gclstm_forward.1} parent=0 // pred_fallthru
    _
  // Predicated region
  $region6: #{gclstm_forward.1} parent=0 // pred_check
    _
  $region7: #{gclstm_forward.1} parent=0 // pred_check_branch
    %29 = sbr.rel (0) target = $region9
  $region8: #{gclstm_forward.1} parent=0 // pred_region
    _
  $region9: #{gclstm_forward.1} parent=0 // pred_fallthru
    _
  // Predicated region
  $region10: #{gclstm_forward.1} parent=0 // pred_check
    _
  $region11: #{gclstm_forward.1} parent=0 // pred_check_branch
    %31 = sbr.rel (0) target = $region13
  $region12: #{gclstm_forward.1} parent=0 // pred_region
    _
  $region13: #{gclstm_forward.1} parent=0 // pred_fallthru
    _
  // Predicated region
  $region14: #{gclstm_forward.1} parent=0 // pred_check
    _
  $region15: #{gclstm_forward.1} parent=0 // pred_check_branch
    %33 = sbr.rel (0) target = $region17
  $region16: #{gclstm_forward.1} parent=0 // pred_region
    _
  $region17: #{gclstm_forward.1} parent=0 // pred_fallthru
    _
  // Predicated region
  $region18: #{gclstm_forward.1} parent=0 // pred_check
    _
  $region19: #{gclstm_forward.1} parent=0 // pred_check_branch
    %35 = sbr.rel (0) target = $region21
  $region20: #{gclstm_forward.1} parent=0 // pred_region
    _
  $region21: #{gclstm_forward.1} parent=0 // pred_fallthru
    _
  // Predicated region
  $region22: #{gclstm_forward.1} parent=0 // pred_check
    _
  $region23: #{gclstm_forward.1} parent=0 // pred_check_branch
    %37 = sbr.rel (0) target = $region25
  $region24: #{gclstm_forward.1} parent=0 // pred_region
    _
  $region25: #{gclstm_forward.1} parent=0 // pred_fallthru
    _
  // Predicated region
  $region26: #{gclstm_forward.1} parent=0 // pred_check
    _
  $region27: #{gclstm_forward.1} parent=0 // pred_check_branch
    %39 = sbr.rel (0) target = $region29
  $region28: #{gclstm_forward.1} parent=0 // pred_region
    _
  $region29: #{gclstm_forward.1} parent=0 // pred_fallthru
    _
  // Predicated region
  $region30: #{gclstm_forward.1} parent=0 // pred_check
    _
  $region31: #{gclstm_forward.1} parent=0 // pred_check_branch
    %41 = sbr.rel (0) target = $region33
  $region32: #{gclstm_forward.1} parent=0 // pred_region
    _
  $region33: #{gclstm_forward.1} parent=0 // pred_fallthru
    _
  // Predicated region
  $region34: #{gclstm_forward.1} parent=0 // pred_check
    _
  $region35: #{gclstm_forward.1} parent=0 // pred_check_branch
    %43 = sbr.rel (0) target = $region37
  $region36: #{gclstm_forward.1} parent=0 // pred_region
    _
  $region37: #{gclstm_forward.1} parent=0 // pred_fallthru
    _
  // Predicated region
  $region38: #{gclstm_forward.1} parent=0 // pred_check
    _
  $region39: #{gclstm_forward.1} parent=0 // pred_check_branch
    %45 = sbr.rel (0) target = $region41
  $region40: #{gclstm_forward.1} parent=0 // pred_region
    _
  $region41: #{gclstm_forward.1} parent=0 // pred_fallthru
    _
  // Predicated region
  $region42: #{gclstm_forward.1} parent=0 // pred_check
    _
  $region43: #{gclstm_forward.1} parent=0 // pred_check_branch
    %47 = sbr.rel (0) target = $region45
  $region44: #{gclstm_forward.1} parent=0 // pred_region
    _
  $region45: #{gclstm_forward.1} parent=0 // pred_fallthru
    _
  // Predicated region
  $region46: #{gclstm_forward.1} parent=0 // pred_check
    _
  $region47: #{gclstm_forward.1} parent=0 // pred_check_branch
    %49 = sbr.rel (0) target = $region49
  $region48: #{gclstm_forward.1} parent=0 // pred_region
    _
  $region49: #{gclstm_forward.1} parent=0 // pred_fallthru
    _
  // Predicated region
  $region50: #{gclstm_forward.1} parent=0 // pred_check
    _
  $region51: #{gclstm_forward.1} parent=0 // pred_check_branch
    %51 = sbr.rel (0) target = $region53
  $region52: #{gclstm_forward.1} parent=0 // pred_region
    _
  $region53: #{gclstm_forward.1} parent=0 // pred_fallthru
    _
  // Predicated region
  $region54: #{gclstm_forward.1} parent=0 // pred_check
    _
  $region55: #{gclstm_forward.1} parent=0 // pred_check_branch
    %53 = sbr.rel (0) target = $region57
  $region56: #{gclstm_forward.1} parent=0 // pred_region
    _
  $region57: #{gclstm_forward.1} parent=0 // pred_fallthru
    _
  // Predicated region
  $region58: #{gclstm_forward.1} parent=0 // pred_check
    _
  $region59: #{gclstm_forward.1} parent=0 // pred_check_branch
    %55 = sbr.rel (0) target = $region61
  $region60: #{gclstm_forward.1} parent=0 // pred_region
    _
  $region61: #{gclstm_forward.1} parent=0 // pred_fallthru
    _
  %v56 = vld [vmem:[%s0] sm:$0xff]
  %v57 = vld [vmem:[%s0 + $0x8] sm:$0xff]
  %v58 = vld [vmem:[%s0 + $0x10] sm:$0xff]
  %v59 = vld [vmem:[%s0 + $0x18] sm:$0xff]
  %v60 = vld [vmem:[%s0 + $0x20] sm:$0xff]
  %v61 = vld [vmem:[%s0 + $0x28] sm:$0xff]
  %v62 = vld [vmem:[%s0 + $0x30] sm:$0xff]
  %v63 = vld [vmem:[%s0 + $0x38] sm:$0xff]
  %v64 = vld [vmem:[%s0 + $0x40] sm:$0xff]
  %v65 = vld [vmem:[%s0 + $0x48] sm:$0xff]
  %v66 = vld [vmem:[%s0 + $0x50] sm:$0xff]
  %v67 = vld [vmem:[%s0 + $0x58] sm:$0xff]
  %v68 = vld [vmem:[%s0 + $0x60] sm:$0xff]
  %v69 = vld [vmem:[%s0 + $0x68] sm:$0xff]
  %v70 = vld [vmem:[%s0 + $0x70] sm:$0xff]
  %v71 = vld [vmem:[%s0 + $0x78] sm:$0xff]
  %v72 = vld [vmem:[%s1] sm:$0xff]
  %v73 = vld [vmem:[%s3] sm:$0x1]
  %v75 = vlaneseq
  %v76 = vshrl.u32 %v75, 7
  %v77 = vsub.s32 0, %v76
  %v78 = vrot.slane %v73, %v77
  %vm80 = vcmask 64512
  %v82 = vsel %vm80, %v56, 0
  %v85 = vsel %vm80, %v57, 0
  %v88 = vsel %vm80, %v58, 0
  %v91 = vsel %vm80, %v59, 0
  %v94 = vsel %vm80, %v60, 0
  %v97 = vsel %vm80, %v61, 0
  %v100 = vsel %vm80, %v62, 0
  %v103 = vsel %vm80, %v63, 0
  %v106 = vsel %vm80, %v64, 0
  %v109 = vsel %vm80, %v65, 0
  %v112 = vsel %vm80, %v66, 0
  %v115 = vsel %vm80, %v67, 0
  %v118 = vsel %vm80, %v68, 0
  %v121 = vsel %vm80, %v69, 0
  %v124 = vsel %vm80, %v70, 0
  %v127 = vsel %vm80, %v71, 0
  %129 = vmatprep.subr.mxu0 0.0
  %130 = vmatpush1.msra.mxu0 %v72
  %131 = vmatprep.subr.mxu0 0.0
  %132 = vmatpush1.msra.mxu0 0.0
  %133 = vmatprep.subr.mxu0 0.0
  %134 = vmatpush1.msra.mxu0 0.0
  %135 = vmatprep.subr.mxu0 0.0
  %136 = vmatpush1.msra.mxu0 0.0
  %137 = vmatprep.subr.mxu0 0.0
  %138 = vmatpush1.msra.mxu0 0.0
  %139 = vmatprep.subr.mxu0 0.0
  %140 = vmatpush1.msra.mxu0 0.0
  %141 = vmatprep.subr.mxu0 0.0
  %142 = vmatpush1.msra.mxu0 0.0
  %143 = vmatprep.subr.mxu0 0.0
  %144 = vmatpush1.msra.mxu0 0.0
  %145 = vmatprep.subr.mxu0 0.0
  %146 = vmatpush1.msra.mxu0 0.0
  %147 = vmatprep.subr.mxu0 0.0
  %148 = vmatpush1.msra.mxu0 0.0
  %149 = vmatprep.subr.mxu0 0.0
  %150 = vmatpush1.msra.mxu0 0.0
  %151 = vmatprep.subr.mxu0 0.0
  %152 = vmatpush1.msra.mxu0 0.0
  %153 = vmatprep.subr.mxu0 0.0
  %154 = vmatpush1.msra.mxu0 0.0
  %155 = vmatprep.subr.mxu0 0.0
  %156 = vmatpush1.msra.mxu0 0.0
  %157 = vmatprep.subr.mxu0 0.0
  %158 = vmatpush1.msra.mxu0 0.0
  %159 = vmatprep.subr.mxu0 0.0
  %160 = vmatpush1.msra.mxu0 0.0
  %161 = vmatprep.subr.mxu0 0.0
  %162 = vmatpush1.msra.mxu0 0.0
  %163 = vmatprep.subr.mxu0 0.0
  %164 = vmatpush1.msra.mxu0 0.0
  %165 = vmatprep.subr.mxu0 0.0
  %166 = vmatpush1.msra.mxu0 0.0
  %167 = vmatprep.subr.mxu0 0.0
  %168 = vmatpush1.msra.mxu0 0.0
  %169 = vmatprep.subr.mxu0 0.0
  %170 = vmatpush1.msra.mxu0 0.0
  %171 = vmatprep.subr.mxu0 0.0
  %172 = vmatpush1.msra.mxu0 0.0
  %173 = vmatprep.subr.mxu0 0.0
  %174 = vmatpush1.msra.mxu0 0.0
  %175 = vmatprep.subr.mxu0 0.0
  %176 = vmatpush1.msra.mxu0 0.0
  %177 = vmatprep.subr.mxu0 0.0
  %178 = vmatpush1.msra.mxu0 0.0
  %179 = vmatprep.subr.mxu0 0.0
  %180 = vmatpush1.msra.mxu0 0.0
  %181 = vmatprep.subr.mxu0 0.0
  %182 = vmatpush1.msra.mxu0 0.0
  %183 = vmatprep.subr.mxu0 0.0
  %184 = vmatpush1.msra.mxu0 0.0
  %185 = vmatprep.subr.mxu0 0.0
  %186 = vmatpush1.msra.mxu0 0.0
  %187 = vmatprep.subr.mxu0 0.0
  %188 = vmatpush1.msra.mxu0 0.0
  %189 = vmatprep.subr.mxu0 0.0
  %190 = vmatpush1.msra.mxu0 0.0
  %191 = vmatprep.subr.mxu0 0.0
  %192 = vmatpush1.msra.mxu0 0.0
  %193 = vmatprep.mubr.f32.mxu0 0.0
  %194 = vmatmul.mubr.f32.gmra.mrb[0].mxu0 %v82
  %v195 = vpop.f32.mrb[0].mxu0
  %v196 = vadd.f32 %v78, %v195
  %v197 = vpop.f32.mrb[0].mxu0
  %198 = vmatprep.mubr.f32.mxu0 0.0
  %199 = vmatmul.mubr.f32.gmra.mrb[0].mxu0 %v85
  %v200 = vpop.f32.mrb[0].mxu0
  %v201 = vadd.f32 %v78, %v200
  %v202 = vpop.f32.mrb[0].mxu0
  %203 = vmatprep.mubr.f32.mxu0 0.0
  %204 = vmatmul.mubr.f32.gmra.mrb[0].mxu0 %v88
  %v205 = vpop.f32.mrb[0].mxu0
  %v206 = vadd.f32 %v78, %v205
  %v207 = vpop.f32.mrb[0].mxu0
  %208 = vmatprep.mubr.f32.mxu0 0.0
  %209 = vmatmul.mubr.f32.gmra.mrb[0].mxu0 %v91
  %v210 = vpop.f32.mrb[0].mxu0
  %v211 = vadd.f32 %v78, %v210
  %v212 = vpop.f32.mrb[0].mxu0
  %213 = vmatprep.mubr.f32.mxu0 0.0
  %214 = vmatmul.mubr.f32.gmra.mrb[0].mxu0 %v94
  %v215 = vpop.f32.mrb[0].mxu0
  %v216 = vadd.f32 %v78, %v215
  %v217 = vpop.f32.mrb[0].mxu0
  %218 = vmatprep.mubr.f32.mxu0 0.0
  %219 = vmatmul.mubr.f32.gmra.mrb[0].mxu0 %v97
  %v220 = vpop.f32.mrb[0].mxu0
  %v221 = vadd.f32 %v78, %v220
  %v222 = vpop.f32.mrb[0].mxu0
  %223 = vmatprep.mubr.f32.mxu0 0.0
  %224 = vmatmul.mubr.f32.gmra.mrb[0].mxu0 %v100
  %v225 = vpop.f32.mrb[0].mxu0
  %v226 = vadd.f32 %v78, %v225
  %v227 = vpop.f32.mrb[0].mxu0
  %228 = vmatprep.mubr.f32.mxu0 0.0
  %229 = vmatmul.mubr.f32.gmra.mrb[0].mxu0 %v103
  %v230 = vpop.f32.mrb[0].mxu0
  %v231 = vadd.f32 %v78, %v230
  %v232 = vpop.f32.mrb[0].mxu0
  %233 = vmatprep.mubr.f32.mxu0 0.0
  %234 = vmatmul.mubr.f32.gmra.mrb[0].mxu0 %v106
  %v235 = vpop.f32.mrb[0].mxu0
  %v236 = vadd.f32 %v78, %v235
  %v237 = vpop.f32.mrb[0].mxu0
  %238 = vmatprep.mubr.f32.mxu0 0.0
  %239 = vmatmul.mubr.f32.gmra.mrb[0].mxu0 %v109
  %v240 = vpop.f32.mrb[0].mxu0
  %v241 = vadd.f32 %v78, %v240
  %v242 = vpop.f32.mrb[0].mxu0
  %243 = vmatprep.mubr.f32.mxu0 0.0
  %244 = vmatmul.mubr.f32.gmra.mrb[0].mxu0 %v112
  %v245 = vpop.f32.mrb[0].mxu0
  %v246 = vadd.f32 %v78, %v245
  %v247 = vpop.f32.mrb[0].mxu0
  %248 = vmatprep.mubr.f32.mxu0 0.0
  %249 = vmatmul.mubr.f32.gmra.mrb[0].mxu0 %v115
  %v250 = vpop.f32.mrb[0].mxu0
  %v251 = vadd.f32 %v78, %v250
  %v252 = vpop.f32.mrb[0].mxu0
  %253 = vmatprep.mubr.f32.mxu0 0.0
  %254 = vmatmul.mubr.f32.gmra.mrb[0].mxu0 %v118
  %v255 = vpop.f32.mrb[0].mxu0
  %v256 = vadd.f32 %v78, %v255
  %v257 = vpop.f32.mrb[0].mxu0
  %258 = vmatprep.mubr.f32.mxu0 0.0
  %259 = vmatmul.mubr.f32.gmra.mrb[0].mxu0 %v121
  %v260 = vpop.f32.mrb[0].mxu0
  %v261 = vadd.f32 %v78, %v260
  %v262 = vpop.f32.mrb[0].mxu0
  %263 = vmatprep.mubr.f32.mxu0 0.0
  %264 = vmatmul.mubr.f32.gmra.mrb[0].mxu0 %v124
  %v265 = vpop.f32.mrb[0].mxu0
  %v266 = vadd.f32 %v78, %v265
  %v267 = vpop.f32.mrb[0].mxu0
  %268 = vmatprep.mubr.f32.mxu0 0.0
  %269 = vmatmul.mubr.f32.gmra.mrb[0].mxu0 %v127
  %v270 = vpop.f32.mrb[0].mxu0
  %v271 = vadd.f32 %v78, %v270
  %v272 = vpop.f32.mrb[0].mxu0
  %273 = vdwg.mxu0
  %274 = vst [vmem:[#allocation3] sm:$0xff] %v196
  %275 = vst [vmem:[#allocation3 + $0x8] sm:$0xff] %v201
  %276 = vst [vmem:[#allocation3 + $0x10] sm:$0xff] %v206
  %277 = vst [vmem:[#allocation3 + $0x18] sm:$0xff] %v211
  %278 = vst [vmem:[#allocation3 + $0x20] sm:$0xff] %v216
  %279 = vst [vmem:[#allocation3 + $0x28] sm:$0xff] %v221
  %280 = vst [vmem:[#allocation3 + $0x30] sm:$0xff] %v226
  %281 = vst [vmem:[#allocation3 + $0x38] sm:$0xff] %v231
  %282 = vst [vmem:[#allocation3 + $0x40] sm:$0xff] %v236
  %283 = vst [vmem:[#allocation3 + $0x48] sm:$0xff] %v241
  %284 = vst [vmem:[#allocation3 + $0x50] sm:$0xff] %v246
  %285 = vst [vmem:[#allocation3 + $0x58] sm:$0xff] %v251
  %286 = vst [vmem:[#allocation3 + $0x60] sm:$0xff] %v256
  %287 = vst [vmem:[#allocation3 + $0x68] sm:$0xff] %v261
  %288 = vst [vmem:[#allocation3 + $0x70] sm:$0xff] %v266
  %289 = vst [vmem:[#allocation3 + $0x78] sm:$0xff] %v271
  %v290 = vld [vmem:[%s2] sm:$0xff]
  %v291 = vld [vmem:[%s2 + $0x8] sm:$0xff]
  %v292 = vld [vmem:[%s2 + $0x10] sm:$0xff]
  %v293 = vld [vmem:[%s2 + $0x18] sm:$0xff]
  %v294 = vld [vmem:[#allocation3] sm:$0xff]
  %v295 = vld [vmem:[#allocation3 + $0x8] sm:$0xff]
  %vm296 = vcmask 261120
  %v298 = vsel %vm296, 0.0, 0
  %300 = vmatprep.subr.mxu0 0.0
  %301 = vmatpush1.msra.mxu0 %v290
  %302 = vmatprep.subr.mxu0 0.0
  %303 = vmatpush1.msra.mxu0 %v291
  %304 = vmatprep.subr.mxu0 0.0
  %305 = vmatpush1.msra.mxu0 %v292
  %306 = vmatprep.subr.mxu0 0.0
  %307 = vmatpush1.msra.mxu0 %v293
  %308 = vmatprep.subr.mxu0 0.0
  %309 = vmatpush1.msra.mxu0 0.0
  %310 = vmatprep.subr.mxu0 0.0
  %311 = vmatpush1.msra.mxu0 0.0
  %312 = vmatprep.subr.mxu0 0.0
  %313 = vmatpush1.msra.mxu0 0.0
  %314 = vmatprep.subr.mxu0 0.0
  %315 = vmatpush1.msra.mxu0 0.0
  %316 = vmatprep.subr.mxu0 0.0
  %317 = vmatpush1.msra.mxu0 0.0
  %318 = vmatprep.subr.mxu0 0.0
  %319 = vmatpush1.msra.mxu0 0.0
  %320 = vmatprep.subr.mxu0 0.0
  %321 = vmatpush1.msra.mxu0 0.0
  %322 = vmatprep.subr.mxu0 0.0
  %323 = vmatpush1.msra.mxu0 0.0
  %324 = vmatprep.subr.mxu0 0.0
  %325 = vmatpush1.msra.mxu0 0.0
  %326 = vmatprep.subr.mxu0 0.0
  %327 = vmatpush1.msra.mxu0 0.0
  %328 = vmatprep.subr.mxu0 0.0
  %329 = vmatpush1.msra.mxu0 0.0
  %330 = vmatprep.subr.mxu0 0.0
  %331 = vmatpush1.msra.mxu0 0.0
  %332 = vmatprep.subr.mxu0 0.0
  %333 = vmatpush1.msra.mxu0 0.0
  %334 = vmatprep.subr.mxu0 0.0
  %335 = vmatpush1.msra.mxu0 0.0
  %336 = vmatprep.subr.mxu0 0.0
  %337 = vmatpush1.msra.mxu0 0.0
  %338 = vmatprep.subr.mxu0 0.0
  %339 = vmatpush1.msra.mxu0 0.0
  %340 = vmatprep.subr.mxu0 0.0
  %341 = vmatpush1.msra.mxu0 0.0
  %342 = vmatprep.subr.mxu0 0.0
  %343 = vmatpush1.msra.mxu0 0.0
  %344 = vmatprep.subr.mxu0 0.0
  %345 = vmatpush1.msra.mxu0 0.0
  %346 = vmatprep.subr.mxu0 0.0
  %347 = vmatpush1.msra.mxu0 0.0
  %348 = vmatprep.subr.mxu0 0.0
  %349 = vmatpush1.msra.mxu0 0.0
  %350 = vmatprep.subr.mxu0 0.0
  %351 = vmatpush1.msra.mxu0 0.0
  %352 = vmatprep.subr.mxu0 0.0
  %353 = vmatpush1.msra.mxu0 0.0
  %354 = vmatprep.subr.mxu0 0.0
  %355 = vmatpush1.msra.mxu0 0.0
  %356 = vmatprep.subr.mxu0 0.0
  %357 = vmatpush1.msra.mxu0 0.0
  %358 = vmatprep.subr.mxu0 0.0
  %359 = vmatpush1.msra.mxu0 0.0
  %360 = vmatprep.subr.mxu0 0.0
  %361 = vmatpush1.msra.mxu0 0.0
  %362 = vmatprep.subr.mxu0 0.0
  %363 = vmatpush1.msra.mxu0 0.0
  %364 = vmatprep.mubr.f32.mxu0 0.0
  %365 = vmatmul.mubr.f32.gmra.mrb[0].mxu0 %v298
  %v366 = vpop.f32.mrb[0].mxu0
  %v367 = vadd.f32 0.0, %v366
  %v368 = vpop.f32.mrb[0].mxu0
  %369 = vmatprep.mubr.f32.mxu0 0.0
  %370 = vmatmul.mubr.f32.gmra.mrb[0].mxu0 %v298
  %v371 = vpop.f32.mrb[0].mxu0
  %v372 = vadd.f32 0.0, %v371
  %v373 = vpop.f32.mrb[0].mxu0
  %374 = vdwg.mxu0
  %v375 = vadd.f32 %v294, %v367
  %v376 = vadd.f32 %v295, %v372
  %v377 = vxor.u32 %v375, 2147483648
  %v378 = vxor.u32 %v376, 2147483648
  %v379 = vmul.f32 %v377, 1.442695
  %v380 = vpow.pop %v379
  %v381 = vmul.f32 %v378, 1.442695
  %v382 = vpow.pop %v381
  %v383 = vadd.f32 %v380, 1.0
  %v384 = vadd.f32 %v382, 1.0
  %v385 = vrcp.pop %v383
  %v386 = vmul.f32 1.0, %v385
  %v387 = vrcp.pop %v384
  %v388 = vmul.f32 1.0, %v387
  %v389 = vtanh.pop %v375
  %v390 = vtanh.pop %v376
  %v391 = vmul.f32 %v386, 0.0
  %v392 = vmul.f32 %v388, 0.0
  %395 = vrot.lane.b32.xlu0 %v389, 64
  %v396 = vpop.permute.xlu0 %395
  %397 = vrot.lane.b32.xlu0 %v390, 64
  %v398 = vpop.permute.xlu0 %397
  %v401 = vmul.f32 %v386, %v396
  %v402 = vmul.f32 %v388, %v398
  %405 = vrot.lane.b32.xlu0 %v401, 32
  %v406 = vpop.permute.xlu0 %405
  %407 = vrot.lane.b32.xlu0 %v402, 32
  %v408 = vpop.permute.xlu0 %407
  %v411 = vadd.f32 %v391, %v406
  %v412 = vadd.f32 %v392, %v408
  %v413 = vtanh.pop %v411
  %v414 = vtanh.pop %v412
  %417 = vrot.lane.b32.xlu0 %v413, 64
  %v418 = vpop.permute.xlu0 %417
  %419 = vrot.lane.b32.xlu0 %v414, 64
  %v420 = vpop.permute.xlu0 %419
  %v423 = vmul.f32 %v386, %v418
  %v424 = vmul.f32 %v388, %v420
  %427 = vrot.lane.b32.xlu0 %v423, 32
  %v428 = vpop.permute.xlu0 %427
  %429 = vrot.lane.b32.xlu0 %v424, 32
  %v430 = vpop.permute.xlu0 %429
  %433 = vst.msk [vmem:[#allocation2] sm:$0xff] %vm296, %v428
  %434 = vst.msk [vmem:[#allocation2 + $0x8] sm:$0xff] %vm296, %v430
  %s435 = scalar_lea.vmem [#allocation3], 16
  %v436 = vld [vmem:[%s435] sm:$0xff]
  %v437 = vld [vmem:[%s435 + $0x8] sm:$0xff]
  %v438 = vsel %vm296, %v428, 0
  %v440 = vsel %vm296, %v430, 0
  %442 = vmatprep.subr.mxu0 0.0
  %443 = vmatpush1.msra.mxu0 %v290
  %444 = vmatprep.subr.mxu0 0.0
  %445 = vmatpush1.msra.mxu0 %v291
  %446 = vmatprep.subr.mxu0 0.0
  %447 = vmatpush1.msra.mxu0 %v292
  %448 = vmatprep.subr.mxu0 0.0
  %449 = vmatpush1.msra.mxu0 %v293
  %450 = vmatprep.subr.mxu0 0.0
  %451 = vmatpush1.msra.mxu0 0.0
  %452 = vmatprep.subr.mxu0 0.0
  %453 = vmatpush1.msra.mxu0 0.0
  %454 = vmatprep.subr.mxu0 0.0
  %455 = vmatpush1.msra.mxu0 0.0
  %456 = vmatprep.subr.mxu0 0.0
  %457 = vmatpush1.msra.mxu0 0.0
  %458 = vmatprep.subr.mxu0 0.0
  %459 = vmatpush1.msra.mxu0 0.0
  %460 = vmatprep.subr.mxu0 0.0
  %461 = vmatpush1.msra.mxu0 0.0
  %462 = vmatprep.subr.mxu0 0.0
  %463 = vmatpush1.msra.mxu0 0.0
  %464 = vmatprep.subr.mxu0 0.0
  %465 = vmatpush1.msra.mxu0 0.0
  %466 = vmatprep.subr.mxu0 0.0
  %467 = vmatpush1.msra.mxu0 0.0
  %468 = vmatprep.subr.mxu0 0.0
  %469 = vmatpush1.msra.mxu0 0.0
  %470 = vmatprep.subr.mxu0 0.0
  %471 = vmatpush1.msra.mxu0 0.0
  %472 = vmatprep.subr.mxu0 0.0
  %473 = vmatpush1.msra.mxu0 0.0
  %474 = vmatprep.subr.mxu0 0.0
  %475 = vmatpush1.msra.mxu0 0.0
  %476 = vmatprep.subr.mxu0 0.0
  %477 = vmatpush1.msra.mxu0 0.0
  %478 = vmatprep.subr.mxu0 0.0
  %479 = vmatpush1.msra.mxu0 0.0
  %480 = vmatprep.subr.mxu0 0.0
  %481 = vmatpush1.msra.mxu0 0.0
  %482 = vmatprep.subr.mxu0 0.0
  %483 = vmatpush1.msra.mxu0 0.0
  %484 = vmatprep.subr.mxu0 0.0
  %485 = vmatpush1.msra.mxu0 0.0
  %486 = vmatprep.subr.mxu0 0.0
  %487 = vmatpush1.msra.mxu0 0.0
  %488 = vmatprep.subr.mxu0 0.0
  %489 = vmatpush1.msra.mxu0 0.0
  %490 = vmatprep.subr.mxu0 0.0
  %491 = vmatpush1.msra.mxu0 0.0
  %492 = vmatprep.subr.mxu0 0.0
  %493 = vmatpush1.msra.mxu0 0.0
  %494 = vmatprep.subr.mxu0 0.0
  %495 = vmatpush1.msra.mxu0 0.0
  %496 = vmatprep.subr.mxu0 0.0
  %497 = vmatpush1.msra.mxu0 0.0
  %498 = vmatprep.subr.mxu0 0.0
  %499 = vmatpush1.msra.mxu0 0.0
  %500 = vmatprep.subr.mxu0 0.0
  %501 = vmatpush1.msra.mxu0 0.0
  %502 = vmatprep.subr.mxu0 0.0
  %503 = vmatpush1.msra.mxu0 0.0
  %504 = vmatprep.subr.mxu0 0.0
  %505 = vmatpush1.msra.mxu0 0.0
  %506 = vmatprep.mubr.f32.mxu0 0.0
  %507 = vmatmul.mubr.f32.gmra.mrb[0].mxu0 %v438
  %v508 = vpop.f32.mrb[0].mxu0
  %v509 = vadd.f32 0.0, %v508
  %v510 = vpop.f32.mrb[0].mxu0
  %511 = vmatprep.mubr.f32.mxu0 0.0
  %512 = vmatmul.mubr.f32.gmra.mrb[0].mxu0 %v440
  %v513 = vpop.f32.mrb[0].mxu0
  %v514 = vadd.f32 0.0, %v513
  %v515 = vpop.f32.mrb[0].mxu0
  %516 = vdwg.mxu0
  %v517 = vadd.f32 %v436, %v509
  %v518 = vadd.f32 %v437, %v514
  %v519 = vxor.u32 %v517, 2147483648
  %v520 = vxor.u32 %v518, 2147483648
  %v521 = vmul.f32 %v519, 1.442695
  %v522 = vpow.pop %v521
  %v523 = vmul.f32 %v520, 1.442695
  %v524 = vpow.pop %v523
  %v525 = vadd.f32 %v522, 1.0
  %v526 = vadd.f32 %v524, 1.0
  %v527 = vrcp.pop %v525
  %v528 = vmul.f32 1.0, %v527
  %v529 = vrcp.pop %v526
  %v530 = vmul.f32 1.0, %v529
  %v531 = vtanh.pop %v517
  %v532 = vtanh.pop %v518
  %v533 = vmul.f32 %v528, %v411
  %v534 = vmul.f32 %v530, %v412
  %537 = vrot.lane.b32.xlu0 %v531, 64
  %v538 = vpop.permute.xlu0 %537
  %539 = vrot.lane.b32.xlu0 %v532, 64
  %v540 = vpop.permute.xlu0 %539
  %v543 = vmul.f32 %v528, %v538
  %v544 = vmul.f32 %v530, %v540
  %547 = vrot.lane.b32.xlu0 %v543, 32
  %v548 = vpop.permute.xlu0 %547
  %549 = vrot.lane.b32.xlu0 %v544, 32
  %v550 = vpop.permute.xlu0 %549
  %v553 = vadd.f32 %v533, %v548
  %v554 = vadd.f32 %v534, %v550
  %v555 = vtanh.pop %v553
  %v556 = vtanh.pop %v554
  %559 = vrot.lane.b32.xlu0 %v555, 64
  %v560 = vpop.permute.xlu0 %559
  %561 = vrot.lane.b32.xlu0 %v556, 64
  %v562 = vpop.permute.xlu0 %561
  %v565 = vmul.f32 %v528, %v560
  %v566 = vmul.f32 %v530, %v562
  %569 = vrot.lane.b32.xlu0 %v565, 32
  %v570 = vpop.permute.xlu0 %569
  %571 = vrot.lane.b32.xlu0 %v566, 32
  %v572 = vpop.permute.xlu0 %571
  %s575 = scalar_lea.vmem [#allocation2], 16
  %576 = vst.msk [vmem:[%s575] sm:$0xff] %vm296, %v570
  %577 = vst.msk [vmem:[%s575 + $0x8] sm:$0xff] %vm296, %v572
  %s578 = scalar_lea.vmem [#allocation3], 32
  %v579 = vld [vmem:[%s578] sm:$0xff]
  %v580 = vld [vmem:[%s578 + $0x8] sm:$0xff]
  %v581 = vsel %vm296, %v570, 0
  %v583 = vsel %vm296, %v572, 0
  %585 = vmatprep.subr.mxu0 0.0
  %586 = vmatpush1.msra.mxu0 %v290
  %587 = vmatprep.subr.mxu0 0.0
  %588 = vmatpush1.msra.mxu0 %v291
  %589 = vmatprep.subr.mxu0 0.0
  %590 = vmatpush1.msra.mxu0 %v292
  %591 = vmatprep.subr.mxu0 0.0
  %592 = vmatpush1.msra.mxu0 %v293
  %593 = vmatprep.subr.mxu0 0.0
  %594 = vmatpush1.msra.mxu0 0.0
  %595 = vmatprep.subr.mxu0 0.0
  %596 = vmatpush1.msra.mxu0 0.0
  %597 = vmatprep.subr.mxu0 0.0
  %598 = vmatpush1.msra.mxu0 0.0
  %599 = vmatprep.subr.mxu0 0.0
  %600 = vmatpush1.msra.mxu0 0.0
  %601 = vmatprep.subr.mxu0 0.0
  %602 = vmatpush1.msra.mxu0 0.0
  %603 = vmatprep.subr.mxu0 0.0
  %604 = vmatpush1.msra.mxu0 0.0
  %605 = vmatprep.subr.mxu0 0.0
  %606 = vmatpush1.msra.mxu0 0.0
  %607 = vmatprep.subr.mxu0 0.0
  %608 = vmatpush1.msra.mxu0 0.0
  %609 = vmatprep.subr.mxu0 0.0
  %610 = vmatpush1.msra.mxu0 0.0
  %611 = vmatprep.subr.mxu0 0.0
  %612 = vmatpush1.msra.mxu0 0.0
  %613 = vmatprep.subr.mxu0 0.0
  %614 = vmatpush1.msra.mxu0 0.0
  %615 = vmatprep.subr.mxu0 0.0
  %616 = vmatpush1.msra.mxu0 0.0
  %617 = vmatprep.subr.mxu0 0.0
  %618 = vmatpush1.msra.mxu0 0.0
  %619 = vmatprep.subr.mxu0 0.0
  %620 = vmatpush1.msra.mxu0 0.0
  %621 = vmatprep.subr.mxu0 0.0
  %622 = vmatpush1.msra.mxu0 0.0
  %623 = vmatprep.subr.mxu0 0.0
  %624 = vmatpush1.msra.mxu0 0.0
  %625 = vmatprep.subr.mxu0 0.0
  %626 = vmatpush1.msra.mxu0 0.0
  %627 = vmatprep.subr.mxu0 0.0
  %628 = vmatpush1.msra.mxu0 0.0
  %629 = vmatprep.subr.mxu0 0.0
  %630 = vmatpush1.msra.mxu0 0.0
  %631 = vmatprep.subr.mxu0 0.0
  %632 = vmatpush1.msra.mxu0 0.0
  %633 = vmatprep.subr.mxu0 0.0
  %634 = vmatpush1.msra.mxu0 0.0
  %635 = vmatprep.subr.mxu0 0.0
  %636 = vmatpush1.msra.mxu0 0.0
  %637 = vmatprep.subr.mxu0 0.0
  %638 = vmatpush1.msra.mxu0 0.0
  %639 = vmatprep.subr.mxu0 0.0
  %640 = vmatpush1.msra.mxu0 0.0
  %641 = vmatprep.subr.mxu0 0.0
  %642 = vmatpush1.msra.mxu0 0.0
  %643 = vmatprep.subr.mxu0 0.0
  %644 = vmatpush1.msra.mxu0 0.0
  %645 = vmatprep.subr.mxu0 0.0
  %646 = vmatpush1.msra.mxu0 0.0
  %647 = vmatprep.subr.mxu0 0.0
  %648 = vmatpush1.msra.mxu0 0.0
  %649 = vmatprep.mubr.f32.mxu0 0.0
  %650 = vmatmul.mubr.f32.gmra.mrb[0].mxu0 %v581
  %v651 = vpop.f32.mrb[0].mxu0
  %v652 = vadd.f32 0.0, %v651
  %v653 = vpop.f32.mrb[0].mxu0
  %654 = vmatprep.mubr.f32.mxu0 0.0
  %655 = vmatmul.mubr.f32.gmra.mrb[0].mxu0 %v583
  %v656 = vpop.f32.mrb[0].mxu0
  %v657 = vadd.f32 0.0, %v656
  %v658 = vpop.f32.mrb[0].mxu0
  %659 = vdwg.mxu0
  %v660 = vadd.f32 %v579, %v652
  %v661 = vadd.f32 %v580, %v657
  %v662 = vxor.u32 %v660, 2147483648
  %v663 = vxor.u32 %v661, 2147483648
  %v664 = vmul.f32 %v662, 1.442695
  %v665 = vpow.pop %v664
  %v666 = vmul.f32 %v663, 1.442695
  %v667 = vpow.pop %v666
  %v668 = vadd.f32 %v665, 1.0
  %v669 = vadd.f32 %v667, 1.0
  %v670 = vrcp.pop %v668
  %v671 = vmul.f32 1.0, %v670
  %v672 = vrcp.pop %v669
  %v673 = vmul.f32 1.0, %v672
  %v674 = vtanh.pop %v660
  %v675 = vtanh.pop %v661
  %v676 = vmul.f32 %v671, %v553
  %v677 = vmul.f32 %v673, %v554
  %680 = vrot.lane.b32.xlu0 %v674, 64
  %v681 = vpop.permute.xlu0 %680
  %682 = vrot.lane.b32.xlu0 %v675, 64
  %v683 = vpop.permute.xlu0 %682
  %v686 = vmul.f32 %v671, %v681
  %v687 = vmul.f32 %v673, %v683
  %690 = vrot.lane.b32.xlu0 %v686, 32
  %v691 = vpop.permute.xlu0 %690
  %692 = vrot.lane.b32.xlu0 %v687, 32
  %v693 = vpop.permute.xlu0 %692
  %v696 = vadd.f32 %v676, %v691
  %v697 = vadd.f32 %v677, %v693
  %v698 = vtanh.pop %v696
  %v699 = vtanh.pop %v697
  %702 = vrot.lane.b32.xlu0 %v698, 64
  %v703 = vpop.permute.xlu0 %702
  %704 = vrot.lane.b32.xlu0 %v699, 64
  %v705 = vpop.permute.xlu0 %704
  %v708 = vmul.f32 %v671, %v703
  %v709 = vmul.f32 %v673, %v705
  %712 = vrot.lane.b32.xlu0 %v708, 32
  %v713 = vpop.permute.xlu0 %712
  %714 = vrot.lane.b32.xlu0 %v709, 32
  %v715 = vpop.permute.xlu0 %714
  %s718 = scalar_lea.vmem [#allocation2], 32
  %719 = vst.msk [vmem:[%s718] sm:$0xff] %vm296, %v713
  %720 = vst.msk [vmem:[%s718 + $0x8] sm:$0xff] %vm296, %v715
  %s721 = scalar_lea.vmem [#allocation3], 48
  %v722 = vld [vmem:[%s721] sm:$0xff]
  %v723 = vld [vmem:[%s721 + $0x8] sm:$0xff]
  %v724 = vsel %vm296, %v713, 0
  %v726 = vsel %vm296, %v715, 0
  %728 = vmatprep.subr.mxu0 0.0
  %729 = vmatpush1.msra.mxu0 %v290
  %730 = vmatprep.subr.mxu0 0.0
  %731 = vmatpush1.msra.mxu0 %v291
  %732 = vmatprep.subr.mxu0 0.0
  %733 = vmatpush1.msra.mxu0 %v292
  %734 = vmatprep.subr.mxu0 0.0
  %735 = vmatpush1.msra.mxu0 %v293
  %736 = vmatprep.subr.mxu0 0.0
  %737 = vmatpush1.msra.mxu0 0.0
  %738 = vmatprep.subr.mxu0 0.0
  %739 = vmatpush1.msra.mxu0 0.0
  %740 = vmatprep.subr.mxu0 0.0
  %741 = vmatpush1.msra.mxu0 0.0
  %742 = vmatprep.subr.mxu0 0.0
  %743 = vmatpush1.msra.mxu0 0.0
  %744 = vmatprep.subr.mxu0 0.0
  %745 = vmatpush1.msra.mxu0 0.0
  %746 = vmatprep.subr.mxu0 0.0
  %747 = vmatpush1.msra.mxu0 0.0
  %748 = vmatprep.subr.mxu0 0.0
  %749 = vmatpush1.msra.mxu0 0.0
  %750 = vmatprep.subr.mxu0 0.0
  %751 = vmatpush1.msra.mxu0 0.0
  %752 = vmatprep.subr.mxu0 0.0
  %753 = vmatpush1.msra.mxu0 0.0
  %754 = vmatprep.subr.mxu0 0.0
  %755 = vmatpush1.msra.mxu0 0.0
  %756 = vmatprep.subr.mxu0 0.0
  %757 = vmatpush1.msra.mxu0 0.0
  %758 = vmatprep.subr.mxu0 0.0
  %759 = vmatpush1.msra.mxu0 0.0
  %760 = vmatprep.subr.mxu0 0.0
  %761 = vmatpush1.msra.mxu0 0.0
  %762 = vmatprep.subr.mxu0 0.0
  %763 = vmatpush1.msra.mxu0 0.0
  %764 = vmatprep.subr.mxu0 0.0
  %765 = vmatpush1.msra.mxu0 0.0
  %766 = vmatprep.subr.mxu0 0.0
  %767 = vmatpush1.msra.mxu0 0.0
  %768 = vmatprep.subr.mxu0 0.0
  %769 = vmatpush1.msra.mxu0 0.0
  %770 = vmatprep.subr.mxu0 0.0
  %771 = vmatpush1.msra.mxu0 0.0
  %772 = vmatprep.subr.mxu0 0.0
  %773 = vmatpush1.msra.mxu0 0.0
  %774 = vmatprep.subr.mxu0 0.0
  %775 = vmatpush1.msra.mxu0 0.0
  %776 = vmatprep.subr.mxu0 0.0
  %777 = vmatpush1.msra.mxu0 0.0
  %778 = vmatprep.subr.mxu0 0.0
  %779 = vmatpush1.msra.mxu0 0.0
  %780 = vmatprep.subr.mxu0 0.0
  %781 = vmatpush1.msra.mxu0 0.0
  %782 = vmatprep.subr.mxu0 0.0
  %783 = vmatpush1.msra.mxu0 0.0
  %784 = vmatprep.subr.mxu0 0.0
  %785 = vmatpush1.msra.mxu0 0.0
  %786 = vmatprep.subr.mxu0 0.0
  %787 = vmatpush1.msra.mxu0 0.0
  %788 = vmatprep.subr.mxu0 0.0
  %789 = vmatpush1.msra.mxu0 0.0
  %790 = vmatprep.subr.mxu0 0.0
  %791 = vmatpush1.msra.mxu0 0.0
  %792 = vmatprep.mubr.f32.mxu0 0.0
  %793 = vmatmul.mubr.f32.gmra.mrb[0].mxu0 %v724
  %v794 = vpop.f32.mrb[0].mxu0
  %v795 = vadd.f32 0.0, %v794
  %v796 = vpop.f32.mrb[0].mxu0
  %797 = vmatprep.mubr.f32.mxu0 0.0
  %798 = vmatmul.mubr.f32.gmra.mrb[0].mxu0 %v726
  %v799 = vpop.f32.mrb[0].mxu0
  %v800 = vadd.f32 0.0, %v799
  %v801 = vpop.f32.mrb[0].mxu0
  %802 = vdwg.mxu0
  %v803 = vadd.f32 %v722, %v795
  %v804 = vadd.f32 %v723, %v800
  %v805 = vxor.u32 %v803, 2147483648
  %v806 = vxor.u32 %v804, 2147483648
  %v807 = vmul.f32 %v805, 1.442695
  %v808 = vpow.pop %v807
  %v809 = vmul.f32 %v806, 1.442695
  %v810 = vpow.pop %v809
  %v811 = vadd.f32 %v808, 1.0
  %v812 = vadd.f32 %v810, 1.0
  %v813 = vrcp.pop %v811
  %v814 = vmul.f32 1.0, %v813
  %v815 = vrcp.pop %v812
  %v816 = vmul.f32 1.0, %v815
  %v817 = vtanh.pop %v803
  %v818 = vtanh.pop %v804
  %v819 = vmul.f32 %v814, %v696
  %v820 = vmul.f32 %v816, %v697
  %823 = vrot.lane.b32.xlu0 %v817, 64
  %v824 = vpop.permute.xlu0 %823
  %825 = vrot.lane.b32.xlu0 %v818, 64
  %v826 = vpop.permute.xlu0 %825
  %v829 = vmul.f32 %v814, %v824
  %v830 = vmul.f32 %v816, %v826
  %833 = vrot.lane.b32.xlu0 %v829, 32
  %v834 = vpop.permute.xlu0 %833
  %835 = vrot.lane.b32.xlu0 %v830, 32
  %v836 = vpop.permute.xlu0 %835
  %v839 = vadd.f32 %v819, %v834
  %v840 = vadd.f32 %v820, %v836
  %v841 = vtanh.pop %v839
  %v842 = vtanh.pop %v840
  %845 = vrot.lane.b32.xlu0 %v841, 64
  %v846 = vpop.permute.xlu0 %845
  %847 = vrot.lane.b32.xlu0 %v842, 64
  %v848 = vpop.permute.xlu0 %847
  %v851 = vmul.f32 %v814, %v846
  %v852 = vmul.f32 %v816, %v848
  %855 = vrot.lane.b32.xlu0 %v851, 32
  %v856 = vpop.permute.xlu0 %855
  %857 = vrot.lane.b32.xlu0 %v852, 32
  %v858 = vpop.permute.xlu0 %857
  %s861 = scalar_lea.vmem [#allocation2], 48
  %862 = vst.msk [vmem:[%s861] sm:$0xff] %vm296, %v856
  %863 = vst.msk [vmem:[%s861 + $0x8] sm:$0xff] %vm296, %v858
  %s864 = scalar_lea.vmem [#allocation3], 64
  %v865 = vld [vmem:[%s864] sm:$0xff]
  %v866 = vld [vmem:[%s864 + $0x8] sm:$0xff]
  %v867 = vsel %vm296, %v856, 0
  %v869 = vsel %vm296, %v858, 0
  %871 = vmatprep.subr.mxu0 0.0
  %872 = vmatpush1.msra.mxu0 %v290
  %873 = vmatprep.subr.mxu0 0.0
  %874 = vmatpush1.msra.mxu0 %v291
  %875 = vmatprep.subr.mxu0 0.0
  %876 = vmatpush1.msra.mxu0 %v292
  %877 = vmatprep.subr.mxu0 0.0
  %878 = vmatpush1.msra.mxu0 %v293
  %879 = vmatprep.subr.mxu0 0.0
  %880 = vmatpush1.msra.mxu0 0.0
  %881 = vmatprep.subr.mxu0 0.0
  %882 = vmatpush1.msra.mxu0 0.0
  %883 = vmatprep.subr.mxu0 0.0
  %884 = vmatpush1.msra.mxu0 0.0
  %885 = vmatprep.subr.mxu0 0.0
  %886 = vmatpush1.msra.mxu0 0.0
  %887 = vmatprep.subr.mxu0 0.0
  %888 = vmatpush1.msra.mxu0 0.0
  %889 = vmatprep.subr.mxu0 0.0
  %890 = vmatpush1.msra.mxu0 0.0
  %891 = vmatprep.subr.mxu0 0.0
  %892 = vmatpush1.msra.mxu0 0.0
  %893 = vmatprep.subr.mxu0 0.0
  %894 = vmatpush1.msra.mxu0 0.0
  %895 = vmatprep.subr.mxu0 0.0
  %896 = vmatpush1.msra.mxu0 0.0
  %897 = vmatprep.subr.mxu0 0.0
  %898 = vmatpush1.msra.mxu0 0.0
  %899 = vmatprep.subr.mxu0 0.0
  %900 = vmatpush1.msra.mxu0 0.0
  %901 = vmatprep.subr.mxu0 0.0
  %902 = vmatpush1.msra.mxu0 0.0
  %903 = vmatprep.subr.mxu0 0.0
  %904 = vmatpush1.msra.mxu0 0.0
  %905 = vmatprep.subr.mxu0 0.0
  %906 = vmatpush1.msra.mxu0 0.0
  %907 = vmatprep.subr.mxu0 0.0
  %908 = vmatpush1.msra.mxu0 0.0
  %909 = vmatprep.subr.mxu0 0.0
  %910 = vmatpush1.msra.mxu0 0.0
  %911 = vmatprep.subr.mxu0 0.0
  %912 = vmatpush1.msra.mxu0 0.0
  %913 = vmatprep.subr.mxu0 0.0
  %914 = vmatpush1.msra.mxu0 0.0
  %915 = vmatprep.subr.mxu0 0.0
  %916 = vmatpush1.msra.mxu0 0.0
  %917 = vmatprep.subr.mxu0 0.0
  %918 = vmatpush1.msra.mxu0 0.0
  %919 = vmatprep.subr.mxu0 0.0
  %920 = vmatpush1.msra.mxu0 0.0
  %921 = vmatprep.subr.mxu0 0.0
  %922 = vmatpush1.msra.mxu0 0.0
  %923 = vmatprep.subr.mxu0 0.0
  %924 = vmatpush1.msra.mxu0 0.0
  %925 = vmatprep.subr.mxu0 0.0
  %926 = vmatpush1.msra.mxu0 0.0
  %927 = vmatprep.subr.mxu0 0.0
  %928 = vmatpush1.msra.mxu0 0.0
  %929 = vmatprep.subr.mxu0 0.0
  %930 = vmatpush1.msra.mxu0 0.0
  %931 = vmatprep.subr.mxu0 0.0
  %932 = vmatpush1.msra.mxu0 0.0
  %933 = vmatprep.subr.mxu0 0.0
  %934 = vmatpush1.msra.mxu0 0.0
  %935 = vmatprep.mubr.f32.mxu0 0.0
  %936 = vmatmul.mubr.f32.gmra.mrb[0].mxu0 %v867
  %v937 = vpop.f32.mrb[0].mxu0
  %v938 = vadd.f32 0.0, %v937
  %v939 = vpop.f32.mrb[0].mxu0
  %940 = vmatprep.mubr.f32.mxu0 0.0
  %941 = vmatmul.mubr.f32.gmra.mrb[0].mxu0 %v869
  %v942 = vpop.f32.mrb[0].mxu0
  %v943 = vadd.f32 0.0, %v942
  %v944 = vpop.f32.mrb[0].mxu0
  %945 = vdwg.mxu0
  %v946 = vadd.f32 %v865, %v938
  %v947 = vadd.f32 %v866, %v943
  %v948 = vxor.u32 %v946, 2147483648
  %v949 = vxor.u32 %v947, 2147483648
  %v950 = vmul.f32 %v948, 1.442695
  %v951 = vpow.pop %v950
  %v952 = vmul.f32 %v949, 1.442695
  %v953 = vpow.pop %v952
  %v954 = vadd.f32 %v951, 1.0
  %v955 = vadd.f32 %v953, 1.0
  %v956 = vrcp.pop %v954
  %v957 = vmul.f32 1.0, %v956
  %v958 = vrcp.pop %v955
  %v959 = vmul.f32 1.0, %v958
  %v960 = vtanh.pop %v946
  %v961 = vtanh.pop %v947
  %v962 = vmul.f32 %v957, %v839
  %v963 = vmul.f32 %v959, %v840
  %966 = vrot.lane.b32.xlu0 %v960, 64
  %v967 = vpop.permute.xlu0 %966
  %968 = vrot.lane.b32.xlu0 %v961, 64
  %v969 = vpop.permute.xlu0 %968
  %v972 = vmul.f32 %v957, %v967
  %v973 = vmul.f32 %v959, %v969
  %976 = vrot.lane.b32.xlu0 %v972, 32
  %v977 = vpop.permute.xlu0 %976
  %978 = vrot.lane.b32.xlu0 %v973, 32
  %v979 = vpop.permute.xlu0 %978
  %v982 = vadd.f32 %v962, %v977
  %v983 = vadd.f32 %v963, %v979
  %v984 = vtanh.pop %v982
  %v985 = vtanh.pop %v983
  %988 = vrot.lane.b32.xlu0 %v984, 64
  %v989 = vpop.permute.xlu0 %988
  %990 = vrot.lane.b32.xlu0 %v985, 64
  %v991 = vpop.permute.xlu0 %990
  %v994 = vmul.f32 %v957, %v989
  %v995 = vmul.f32 %v959, %v991
  %998 = vrot.lane.b32.xlu0 %v994, 32
  %v999 = vpop.permute.xlu0 %998
  %1000 = vrot.lane.b32.xlu0 %v995, 32
  %v1001 = vpop.permute.xlu0 %1000
  %s1004 = scalar_lea.vmem [#allocation2], 64
  %1005 = vst.msk [vmem:[%s1004] sm:$0xff] %vm296, %v999
  %1006 = vst.msk [vmem:[%s1004 + $0x8] sm:$0xff] %vm296, %v1001
  %s1007 = scalar_lea.vmem [#allocation3], 80
  %v1008 = vld [vmem:[%s1007] sm:$0xff]
  %v1009 = vld [vmem:[%s1007 + $0x8] sm:$0xff]
  %v1010 = vsel %vm296, %v999, 0
  %v1012 = vsel %vm296, %v1001, 0
  %1014 = vmatprep.subr.mxu0 0.0
  %1015 = vmatpush1.msra.mxu0 %v290
  %1016 = vmatprep.subr.mxu0 0.0
  %1017 = vmatpush1.msra.mxu0 %v291
  %1018 = vmatprep.subr.mxu0 0.0
  %1019 = vmatpush1.msra.mxu0 %v292
  %1020 = vmatprep.subr.mxu0 0.0
  %1021 = vmatpush1.msra.mxu0 %v293
  %1022 = vmatprep.subr.mxu0 0.0
  %1023 = vmatpush1.msra.mxu0 0.0
  %1024 = vmatprep.subr.mxu0 0.0
  %1025 = vmatpush1.msra.mxu0 0.0
  %1026 = vmatprep.subr.mxu0 0.0
  %1027 = vmatpush1.msra.mxu0 0.0
  %1028 = vmatprep.subr.mxu0 0.0
  %1029 = vmatpush1.msra.mxu0 0.0
  %1030 = vmatprep.subr.mxu0 0.0
  %1031 = vmatpush1.msra.mxu0 0.0
  %1032 = vmatprep.subr.mxu0 0.0
  %1033 = vmatpush1.msra.mxu0 0.0
  %1034 = vmatprep.subr.mxu0 0.0
  %1035 = vmatpush1.msra.mxu0 0.0
  %1036 = vmatprep.subr.mxu0 0.0
  %1037 = vmatpush1.msra.mxu0 0.0
  %1038 = vmatprep.subr.mxu0 0.0
  %1039 = vmatpush1.msra.mxu0 0.0
  %1040 = vmatprep.subr.mxu0 0.0
  %1041 = vmatpush1.msra.mxu0 0.0
  %1042 = vmatprep.subr.mxu0 0.0
  %1043 = vmatpush1.msra.mxu0 0.0
  %1044 = vmatprep.subr.mxu0 0.0
  %1045 = vmatpush1.msra.mxu0 0.0
  %1046 = vmatprep.subr.mxu0 0.0
  %1047 = vmatpush1.msra.mxu0 0.0
  %1048 = vmatprep.subr.mxu0 0.0
  %1049 = vmatpush1.msra.mxu0 0.0
  %1050 = vmatprep.subr.mxu0 0.0
  %1051 = vmatpush1.msra.mxu0 0.0
  %1052 = vmatprep.subr.mxu0 0.0
  %1053 = vmatpush1.msra.mxu0 0.0
  %1054 = vmatprep.subr.mxu0 0.0
  %1055 = vmatpush1.msra.mxu0 0.0
  %1056 = vmatprep.subr.mxu0 0.0
  %1057 = vmatpush1.msra.mxu0 0.0
  %1058 = vmatprep.subr.mxu0 0.0
  %1059 = vmatpush1.msra.mxu0 0.0
  %1060 = vmatprep.subr.mxu0 0.0
  %1061 = vmatpush1.msra.mxu0 0.0
  %1062 = vmatprep.subr.mxu0 0.0
  %1063 = vmatpush1.msra.mxu0 0.0
  %1064 = vmatprep.subr.mxu0 0.0
  %1065 = vmatpush1.msra.mxu0 0.0
  %1066 = vmatprep.subr.mxu0 0.0
  %1067 = vmatpush1.msra.mxu0 0.0
  %1068 = vmatprep.subr.mxu0 0.0
  %1069 = vmatpush1.msra.mxu0 0.0
  %1070 = vmatprep.subr.mxu0 0.0
  %1071 = vmatpush1.msra.mxu0 0.0
  %1072 = vmatprep.subr.mxu0 0.0
  %1073 = vmatpush1.msra.mxu0 0.0
  %1074 = vmatprep.subr.mxu0 0.0
  %1075 = vmatpush1.msra.mxu0 0.0
  %1076 = vmatprep.subr.mxu0 0.0
  %1077 = vmatpush1.msra.mxu0 0.0
  %1078 = vmatprep.mubr.f32.mxu0 0.0
  %1079 = vmatmul.mubr.f32.gmra.mrb[0].mxu0 %v1010
  %v1080 = vpop.f32.mrb[0].mxu0
  %v1081 = vadd.f32 0.0, %v1080
  %v1082 = vpop.f32.mrb[0].mxu0
  %1083 = vmatprep.mubr.f32.mxu0 0.0
  %1084 = vmatmul.mubr.f32.gmra.mrb[0].mxu0 %v1012
  %v1085 = vpop.f32.mrb[0].mxu0
  %v1086 = vadd.f32 0.0, %v1085
  %v1087 = vpop.f32.mrb[0].mxu0
  %1088 = vdwg.mxu0
  %v1089 = vadd.f32 %v1008, %v1081
  %v1090 = vadd.f32 %v1009, %v1086
  %v1091 = vxor.u32 %v1089, 2147483648
  %v1092 = vxor.u32 %v1090, 2147483648
  %v1093 = vmul.f32 %v1091, 1.442695
  %v1094 = vpow.pop %v1093
  %v1095 = vmul.f32 %v1092, 1.442695
  %v1096 = vpow.pop %v1095
  %v1097 = vadd.f32 %v1094, 1.0
  %v1098 = vadd.f32 %v1096, 1.0
  %v1099 = vrcp.pop %v1097
  %v1100 = vmul.f32 1.0, %v1099
  %v1101 = vrcp.pop %v1098
  %v1102 = vmul.f32 1.0, %v1101
  %v1103 = vtanh.pop %v1089
  %v1104 = vtanh.pop %v1090
  %v1105 = vmul.f32 %v1100, %v982
  %v1106 = vmul.f32 %v1102, %v983
  %1109 = vrot.lane.b32.xlu0 %v1103, 64
  %v1110 = vpop.permute.xlu0 %1109
  %1111 = vrot.lane.b32.xlu0 %v1104, 64
  %v1112 = vpop.permute.xlu0 %1111
  %v1115 = vmul.f32 %v1100, %v1110
  %v1116 = vmul.f32 %v1102, %v1112
  %1119 = vrot.lane.b32.xlu0 %v1115, 32
  %v1120 = vpop.permute.xlu0 %1119
  %1121 = vrot.lane.b32.xlu0 %v1116, 32
  %v1122 = vpop.permute.xlu0 %1121
  %v1125 = vadd.f32 %v1105, %v1120
  %v1126 = vadd.f32 %v1106, %v1122
  %v1127 = vtanh.pop %v1125
  %v1128 = vtanh.pop %v1126
  %1131 = vrot.lane.b32.xlu0 %v1127, 64
  %v1132 = vpop.permute.xlu0 %1131
  %1133 = vrot.lane.b32.xlu0 %v1128, 64
  %v1134 = vpop.permute.xlu0 %1133
  %v1137 = vmul.f32 %v1100, %v1132
  %v1138 = vmul.f32 %v1102, %v1134
  %1141 = vrot.lane.b32.xlu0 %v1137, 32
  %v1142 = vpop.permute.xlu0 %1141
  %1143 = vrot.lane.b32.xlu0 %v1138, 32
  %v1144 = vpop.permute.xlu0 %1143
  %s1147 = scalar_lea.vmem [#allocation2], 80
  %1148 = vst.msk [vmem:[%s1147] sm:$0xff] %vm296, %v1142
  %1149 = vst.msk [vmem:[%s1147 + $0x8] sm:$0xff] %vm296, %v1144
  %s1150 = scalar_lea.vmem [#allocation3], 96
  %v1151 = vld [vmem:[%s1150] sm:$0xff]
  %v1152 = vld [vmem:[%s1150 + $0x8] sm:$0xff]
  %v1153 = vsel %vm296, %v1142, 0
  %v1155 = vsel %vm296, %v1144, 0
  %1157 = vmatprep.subr.mxu0 0.0
  %1158 = vmatpush1.msra.mxu0 %v290
  %1159 = vmatprep.subr.mxu0 0.0
  %1160 = vmatpush1.msra.mxu0 %v291
  %1161 = vmatprep.subr.mxu0 0.0
  %1162 = vmatpush1.msra.mxu0 %v292
  %1163 = vmatprep.subr.mxu0 0.0
  %1164 = vmatpush1.msra.mxu0 %v293
  %1165 = vmatprep.subr.mxu0 0.0
  %1166 = vmatpush1.msra.mxu0 0.0
  %1167 = vmatprep.subr.mxu0 0.0
  %1168 = vmatpush1.msra.mxu0 0.0
  %1169 = vmatprep.subr.mxu0 0.0
  %1170 = vmatpush1.msra.mxu0 0.0
  %1171 = vmatprep.subr.mxu0 0.0
  %1172 = vmatpush1.msra.mxu0 0.0
  %1173 = vmatprep.subr.mxu0 0.0
  %1174 = vmatpush1.msra.mxu0 0.0
  %1175 = vmatprep.subr.mxu0 0.0
  %1176 = vmatpush1.msra.mxu0 0.0
  %1177 = vmatprep.subr.mxu0 0.0
  %1178 = vmatpush1.msra.mxu0 0.0
  %1179 = vmatprep.subr.mxu0 0.0
  %1180 = vmatpush1.msra.mxu0 0.0
  %1181 = vmatprep.subr.mxu0 0.0
  %1182 = vmatpush1.msra.mxu0 0.0
  %1183 = vmatprep.subr.mxu0 0.0
  %1184 = vmatpush1.msra.mxu0 0.0
  %1185 = vmatprep.subr.mxu0 0.0
  %1186 = vmatpush1.msra.mxu0 0.0
  %1187 = vmatprep.subr.mxu0 0.0
  %1188 = vmatpush1.msra.mxu0 0.0
  %1189 = vmatprep.subr.mxu0 0.0
  %1190 = vmatpush1.msra.mxu0 0.0
  %1191 = vmatprep.subr.mxu0 0.0
  %1192 = vmatpush1.msra.mxu0 0.0
  %1193 = vmatprep.subr.mxu0 0.0
  %1194 = vmatpush1.msra.mxu0 0.0
  %1195 = vmatprep.subr.mxu0 0.0
  %1196 = vmatpush1.msra.mxu0 0.0
  %1197 = vmatprep.subr.mxu0 0.0
  %1198 = vmatpush1.msra.mxu0 0.0
  %1199 = vmatprep.subr.mxu0 0.0
  %1200 = vmatpush1.msra.mxu0 0.0
  %1201 = vmatprep.subr.mxu0 0.0
  %1202 = vmatpush1.msra.mxu0 0.0
  %1203 = vmatprep.subr.mxu0 0.0
  %1204 = vmatpush1.msra.mxu0 0.0
  %1205 = vmatprep.subr.mxu0 0.0
  %1206 = vmatpush1.msra.mxu0 0.0
  %1207 = vmatprep.subr.mxu0 0.0
  %1208 = vmatpush1.msra.mxu0 0.0
  %1209 = vmatprep.subr.mxu0 0.0
  %1210 = vmatpush1.msra.mxu0 0.0
  %1211 = vmatprep.subr.mxu0 0.0
  %1212 = vmatpush1.msra.mxu0 0.0
  %1213 = vmatprep.subr.mxu0 0.0
  %1214 = vmatpush1.msra.mxu0 0.0
  %1215 = vmatprep.subr.mxu0 0.0
  %1216 = vmatpush1.msra.mxu0 0.0
  %1217 = vmatprep.subr.mxu0 0.0
  %1218 = vmatpush1.msra.mxu0 0.0
  %1219 = vmatprep.subr.mxu0 0.0
  %1220 = vmatpush1.msra.mxu0 0.0
  %1221 = vmatprep.mubr.f32.mxu0 0.0
  %1222 = vmatmul.mubr.f32.gmra.mrb[0].mxu0 %v1153
  %v1223 = vpop.f32.mrb[0].mxu0
  %v1224 = vadd.f32 0.0, %v1223
  %v1225 = vpop.f32.mrb[0].mxu0
  %1226 = vmatprep.mubr.f32.mxu0 0.0
  %1227 = vmatmul.mubr.f32.gmra.mrb[0].mxu0 %v1155
  %v1228 = vpop.f32.mrb[0].mxu0
  %v1229 = vadd.f32 0.0, %v1228
  %v1230 = vpop.f32.mrb[0].mxu0
  %1231 = vdwg.mxu0
  %v1232 = vadd.f32 %v1151, %v1224
  %v1233 = vadd.f32 %v1152, %v1229
  %v1234 = vxor.u32 %v1232, 2147483648
  %v1235 = vxor.u32 %v1233, 2147483648
  %v1236 = vmul.f32 %v1234, 1.442695
  %v1237 = vpow.pop %v1236
  %v1238 = vmul.f32 %v1235, 1.442695
  %v1239 = vpow.pop %v1238
  %v1240 = vadd.f32 %v1237, 1.0
  %v1241 = vadd.f32 %v1239, 1.0
  %v1242 = vrcp.pop %v1240
  %v1243 = vmul.f32 1.0, %v1242
  %v1244 = vrcp.pop %v1241
  %v1245 = vmul.f32 1.0, %v1244
  %v1246 = vtanh.pop %v1232
  %v1247 = vtanh.pop %v1233
  %v1248 = vmul.f32 %v1243, %v1125
  %v1249 = vmul.f32 %v1245, %v1126
  %1252 = vrot.lane.b32.xlu0 %v1246, 64
  %v1253 = vpop.permute.xlu0 %1252
  %1254 = vrot.lane.b32.xlu0 %v1247, 64
  %v1255 = vpop.permute.xlu0 %1254
  %v1258 = vmul.f32 %v1243, %v1253
  %v1259 = vmul.f32 %v1245, %v1255
  %1262 = vrot.lane.b32.xlu0 %v1258, 32
  %v1263 = vpop.permute.xlu0 %1262
  %1264 = vrot.lane.b32.xlu0 %v1259, 32
  %v1265 = vpop.permute.xlu0 %1264
  %v1268 = vadd.f32 %v1248, %v1263
  %v1269 = vadd.f32 %v1249, %v1265
  %v1270 = vtanh.pop %v1268
  %v1271 = vtanh.pop %v1269
  %1274 = vrot.lane.b32.xlu0 %v1270, 64
  %v1275 = vpop.permute.xlu0 %1274
  %1276 = vrot.lane.b32.xlu0 %v1271, 64
  %v1277 = vpop.permute.xlu0 %1276
  %v1280 = vmul.f32 %v1243, %v1275
  %v1281 = vmul.f32 %v1245, %v1277
  %1284 = vrot.lane.b32.xlu0 %v1280, 32
  %v1285 = vpop.permute.xlu0 %1284
  %1286 = vrot.lane.b32.xlu0 %v1281, 32
  %v1287 = vpop.permute.xlu0 %1286
  %s1290 = scalar_lea.vmem [#allocation2], 96
  %1291 = vst.msk [vmem:[%s1290] sm:$0xff] %vm296, %v1285
  %1292 = vst.msk [vmem:[%s1290 + $0x8] sm:$0xff] %vm296, %v1287
  %s1293 = scalar_lea.vmem [#allocation3], 112
  %v1294 = vld [vmem:[%s1293] sm:$0xff]
  %v1295 = vld [vmem:[%s1293 + $0x8] sm:$0xff]
  %v1296 = vsel %vm296, %v1285, 0
  %v1298 = vsel %vm296, %v1287, 0
  %1300 = vmatprep.subr.mxu0 0.0
  %1301 = vmatpush1.msra.mxu0 %v290
  %1302 = vmatprep.subr.mxu0 0.0
  %1303 = vmatpush1.msra.mxu0 %v291
  %1304 = vmatprep.subr.mxu0 0.0
  %1305 = vmatpush1.msra.mxu0 %v292
  %1306 = vmatprep.subr.mxu0 0.0
  %1307 = vmatpush1.msra.mxu0 %v293
  %1308 = vmatprep.subr.mxu0 0.0
  %1309 = vmatpush1.msra.mxu0 0.0
  %1310 = vmatprep.subr.mxu0 0.0
  %1311 = vmatpush1.msra.mxu0 0.0
  %1312 = vmatprep.subr.mxu0 0.0
  %1313 = vmatpush1.msra.mxu0 0.0
  %1314 = vmatprep.subr.mxu0 0.0
  %1315 = vmatpush1.msra.mxu0 0.0
  %1316 = vmatprep.subr.mxu0 0.0
  %1317 = vmatpush1.msra.mxu0 0.0
  %1318 = vmatprep.subr.mxu0 0.0
  %1319 = vmatpush1.msra.mxu0 0.0
  %1320 = vmatprep.subr.mxu0 0.0
  %1321 = vmatpush1.msra.mxu0 0.0
  %1322 = vmatprep.subr.mxu0 0.0
  %1323 = vmatpush1.msra.mxu0 0.0
  %1324 = vmatprep.subr.mxu0 0.0
  %1325 = vmatpush1.msra.mxu0 0.0
  %1326 = vmatprep.subr.mxu0 0.0
  %1327 = vmatpush1.msra.mxu0 0.0
  %1328 = vmatprep.subr.mxu0 0.0
  %1329 = vmatpush1.msra.mxu0 0.0
  %1330 = vmatprep.subr.mxu0 0.0
  %1331 = vmatpush1.msra.mxu0 0.0
  %1332 = vmatprep.subr.mxu0 0.0
  %1333 = vmatpush1.msra.mxu0 0.0
  %1334 = vmatprep.subr.mxu0 0.0
  %1335 = vmatpush1.msra.mxu0 0.0
  %1336 = vmatprep.subr.mxu0 0.0
  %1337 = vmatpush1.msra.mxu0 0.0
  %1338 = vmatprep.subr.mxu0 0.0
  %1339 = vmatpush1.msra.mxu0 0.0
  %1340 = vmatprep.subr.mxu0 0.0
  %1341 = vmatpush1.msra.mxu0 0.0
  %1342 = vmatprep.subr.mxu0 0.0
  %1343 = vmatpush1.msra.mxu0 0.0
  %1344 = vmatprep.subr.mxu0 0.0
  %1345 = vmatpush1.msra.mxu0 0.0
  %1346 = vmatprep.subr.mxu0 0.0
  %1347 = vmatpush1.msra.mxu0 0.0
  %1348 = vmatprep.subr.mxu0 0.0
  %1349 = vmatpush1.msra.mxu0 0.0
  %1350 = vmatprep.subr.mxu0 0.0
  %1351 = vmatpush1.msra.mxu0 0.0
  %1352 = vmatprep.subr.mxu0 0.0
  %1353 = vmatpush1.msra.mxu0 0.0
  %1354 = vmatprep.subr.mxu0 0.0
  %1355 = vmatpush1.msra.mxu0 0.0
  %1356 = vmatprep.subr.mxu0 0.0
  %1357 = vmatpush1.msra.mxu0 0.0
  %1358 = vmatprep.subr.mxu0 0.0
  %1359 = vmatpush1.msra.mxu0 0.0
  %1360 = vmatprep.subr.mxu0 0.0
  %1361 = vmatpush1.msra.mxu0 0.0
  %1362 = vmatprep.subr.mxu0 0.0
  %1363 = vmatpush1.msra.mxu0 0.0
  %1364 = vmatprep.mubr.f32.mxu0 0.0
  %1365 = vmatmul.mubr.f32.gmra.mrb[0].mxu0 %v1296
  %v1366 = vpop.f32.mrb[0].mxu0
  %v1367 = vadd.f32 0.0, %v1366
  %v1368 = vpop.f32.mrb[0].mxu0
  %1369 = vmatprep.mubr.f32.mxu0 0.0
  %1370 = vmatmul.mubr.f32.gmra.mrb[0].mxu0 %v1298
  %v1371 = vpop.f32.mrb[0].mxu0
  %v1372 = vadd.f32 0.0, %v1371
  %v1373 = vpop.f32.mrb[0].mxu0
  %1374 = vdwg.mxu0
  %v1375 = vadd.f32 %v1294, %v1367
  %v1376 = vadd.f32 %v1295, %v1372
  %v1377 = vxor.u32 %v1375, 2147483648
  %v1378 = vxor.u32 %v1376, 2147483648
  %v1379 = vmul.f32 %v1377, 1.442695
  %v1380 = vpow.pop %v1379
  %v1381 = vmul.f32 %v1378, 1.442695
  %v1382 = vpow.pop %v1381
  %v1383 = vadd.f32 %v1380, 1.0
  %v1384 = vadd.f32 %v1382, 1.0
  %v1385 = vrcp.pop %v1383
  %v1386 = vmul.f32 1.0, %v1385
  %v1387 = vrcp.pop %v1384
  %v1388 = vmul.f32 1.0, %v1387
  %v1389 = vtanh.pop %v1375
  %v1390 = vtanh.pop %v1376
  %v1391 = vmul.f32 %v1386, %v1268
  %v1392 = vmul.f32 %v1388, %v1269
  %1395 = vrot.lane.b32.xlu0 %v1389, 64
  %v1396 = vpop.permute.xlu0 %1395
  %1397 = vrot.lane.b32.xlu0 %v1390, 64
  %v1398 = vpop.permute.xlu0 %1397
  %v1401 = vmul.f32 %v1386, %v1396
  %v1402 = vmul.f32 %v1388, %v1398
  %1405 = vrot.lane.b32.xlu0 %v1401, 32
  %v1406 = vpop.permute.xlu0 %1405
  %1407 = vrot.lane.b32.xlu0 %v1402, 32
  %v1408 = vpop.permute.xlu0 %1407
  %v1411 = vadd.f32 %v1391, %v1406
  %v1412 = vadd.f32 %v1392, %v1408
  %v1413 = vtanh.pop %v1411
  %v1414 = vtanh.pop %v1412
  %1417 = vrot.lane.b32.xlu0 %v1413, 64
  %v1418 = vpop.permute.xlu0 %1417
  %1419 = vrot.lane.b32.xlu0 %v1414, 64
  %v1420 = vpop.permute.xlu0 %1419
  %v1423 = vmul.f32 %v1386, %v1418
  %v1424 = vmul.f32 %v1388, %v1420
  %1427 = vrot.lane.b32.xlu0 %v1423, 32
  %v1428 = vpop.permute.xlu0 %1427
  %1429 = vrot.lane.b32.xlu0 %v1424, 32
  %v1430 = vpop.permute.xlu0 %1429
  %s1433 = scalar_lea.vmem [#allocation2], 112
  %1434 = vst.msk [vmem:[%s1433] sm:$0xff] %vm296, %v1428
  %1435 = vst.msk [vmem:[%s1433 + $0x8] sm:$0xff] %vm296, %v1430
  %1436 = vst.msk [vmem:[%s16] sm:$0xff] %vm296, %v1428
  %1437 = vst.msk [vmem:[%s16 + $0x8] sm:$0xff] %vm296, %v1430
  %1440 = vrot.lane.b32.xlu0 %v1411, 96
  %v1441 = vpop.permute.xlu0 %1440
  %1442 = vrot.lane.b32.xlu0 %v1412, 96
  %v1443 = vpop.permute.xlu0 %1442
  %1446 = vst.msk [vmem:[%s17] sm:$0xff] %vm296, %v1441
  %1447 = vst.msk [vmem:[%s17 + $0x8] sm:$0xff] %vm296, %v1443
  %v1448 = vld [vmem:[#allocation2] sm:$0xff]
  %v1449 = vld [vmem:[#allocation2 + $0x8] sm:$0xff]
  %v1450 = vld [vmem:[#allocation2 + $0x10] sm:$0xff]
  %v1451 = vld [vmem:[#allocation2 + $0x18] sm:$0xff]
  %v1452 = vld [vmem:[#allocation2 + $0x20] sm:$0xff]
  %v1453 = vld [vmem:[#allocation2 + $0x28] sm:$0xff]
  %v1454 = vld [vmem:[#allocation2 + $0x30] sm:$0xff]
  %v1455 = vld [vmem:[#allocation2 + $0x38] sm:$0xff]
  %v1456 = vld [vmem:[#allocation2 + $0x40] sm:$0xff]
  %v1457 = vld [vmem:[#allocation2 + $0x48] sm:$0xff]
  %v1458 = vld [vmem:[#allocation2 + $0x50] sm:$0xff]
  %v1459 = vld [vmem:[#allocation2 + $0x58] sm:$0xff]
  %v1460 = vld [vmem:[#allocation2 + $0x60] sm:$0xff]
  %v1461 = vld [vmem:[#allocation2 + $0x68] sm:$0xff]
  %v1462 = vld [vmem:[#allocation2 + $0x70] sm:$0xff]
  %v1463 = vld [vmem:[#allocation2 + $0x78] sm:$0xff]
  %v1464 = vld [vmem:[%s4] sm:$0xff]
  %v1465 = vld [vmem:[%s4 + $0x8] sm:$0xff]
  %v1466 = vld [vmem:[%s4 + $0x10] sm:$0xff]
  %v1467 = vld [vmem:[%s4 + $0x18] sm:$0xff]
  %v1468 = vld [vmem:[%s6] sm:$0x1]
  %v1470 = vlaneseq
  %v1471 = vshrl.u32 %v1470, 7
  %v1472 = vsub.s32 0, %v1471
  %v1473 = vrot.slane %v1468, %v1472
  %v1476 = vsel %vm296, %v1448, 0
  %v1479 = vsel %vm296, %v1449, 0
  %v1482 = vsel %vm296, %v1450, 0
  %v1485 = vsel %vm296, %v1451, 0
  %v1488 = vsel %vm296, %v1452, 0
  %v1491 = vsel %vm296, %v1453, 0
  %v1494 = vsel %vm296, %v1454, 0
  %v1497 = vsel %vm296, %v1455, 0
  %v1500 = vsel %vm296, %v1456, 0
  %v1503 = vsel %vm296, %v1457, 0
  %v1506 = vsel %vm296, %v1458, 0
  %v1509 = vsel %vm296, %v1459, 0
  %v1512 = vsel %vm296, %v1460, 0
  %v1515 = vsel %vm296, %v1461, 0
  %v1518 = vsel %vm296, %v1462, 0
  %v1521 = vsel %vm296, %v1463, 0
  %1523 = vmatprep.subr.mxu0 0.0
  %1524 = vmatpush1.msra.mxu0 %v1464
  %1525 = vmatprep.subr.mxu0 0.0
  %1526 = vmatpush1.msra.mxu0 %v1465
  %1527 = vmatprep.subr.mxu0 0.0
  %1528 = vmatpush1.msra.mxu0 %v1466
  %1529 = vmatprep.subr.mxu0 0.0
  %1530 = vmatpush1.msra.mxu0 %v1467
  %1531 = vmatprep.subr.mxu0 0.0
  %1532 = vmatpush1.msra.mxu0 0.0
  %1533 = vmatprep.subr.mxu0 0.0
  %1534 = vmatpush1.msra.mxu0 0.0
  %1535 = vmatprep.subr.mxu0 0.0
  %1536 = vmatpush1.msra.mxu0 0.0
  %1537 = vmatprep.subr.mxu0 0.0
  %1538 = vmatpush1.msra.mxu0 0.0
  %1539 = vmatprep.subr.mxu0 0.0
  %1540 = vmatpush1.msra.mxu0 0.0
  %1541 = vmatprep.subr.mxu0 0.0
  %1542 = vmatpush1.msra.mxu0 0.0
  %1543 = vmatprep.subr.mxu0 0.0
  %1544 = vmatpush1.msra.mxu0 0.0
  %1545 = vmatprep.subr.mxu0 0.0
  %1546 = vmatpush1.msra.mxu0 0.0
  %1547 = vmatprep.subr.mxu0 0.0
  %1548 = vmatpush1.msra.mxu0 0.0
  %1549 = vmatprep.subr.mxu0 0.0
  %1550 = vmatpush1.msra.mxu0 0.0
  %1551 = vmatprep.subr.mxu0 0.0
  %1552 = vmatpush1.msra.mxu0 0.0
  %1553 = vmatprep.subr.mxu0 0.0
  %1554 = vmatpush1.msra.mxu0 0.0
  %1555 = vmatprep.subr.mxu0 0.0
  %1556 = vmatpush1.msra.mxu0 0.0
  %1557 = vmatprep.subr.mxu0 0.0
  %1558 = vmatpush1.msra.mxu0 0.0
  %1559 = vmatprep.subr.mxu0 0.0
  %1560 = vmatpush1.msra.mxu0 0.0
  %1561 = vmatprep.subr.mxu0 0.0
  %1562 = vmatpush1.msra.mxu0 0.0
  %1563 = vmatprep.subr.mxu0 0.0
  %1564 = vmatpush1.msra.mxu0 0.0
  %1565 = vmatprep.subr.mxu0 0.0
  %1566 = vmatpush1.msra.mxu0 0.0
  %1567 = vmatprep.subr.mxu0 0.0
  %1568 = vmatpush1.msra.mxu0 0.0
  %1569 = vmatprep.subr.mxu0 0.0
  %1570 = vmatpush1.msra.mxu0 0.0
  %1571 = vmatprep.subr.mxu0 0.0
  %1572 = vmatpush1.msra.mxu0 0.0
  %1573 = vmatprep.subr.mxu0 0.0
  %1574 = vmatpush1.msra.mxu0 0.0
  %1575 = vmatprep.subr.mxu0 0.0
  %1576 = vmatpush1.msra.mxu0 0.0
  %1577 = vmatprep.subr.mxu0 0.0
  %1578 = vmatpush1.msra.mxu0 0.0
  %1579 = vmatprep.subr.mxu0 0.0
  %1580 = vmatpush1.msra.mxu0 0.0
  %1581 = vmatprep.subr.mxu0 0.0
  %1582 = vmatpush1.msra.mxu0 0.0
  %1583 = vmatprep.subr.mxu0 0.0
  %1584 = vmatpush1.msra.mxu0 0.0
  %1585 = vmatprep.subr.mxu0 0.0
  %1586 = vmatpush1.msra.mxu0 0.0
  %1587 = vmatprep.mubr.f32.mxu0 0.0
  %1588 = vmatmul.mubr.f32.gmra.mrb[0].mxu0 %v1476
  %v1589 = vpop.f32.mrb[0].mxu0
  %v1590 = vadd.f32 %v1473, %v1589
  %v1591 = vpop.f32.mrb[0].mxu0
  %1592 = vmatprep.mubr.f32.mxu0 0.0
  %1593 = vmatmul.mubr.f32.gmra.mrb[0].mxu0 %v1479
  %v1594 = vpop.f32.mrb[0].mxu0
  %v1595 = vadd.f32 %v1473, %v1594
  %v1596 = vpop.f32.mrb[0].mxu0
  %1597 = vmatprep.mubr.f32.mxu0 0.0
  %1598 = vmatmul.mubr.f32.gmra.mrb[0].mxu0 %v1482
  %v1599 = vpop.f32.mrb[0].mxu0
  %v1600 = vadd.f32 %v1473, %v1599
  %v1601 = vpop.f32.mrb[0].mxu0
  %1602 = vmatprep.mubr.f32.mxu0 0.0
  %1603 = vmatmul.mubr.f32.gmra.mrb[0].mxu0 %v1485
  %v1604 = vpop.f32.mrb[0].mxu0
  %v1605 = vadd.f32 %v1473, %v1604
  %v1606 = vpop.f32.mrb[0].mxu0
  %1607 = vmatprep.mubr.f32.mxu0 0.0
  %1608 = vmatmul.mubr.f32.gmra.mrb[0].mxu0 %v1488
  %v1609 = vpop.f32.mrb[0].mxu0
  %v1610 = vadd.f32 %v1473, %v1609
  %v1611 = vpop.f32.mrb[0].mxu0
  %1612 = vmatprep.mubr.f32.mxu0 0.0
  %1613 = vmatmul.mubr.f32.gmra.mrb[0].mxu0 %v1491
  %v1614 = vpop.f32.mrb[0].mxu0
  %v1615 = vadd.f32 %v1473, %v1614
  %v1616 = vpop.f32.mrb[0].mxu0
  %1617 = vmatprep.mubr.f32.mxu0 0.0
  %1618 = vmatmul.mubr.f32.gmra.mrb[0].mxu0 %v1494
  %v1619 = vpop.f32.mrb[0].mxu0
  %v1620 = vadd.f32 %v1473, %v1619
  %v1621 = vpop.f32.mrb[0].mxu0
  %1622 = vmatprep.mubr.f32.mxu0 0.0
  %1623 = vmatmul.mubr.f32.gmra.mrb[0].mxu0 %v1497
  %v1624 = vpop.f32.mrb[0].mxu0
  %v1625 = vadd.f32 %v1473, %v1624
  %v1626 = vpop.f32.mrb[0].mxu0
  %1627 = vmatprep.mubr.f32.mxu0 0.0
  %1628 = vmatmul.mubr.f32.gmra.mrb[0].mxu0 %v1500
  %v1629 = vpop.f32.mrb[0].mxu0
  %v1630 = vadd.f32 %v1473, %v1629
  %v1631 = vpop.f32.mrb[0].mxu0
  %1632 = vmatprep.mubr.f32.mxu0 0.0
  %1633 = vmatmul.mubr.f32.gmra.mrb[0].mxu0 %v1503
  %v1634 = vpop.f32.mrb[0].mxu0
  %v1635 = vadd.f32 %v1473, %v1634
  %v1636 = vpop.f32.mrb[0].mxu0
  %1637 = vmatprep.mubr.f32.mxu0 0.0
  %1638 = vmatmul.mubr.f32.gmra.mrb[0].mxu0 %v1506
  %v1639 = vpop.f32.mrb[0].mxu0
  %v1640 = vadd.f32 %v1473, %v1639
  %v1641 = vpop.f32.mrb[0].mxu0
  %1642 = vmatprep.mubr.f32.mxu0 0.0
  %1643 = vmatmul.mubr.f32.gmra.mrb[0].mxu0 %v1509
  %v1644 = vpop.f32.mrb[0].mxu0
  %v1645 = vadd.f32 %v1473, %v1644
  %v1646 = vpop.f32.mrb[0].mxu0
  %1647 = vmatprep.mubr.f32.mxu0 0.0
  %1648 = vmatmul.mubr.f32.gmra.mrb[0].mxu0 %v1512
  %v1649 = vpop.f32.mrb[0].mxu0
  %v1650 = vadd.f32 %v1473, %v1649
  %v1651 = vpop.f32.mrb[0].mxu0
  %1652 = vmatprep.mubr.f32.mxu0 0.0
  %1653 = vmatmul.mubr.f32.gmra.mrb[0].mxu0 %v1515
  %v1654 = vpop.f32.mrb[0].mxu0
  %v1655 = vadd.f32 %v1473, %v1654
  %v1656 = vpop.f32.mrb[0].mxu0
  %1657 = vmatprep.mubr.f32.mxu0 0.0
  %1658 = vmatmul.mubr.f32.gmra.mrb[0].mxu0 %v1518
  %v1659 = vpop.f32.mrb[0].mxu0
  %v1660 = vadd.f32 %v1473, %v1659
  %v1661 = vpop.f32.mrb[0].mxu0
  %1662 = vmatprep.mubr.f32.mxu0 0.0
  %1663 = vmatmul.mubr.f32.gmra.mrb[0].mxu0 %v1521
  %v1664 = vpop.f32.mrb[0].mxu0
  %v1665 = vadd.f32 %v1473, %v1664
  %v1666 = vpop.f32.mrb[0].mxu0
  %1667 = vdwg.mxu0
  %1668 = vst [vmem:[#allocation3] sm:$0xff] %v1590
  %1669 = vst [vmem:[#allocation3 + $0x8] sm:$0xff] %v1595
  %1670 = vst [vmem:[#allocation3 + $0x10] sm:$0xff] %v1600
  %1671 = vst [vmem:[#allocation3 + $0x18] sm:$0xff] %v1605
  %1672 = vst [vmem:[#allocation3 + $0x20] sm:$0xff] %v1610
  %1673 = vst [vmem:[#allocation3 + $0x28] sm:$0xff] %v1615
  %1674 = vst [vmem:[#allocation3 + $0x30] sm:$0xff] %v1620
  %1675 = vst [vmem:[#allocation3 + $0x38] sm:$0xff] %v1625
  %1676 = vst [vmem:[#allocation3 + $0x40] sm:$0xff] %v1630
  %1677 = vst [vmem:[#allocation3 + $0x48] sm:$0xff] %v1635
  %1678 = vst [vmem:[#allocation3 + $0x50] sm:$0xff] %v1640
  %1679 = vst [vmem:[#allocation3 + $0x58] sm:$0xff] %v1645
  %1680 = vst [vmem:[#allocation3 + $0x60] sm:$0xff] %v1650
  %1681 = vst [vmem:[#allocation3 + $0x68] sm:$0xff] %v1655
  %1682 = vst [vmem:[#allocation3 + $0x70] sm:$0xff] %v1660
  %1683 = vst [vmem:[#allocation3 + $0x78] sm:$0xff] %v1665
  %v1684 = vld [vmem:[%s5] sm:$0xff]
  %v1685 = vld [vmem:[%s5 + $0x8] sm:$0xff]
  %v1686 = vld [vmem:[%s5 + $0x10] sm:$0xff]
  %v1687 = vld [vmem:[%s5 + $0x18] sm:$0xff]
  %v1688 = vld [vmem:[#allocation3] sm:$0xff]
  %v1689 = vld [vmem:[#allocation3 + $0x8] sm:$0xff]
  %1690 = vmatprep.subr.mxu0 0.0
  %1691 = vmatpush1.msra.mxu0 %v1684
  %1692 = vmatprep.subr.mxu0 0.0
  %1693 = vmatpush1.msra.mxu0 %v1685
  %1694 = vmatprep.subr.mxu0 0.0
  %1695 = vmatpush1.msra.mxu0 %v1686
  %1696 = vmatprep.subr.mxu0 0.0
  %1697 = vmatpush1.msra.mxu0 %v1687
  %1698 = vmatprep.subr.mxu0 0.0
  %1699 = vmatpush1.msra.mxu0 0.0
  %1700 = vmatprep.subr.mxu0 0.0
  %1701 = vmatpush1.msra.mxu0 0.0
  %1702 = vmatprep.subr.mxu0 0.0
  %1703 = vmatpush1.msra.mxu0 0.0
  %1704 = vmatprep.subr.mxu0 0.0
  %1705 = vmatpush1.msra.mxu0 0.0
  %1706 = vmatprep.subr.mxu0 0.0
  %1707 = vmatpush1.msra.mxu0 0.0
  %1708 = vmatprep.subr.mxu0 0.0
  %1709 = vmatpush1.msra.mxu0 0.0
  %1710 = vmatprep.subr.mxu0 0.0
  %1711 = vmatpush1.msra.mxu0 0.0
  %1712 = vmatprep.subr.mxu0 0.0
  %1713 = vmatpush1.msra.mxu0 0.0
  %1714 = vmatprep.subr.mxu0 0.0
  %1715 = vmatpush1.msra.mxu0 0.0
  %1716 = vmatprep.subr.mxu0 0.0
  %1717 = vmatpush1.msra.mxu0 0.0
  %1718 = vmatprep.subr.mxu0 0.0
  %1719 = vmatpush1.msra.mxu0 0.0
  %1720 = vmatprep.subr.mxu0 0.0
  %1721 = vmatpush1.msra.mxu0 0.0
  %1722 = vmatprep.subr.mxu0 0.0
  %1723 = vmatpush1.msra.mxu0 0.0
  %1724 = vmatprep.subr.mxu0 0.0
  %1725 = vmatpush1.msra.mxu0 0.0
  %1726 = vmatprep.subr.mxu0 0.0
  %1727 = vmatpush1.msra.mxu0 0.0
  %1728 = vmatprep.subr.mxu0 0.0
  %1729 = vmatpush1.msra.mxu0 0.0
  %1730 = vmatprep.subr.mxu0 0.0
  %1731 = vmatpush1.msra.mxu0 0.0
  %1732 = vmatprep.subr.mxu0 0.0
  %1733 = vmatpush1.msra.mxu0 0.0
  %1734 = vmatprep.subr.mxu0 0.0
  %1735 = vmatpush1.msra.mxu0 0.0
  %1736 = vmatprep.subr.mxu0 0.0
  %1737 = vmatpush1.msra.mxu0 0.0
  %1738 = vmatprep.subr.mxu0 0.0
  %1739 = vmatpush1.msra.mxu0 0.0
  %1740 = vmatprep.subr.mxu0 0.0
  %1741 = vmatpush1.msra.mxu0 0.0
  %1742 = vmatprep.subr.mxu0 0.0
  %1743 = vmatpush1.msra.mxu0 0.0
  %1744 = vmatprep.subr.mxu0 0.0
  %1745 = vmatpush1.msra.mxu0 0.0
  %1746 = vmatprep.subr.mxu0 0.0
  %1747 = vmatpush1.msra.mxu0 0.0
  %1748 = vmatprep.subr.mxu0 0.0
  %1749 = vmatpush1.msra.mxu0 0.0
  %1750 = vmatprep.subr.mxu0 0.0
  %1751 = vmatpush1.msra.mxu0 0.0
  %1752 = vmatprep.subr.mxu0 0.0
  %1753 = vmatpush1.msra.mxu0 0.0
  %1754 = vmatprep.mubr.f32.mxu0 0.0
  %1755 = vmatmul.mubr.f32.gmra.mrb[0].mxu0 %v298
  %v1756 = vpop.f32.mrb[0].mxu0
  %v1757 = vadd.f32 0.0, %v1756
  %v1758 = vpop.f32.mrb[0].mxu0
  %1759 = vmatprep.mubr.f32.mxu0 0.0
  %1760 = vmatmul.mubr.f32.gmra.mrb[0].mxu0 %v298
  %v1761 = vpop.f32.mrb[0].mxu0
  %v1762 = vadd.f32 0.0, %v1761
  %v1763 = vpop.f32.mrb[0].mxu0
  %1764 = vdwg.mxu0
  %v1765 = vadd.f32 %v1688, %v1757
  %v1766 = vadd.f32 %v1689, %v1762
  %v1767 = vxor.u32 %v1765, 2147483648
  %v1768 = vxor.u32 %v1766, 2147483648
  %v1769 = vmul.f32 %v1767, 1.442695
  %v1770 = vpow.pop %v1769
  %v1771 = vmul.f32 %v1768, 1.442695
  %v1772 = vpow.pop %v1771
  %v1773 = vadd.f32 %v1770, 1.0
  %v1774 = vadd.f32 %v1772, 1.0
  %v1775 = vrcp.pop %v1773
  %v1776 = vmul.f32 1.0, %v1775
  %v1777 = vrcp.pop %v1774
  %v1778 = vmul.f32 1.0, %v1777
  %v1779 = vtanh.pop %v1765
  %v1780 = vtanh.pop %v1766
  %v1781 = vmul.f32 %v1776, 0.0
  %v1782 = vmul.f32 %v1778, 0.0
  %1785 = vrot.lane.b32.xlu0 %v1779, 64
  %v1786 = vpop.permute.xlu0 %1785
  %1787 = vrot.lane.b32.xlu0 %v1780, 64
  %v1788 = vpop.permute.xlu0 %1787
  %v1791 = vmul.f32 %v1776, %v1786
  %v1792 = vmul.f32 %v1778, %v1788
  %1795 = vrot.lane.b32.xlu0 %v1791, 32
  %v1796 = vpop.permute.xlu0 %1795
  %1797 = vrot.lane.b32.xlu0 %v1792, 32
  %v1798 = vpop.permute.xlu0 %1797
  %v1801 = vadd.f32 %v1781, %v1796
  %v1802 = vadd.f32 %v1782, %v1798
  %v1803 = vtanh.pop %v1801
  %v1804 = vtanh.pop %v1802
  %1807 = vrot.lane.b32.xlu0 %v1803, 64
  %v1808 = vpop.permute.xlu0 %1807
  %1809 = vrot.lane.b32.xlu0 %v1804, 64
  %v1810 = vpop.permute.xlu0 %1809
  %v1813 = vmul.f32 %v1776, %v1808
  %v1814 = vmul.f32 %v1778, %v1810
  %v1815 = vld [vmem:[%s435] sm:$0xff]
  %v1816 = vld [vmem:[%s435 + $0x8] sm:$0xff]
  %1819 = vrot.lane.b32.xlu0 %v1813, 32
  %v1820 = vpop.permute.xlu0 %1819
  %1821 = vrot.lane.b32.xlu0 %v1814, 32
  %v1822 = vpop.permute.xlu0 %1821
  %v1823 = vsel %vm296, %v1820, 0
  %v1825 = vsel %vm296, %v1822, 0
  %1827 = vmatprep.subr.mxu0 0.0
  %1828 = vmatpush1.msra.mxu0 %v1684
  %1829 = vmatprep.subr.mxu0 0.0
  %1830 = vmatpush1.msra.mxu0 %v1685
  %1831 = vmatprep.subr.mxu0 0.0
  %1832 = vmatpush1.msra.mxu0 %v1686
  %1833 = vmatprep.subr.mxu0 0.0
  %1834 = vmatpush1.msra.mxu0 %v1687
  %1835 = vmatprep.subr.mxu0 0.0
  %1836 = vmatpush1.msra.mxu0 0.0
  %1837 = vmatprep.subr.mxu0 0.0
  %1838 = vmatpush1.msra.mxu0 0.0
  %1839 = vmatprep.subr.mxu0 0.0
  %1840 = vmatpush1.msra.mxu0 0.0
  %1841 = vmatprep.subr.mxu0 0.0
  %1842 = vmatpush1.msra.mxu0 0.0
  %1843 = vmatprep.subr.mxu0 0.0
  %1844 = vmatpush1.msra.mxu0 0.0
  %1845 = vmatprep.subr.mxu0 0.0
  %1846 = vmatpush1.msra.mxu0 0.0
  %1847 = vmatprep.subr.mxu0 0.0
  %1848 = vmatpush1.msra.mxu0 0.0
  %1849 = vmatprep.subr.mxu0 0.0
  %1850 = vmatpush1.msra.mxu0 0.0
  %1851 = vmatprep.subr.mxu0 0.0
  %1852 = vmatpush1.msra.mxu0 0.0
  %1853 = vmatprep.subr.mxu0 0.0
  %1854 = vmatpush1.msra.mxu0 0.0
  %1855 = vmatprep.subr.mxu0 0.0
  %1856 = vmatpush1.msra.mxu0 0.0
  %1857 = vmatprep.subr.mxu0 0.0
  %1858 = vmatpush1.msra.mxu0 0.0
  %1859 = vmatprep.subr.mxu0 0.0
  %1860 = vmatpush1.msra.mxu0 0.0
  %1861 = vmatprep.subr.mxu0 0.0
  %1862 = vmatpush1.msra.mxu0 0.0
  %1863 = vmatprep.subr.mxu0 0.0
  %1864 = vmatpush1.msra.mxu0 0.0
  %1865 = vmatprep.subr.mxu0 0.0
  %1866 = vmatpush1.msra.mxu0 0.0
  %1867 = vmatprep.subr.mxu0 0.0
  %1868 = vmatpush1.msra.mxu0 0.0
  %1869 = vmatprep.subr.mxu0 0.0
  %1870 = vmatpush1.msra.mxu0 0.0
  %1871 = vmatprep.subr.mxu0 0.0
  %1872 = vmatpush1.msra.mxu0 0.0
  %1873 = vmatprep.subr.mxu0 0.0
  %1874 = vmatpush1.msra.mxu0 0.0
  %1875 = vmatprep.subr.mxu0 0.0
  %1876 = vmatpush1.msra.mxu0 0.0
  %1877 = vmatprep.subr.mxu0 0.0
  %1878 = vmatpush1.msra.mxu0 0.0
  %1879 = vmatprep.subr.mxu0 0.0
  %1880 = vmatpush1.msra.mxu0 0.0
  %1881 = vmatprep.subr.mxu0 0.0
  %1882 = vmatpush1.msra.mxu0 0.0
  %1883 = vmatprep.subr.mxu0 0.0
  %1884 = vmatpush1.msra.mxu0 0.0
  %1885 = vmatprep.subr.mxu0 0.0
  %1886 = vmatpush1.msra.mxu0 0.0
  %1887 = vmatprep.subr.mxu0 0.0
  %1888 = vmatpush1.msra.mxu0 0.0
  %1889 = vmatprep.subr.mxu0 0.0
  %1890 = vmatpush1.msra.mxu0 0.0
  %1891 = vmatprep.mubr.f32.mxu0 0.0
  %1892 = vmatmul.mubr.f32.gmra.mrb[0].mxu0 %v1823
  %v1893 = vpop.f32.mrb[0].mxu0
  %v1894 = vadd.f32 0.0, %v1893
  %v1895 = vpop.f32.mrb[0].mxu0
  %1896 = vmatprep.mubr.f32.mxu0 0.0
  %1897 = vmatmul.mubr.f32.gmra.mrb[0].mxu0 %v1825
  %v1898 = vpop.f32.mrb[0].mxu0
  %v1899 = vadd.f32 0.0, %v1898
  %v1900 = vpop.f32.mrb[0].mxu0
  %1901 = vdwg.mxu0
  %v1902 = vadd.f32 %v1815, %v1894
  %v1903 = vadd.f32 %v1816, %v1899
  %v1904 = vxor.u32 %v1902, 2147483648
  %v1905 = vxor.u32 %v1903, 2147483648
  %v1906 = vmul.f32 %v1904, 1.442695
  %v1907 = vpow.pop %v1906
  %v1908 = vmul.f32 %v1905, 1.442695
  %v1909 = vpow.pop %v1908
  %v1910 = vadd.f32 %v1907, 1.0
  %v1911 = vadd.f32 %v1909, 1.0
  %v1912 = vrcp.pop %v1910
  %v1913 = vmul.f32 1.0, %v1912
  %v1914 = vrcp.pop %v1911
  %v1915 = vmul.f32 1.0, %v1914
  %v1916 = vtanh.pop %v1902
  %v1917 = vtanh.pop %v1903
  %v1918 = vmul.f32 %v1913, %v1801
  %v1919 = vmul.f32 %v1915, %v1802
  %1922 = vrot.lane.b32.xlu0 %v1916, 64
  %v1923 = vpop.permute.xlu0 %1922
  %1924 = vrot.lane.b32.xlu0 %v1917, 64
  %v1925 = vpop.permute.xlu0 %1924
  %v1928 = vmul.f32 %v1913, %v1923
  %v1929 = vmul.f32 %v1915, %v1925
  %1932 = vrot.lane.b32.xlu0 %v1928, 32
  %v1933 = vpop.permute.xlu0 %1932
  %1934 = vrot.lane.b32.xlu0 %v1929, 32
  %v1935 = vpop.permute.xlu0 %1934
  %v1938 = vadd.f32 %v1918, %v1933
  %v1939 = vadd.f32 %v1919, %v1935
  %v1940 = vtanh.pop %v1938
  %v1941 = vtanh.pop %v1939
  %1944 = vrot.lane.b32.xlu0 %v1940, 64
  %v1945 = vpop.permute.xlu0 %1944
  %1946 = vrot.lane.b32.xlu0 %v1941, 64
  %v1947 = vpop.permute.xlu0 %1946
  %v1950 = vmul.f32 %v1913, %v1945
  %v1951 = vmul.f32 %v1915, %v1947
  %v1952 = vld [vmem:[%s578] sm:$0xff]
  %v1953 = vld [vmem:[%s578 + $0x8] sm:$0xff]
  %1956 = vrot.lane.b32.xlu0 %v1950, 32
  %v1957 = vpop.permute.xlu0 %1956
  %1958 = vrot.lane.b32.xlu0 %v1951, 32
  %v1959 = vpop.permute.xlu0 %1958
  %v1960 = vsel %vm296, %v1957, 0
  %v1962 = vsel %vm296, %v1959, 0
  %1964 = vmatprep.subr.mxu0 0.0
  %1965 = vmatpush1.msra.mxu0 %v1684
  %1966 = vmatprep.subr.mxu0 0.0
  %1967 = vmatpush1.msra.mxu0 %v1685
  %1968 = vmatprep.subr.mxu0 0.0
  %1969 = vmatpush1.msra.mxu0 %v1686
  %1970 = vmatprep.subr.mxu0 0.0
  %1971 = vmatpush1.msra.mxu0 %v1687
  %1972 = vmatprep.subr.mxu0 0.0
  %1973 = vmatpush1.msra.mxu0 0.0
  %1974 = vmatprep.subr.mxu0 0.0
  %1975 = vmatpush1.msra.mxu0 0.0
  %1976 = vmatprep.subr.mxu0 0.0
  %1977 = vmatpush1.msra.mxu0 0.0
  %1978 = vmatprep.subr.mxu0 0.0
  %1979 = vmatpush1.msra.mxu0 0.0
  %1980 = vmatprep.subr.mxu0 0.0
  %1981 = vmatpush1.msra.mxu0 0.0
  %1982 = vmatprep.subr.mxu0 0.0
  %1983 = vmatpush1.msra.mxu0 0.0
  %1984 = vmatprep.subr.mxu0 0.0
  %1985 = vmatpush1.msra.mxu0 0.0
  %1986 = vmatprep.subr.mxu0 0.0
  %1987 = vmatpush1.msra.mxu0 0.0
  %1988 = vmatprep.subr.mxu0 0.0
  %1989 = vmatpush1.msra.mxu0 0.0
  %1990 = vmatprep.subr.mxu0 0.0
  %1991 = vmatpush1.msra.mxu0 0.0
  %1992 = vmatprep.subr.mxu0 0.0
  %1993 = vmatpush1.msra.mxu0 0.0
  %1994 = vmatprep.subr.mxu0 0.0
  %1995 = vmatpush1.msra.mxu0 0.0
  %1996 = vmatprep.subr.mxu0 0.0
  %1997 = vmatpush1.msra.mxu0 0.0
  %1998 = vmatprep.subr.mxu0 0.0
  %1999 = vmatpush1.msra.mxu0 0.0
  %2000 = vmatprep.subr.mxu0 0.0
  %2001 = vmatpush1.msra.mxu0 0.0
  %2002 = vmatprep.subr.mxu0 0.0
  %2003 = vmatpush1.msra.mxu0 0.0
  %2004 = vmatprep.subr.mxu0 0.0
  %2005 = vmatpush1.msra.mxu0 0.0
  %2006 = vmatprep.subr.mxu0 0.0
  %2007 = vmatpush1.msra.mxu0 0.0
  %2008 = vmatprep.subr.mxu0 0.0
  %2009 = vmatpush1.msra.mxu0 0.0
  %2010 = vmatprep.subr.mxu0 0.0
  %2011 = vmatpush1.msra.mxu0 0.0
  %2012 = vmatprep.subr.mxu0 0.0
  %2013 = vmatpush1.msra.mxu0 0.0
  %2014 = vmatprep.subr.mxu0 0.0
  %2015 = vmatpush1.msra.mxu0 0.0
  %2016 = vmatprep.subr.mxu0 0.0
  %2017 = vmatpush1.msra.mxu0 0.0
  %2018 = vmatprep.subr.mxu0 0.0
  %2019 = vmatpush1.msra.mxu0 0.0
  %2020 = vmatprep.subr.mxu0 0.0
  %2021 = vmatpush1.msra.mxu0 0.0
  %2022 = vmatprep.subr.mxu0 0.0
  %2023 = vmatpush1.msra.mxu0 0.0
  %2024 = vmatprep.subr.mxu0 0.0
  %2025 = vmatpush1.msra.mxu0 0.0
  %2026 = vmatprep.subr.mxu0 0.0
  %2027 = vmatpush1.msra.mxu0 0.0
  %2028 = vmatprep.mubr.f32.mxu0 0.0
  %2029 = vmatmul.mubr.f32.gmra.mrb[0].mxu0 %v1960
  %v2030 = vpop.f32.mrb[0].mxu0
  %v2031 = vadd.f32 0.0, %v2030
  %v2032 = vpop.f32.mrb[0].mxu0
  %2033 = vmatprep.mubr.f32.mxu0 0.0
  %2034 = vmatmul.mubr.f32.gmra.mrb[0].mxu0 %v1962
  %v2035 = vpop.f32.mrb[0].mxu0
  %v2036 = vadd.f32 0.0, %v2035
  %v2037 = vpop.f32.mrb[0].mxu0
  %2038 = vdwg.mxu0
  %v2039 = vadd.f32 %v1952, %v2031
  %v2040 = vadd.f32 %v1953, %v2036
  %v2041 = vxor.u32 %v2039, 2147483648
  %v2042 = vxor.u32 %v2040, 2147483648
  %v2043 = vmul.f32 %v2041, 1.442695
  %v2044 = vpow.pop %v2043
  %v2045 = vmul.f32 %v2042, 1.442695
  %v2046 = vpow.pop %v2045
  %v2047 = vadd.f32 %v2044, 1.0
  %v2048 = vadd.f32 %v2046, 1.0
  %v2049 = vrcp.pop %v2047
  %v2050 = vmul.f32 1.0, %v2049
  %v2051 = vrcp.pop %v2048
  %v2052 = vmul.f32 1.0, %v2051
  %v2053 = vtanh.pop %v2039
  %v2054 = vtanh.pop %v2040
  %v2055 = vmul.f32 %v2050, %v1938
  %v2056 = vmul.f32 %v2052, %v1939
  %2059 = vrot.lane.b32.xlu0 %v2053, 64
  %v2060 = vpop.permute.xlu0 %2059
  %2061 = vrot.lane.b32.xlu0 %v2054, 64
  %v2062 = vpop.permute.xlu0 %2061
  %v2065 = vmul.f32 %v2050, %v2060
  %v2066 = vmul.f32 %v2052, %v2062
  %2069 = vrot.lane.b32.xlu0 %v2065, 32
  %v2070 = vpop.permute.xlu0 %2069
  %2071 = vrot.lane.b32.xlu0 %v2066, 32
  %v2072 = vpop.permute.xlu0 %2071
  %v2075 = vadd.f32 %v2055, %v2070
  %v2076 = vadd.f32 %v2056, %v2072
  %v2077 = vtanh.pop %v2075
  %v2078 = vtanh.pop %v2076
  %2081 = vrot.lane.b32.xlu0 %v2077, 64
  %v2082 = vpop.permute.xlu0 %2081
  %2083 = vrot.lane.b32.xlu0 %v2078, 64
  %v2084 = vpop.permute.xlu0 %2083
  %v2087 = vmul.f32 %v2050, %v2082
  %v2088 = vmul.f32 %v2052, %v2084
  %v2089 = vld [vmem:[%s721] sm:$0xff]
  %v2090 = vld [vmem:[%s721 + $0x8] sm:$0xff]
  %2093 = vrot.lane.b32.xlu0 %v2087, 32
  %v2094 = vpop.permute.xlu0 %2093
  %2095 = vrot.lane.b32.xlu0 %v2088, 32
  %v2096 = vpop.permute.xlu0 %2095
  %v2097 = vsel %vm296, %v2094, 0
  %v2099 = vsel %vm296, %v2096, 0
  %2101 = vmatprep.subr.mxu0 0.0
  %2102 = vmatpush1.msra.mxu0 %v1684
  %2103 = vmatprep.subr.mxu0 0.0
  %2104 = vmatpush1.msra.mxu0 %v1685
  %2105 = vmatprep.subr.mxu0 0.0
  %2106 = vmatpush1.msra.mxu0 %v1686
  %2107 = vmatprep.subr.mxu0 0.0
  %2108 = vmatpush1.msra.mxu0 %v1687
  %2109 = vmatprep.subr.mxu0 0.0
  %2110 = vmatpush1.msra.mxu0 0.0
  %2111 = vmatprep.subr.mxu0 0.0
  %2112 = vmatpush1.msra.mxu0 0.0
  %2113 = vmatprep.subr.mxu0 0.0
  %2114 = vmatpush1.msra.mxu0 0.0
  %2115 = vmatprep.subr.mxu0 0.0
  %2116 = vmatpush1.msra.mxu0 0.0
  %2117 = vmatprep.subr.mxu0 0.0
  %2118 = vmatpush1.msra.mxu0 0.0
  %2119 = vmatprep.subr.mxu0 0.0
  %2120 = vmatpush1.msra.mxu0 0.0
  %2121 = vmatprep.subr.mxu0 0.0
  %2122 = vmatpush1.msra.mxu0 0.0
  %2123 = vmatprep.subr.mxu0 0.0
  %2124 = vmatpush1.msra.mxu0 0.0
  %2125 = vmatprep.subr.mxu0 0.0
  %2126 = vmatpush1.msra.mxu0 0.0
  %2127 = vmatprep.subr.mxu0 0.0
  %2128 = vmatpush1.msra.mxu0 0.0
  %2129 = vmatprep.subr.mxu0 0.0
  %2130 = vmatpush1.msra.mxu0 0.0
  %2131 = vmatprep.subr.mxu0 0.0
  %2132 = vmatpush1.msra.mxu0 0.0
  %2133 = vmatprep.subr.mxu0 0.0
  %2134 = vmatpush1.msra.mxu0 0.0
  %2135 = vmatprep.subr.mxu0 0.0
  %2136 = vmatpush1.msra.mxu0 0.0
  %2137 = vmatprep.subr.mxu0 0.0
  %2138 = vmatpush1.msra.mxu0 0.0
  %2139 = vmatprep.subr.mxu0 0.0
  %2140 = vmatpush1.msra.mxu0 0.0
  %2141 = vmatprep.subr.mxu0 0.0
  %2142 = vmatpush1.msra.mxu0 0.0
  %2143 = vmatprep.subr.mxu0 0.0
  %2144 = vmatpush1.msra.mxu0 0.0
  %2145 = vmatprep.subr.mxu0 0.0
  %2146 = vmatpush1.msra.mxu0 0.0
  %2147 = vmatprep.subr.mxu0 0.0
  %2148 = vmatpush1.msra.mxu0 0.0
  %2149 = vmatprep.subr.mxu0 0.0
  %2150 = vmatpush1.msra.mxu0 0.0
  %2151 = vmatprep.subr.mxu0 0.0
  %2152 = vmatpush1.msra.mxu0 0.0
  %2153 = vmatprep.subr.mxu0 0.0
  %2154 = vmatpush1.msra.mxu0 0.0
  %2155 = vmatprep.subr.mxu0 0.0
  %2156 = vmatpush1.msra.mxu0 0.0
  %2157 = vmatprep.subr.mxu0 0.0
  %2158 = vmatpush1.msra.mxu0 0.0
  %2159 = vmatprep.subr.mxu0 0.0
  %2160 = vmatpush1.msra.mxu0 0.0
  %2161 = vmatprep.subr.mxu0 0.0
  %2162 = vmatpush1.msra.mxu0 0.0
  %2163 = vmatprep.subr.mxu0 0.0
  %2164 = vmatpush1.msra.mxu0 0.0
  %2165 = vmatprep.mubr.f32.mxu0 0.0
  %2166 = vmatmul.mubr.f32.gmra.mrb[0].mxu0 %v2097
  %v2167 = vpop.f32.mrb[0].mxu0
  %v2168 = vadd.f32 0.0, %v2167
  %v2169 = vpop.f32.mrb[0].mxu0
  %2170 = vmatprep.mubr.f32.mxu0 0.0
  %2171 = vmatmul.mubr.f32.gmra.mrb[0].mxu0 %v2099
  %v2172 = vpop.f32.mrb[0].mxu0
  %v2173 = vadd.f32 0.0, %v2172
  %v2174 = vpop.f32.mrb[0].mxu0
  %2175 = vdwg.mxu0
  %v2176 = vadd.f32 %v2089, %v2168
  %v2177 = vadd.f32 %v2090, %v2173
  %v2178 = vxor.u32 %v2176, 2147483648
  %v2179 = vxor.u32 %v2177, 2147483648
  %v2180 = vmul.f32 %v2178, 1.442695
  %v2181 = vpow.pop %v2180
  %v2182 = vmul.f32 %v2179, 1.442695
  %v2183 = vpow.pop %v2182
  %v2184 = vadd.f32 %v2181, 1.0
  %v2185 = vadd.f32 %v2183, 1.0
  %v2186 = vrcp.pop %v2184
  %v2187 = vmul.f32 1.0, %v2186
  %v2188 = vrcp.pop %v2185
  %v2189 = vmul.f32 1.0, %v2188
  %v2190 = vtanh.pop %v2176
  %v2191 = vtanh.pop %v2177
  %v2192 = vmul.f32 %v2187, %v2075
  %v2193 = vmul.f32 %v2189, %v2076
  %2196 = vrot.lane.b32.xlu0 %v2190, 64
  %v2197 = vpop.permute.xlu0 %2196
  %2198 = vrot.lane.b32.xlu0 %v2191, 64
  %v2199 = vpop.permute.xlu0 %2198
  %v2202 = vmul.f32 %v2187, %v2197
  %v2203 = vmul.f32 %v2189, %v2199
  %2206 = vrot.lane.b32.xlu0 %v2202, 32
  %v2207 = vpop.permute.xlu0 %2206
  %2208 = vrot.lane.b32.xlu0 %v2203, 32
  %v2209 = vpop.permute.xlu0 %2208
  %v2212 = vadd.f32 %v2192, %v2207
  %v2213 = vadd.f32 %v2193, %v2209
  %v2214 = vtanh.pop %v2212
  %v2215 = vtanh.pop %v2213
  %2218 = vrot.lane.b32.xlu0 %v2214, 64
  %v2219 = vpop.permute.xlu0 %2218
  %2220 = vrot.lane.b32.xlu0 %v2215, 64
  %v2221 = vpop.permute.xlu0 %2220
  %v2224 = vmul.f32 %v2187, %v2219
  %v2225 = vmul.f32 %v2189, %v2221
  %v2226 = vld [vmem:[%s864] sm:$0xff]
  %v2227 = vld [vmem:[%s864 + $0x8] sm:$0xff]
  %2230 = vrot.lane.b32.xlu0 %v2224, 32
  %v2231 = vpop.permute.xlu0 %2230
  %2232 = vrot.lane.b32.xlu0 %v2225, 32
  %v2233 = vpop.permute.xlu0 %2232
  %v2234 = vsel %vm296, %v2231, 0
  %v2236 = vsel %vm296, %v2233, 0
  %2238 = vmatprep.subr.mxu0 0.0
  %2239 = vmatpush1.msra.mxu0 %v1684
  %2240 = vmatprep.subr.mxu0 0.0
  %2241 = vmatpush1.msra.mxu0 %v1685
  %2242 = vmatprep.subr.mxu0 0.0
  %2243 = vmatpush1.msra.mxu0 %v1686
  %2244 = vmatprep.subr.mxu0 0.0
  %2245 = vmatpush1.msra.mxu0 %v1687
  %2246 = vmatprep.subr.mxu0 0.0
  %2247 = vmatpush1.msra.mxu0 0.0
  %2248 = vmatprep.subr.mxu0 0.0
  %2249 = vmatpush1.msra.mxu0 0.0
  %2250 = vmatprep.subr.mxu0 0.0
  %2251 = vmatpush1.msra.mxu0 0.0
  %2252 = vmatprep.subr.mxu0 0.0
  %2253 = vmatpush1.msra.mxu0 0.0
  %2254 = vmatprep.subr.mxu0 0.0
  %2255 = vmatpush1.msra.mxu0 0.0
  %2256 = vmatprep.subr.mxu0 0.0
  %2257 = vmatpush1.msra.mxu0 0.0
  %2258 = vmatprep.subr.mxu0 0.0
  %2259 = vmatpush1.msra.mxu0 0.0
  %2260 = vmatprep.subr.mxu0 0.0
  %2261 = vmatpush1.msra.mxu0 0.0
  %2262 = vmatprep.subr.mxu0 0.0
  %2263 = vmatpush1.msra.mxu0 0.0
  %2264 = vmatprep.subr.mxu0 0.0
  %2265 = vmatpush1.msra.mxu0 0.0
  %2266 = vmatprep.subr.mxu0 0.0
  %2267 = vmatpush1.msra.mxu0 0.0
  %2268 = vmatprep.subr.mxu0 0.0
  %2269 = vmatpush1.msra.mxu0 0.0
  %2270 = vmatprep.subr.mxu0 0.0
  %2271 = vmatpush1.msra.mxu0 0.0
  %2272 = vmatprep.subr.mxu0 0.0
  %2273 = vmatpush1.msra.mxu0 0.0
  %2274 = vmatprep.subr.mxu0 0.0
  %2275 = vmatpush1.msra.mxu0 0.0
  %2276 = vmatprep.subr.mxu0 0.0
  %2277 = vmatpush1.msra.mxu0 0.0
  %2278 = vmatprep.subr.mxu0 0.0
  %2279 = vmatpush1.msra.mxu0 0.0
  %2280 = vmatprep.subr.mxu0 0.0
  %2281 = vmatpush1.msra.mxu0 0.0
  %2282 = vmatprep.subr.mxu0 0.0
  %2283 = vmatpush1.msra.mxu0 0.0
  %2284 = vmatprep.subr.mxu0 0.0
  %2285 = vmatpush1.msra.mxu0 0.0
  %2286 = vmatprep.subr.mxu0 0.0
  %2287 = vmatpush1.msra.mxu0 0.0
  %2288 = vmatprep.subr.mxu0 0.0
  %2289 = vmatpush1.msra.mxu0 0.0
  %2290 = vmatprep.subr.mxu0 0.0
  %2291 = vmatpush1.msra.mxu0 0.0
  %2292 = vmatprep.subr.mxu0 0.0
  %2293 = vmatpush1.msra.mxu0 0.0
  %2294 = vmatprep.subr.mxu0 0.0
  %2295 = vmatpush1.msra.mxu0 0.0
  %2296 = vmatprep.subr.mxu0 0.0
  %2297 = vmatpush1.msra.mxu0 0.0
  %2298 = vmatprep.subr.mxu0 0.0
  %2299 = vmatpush1.msra.mxu0 0.0
  %2300 = vmatprep.subr.mxu0 0.0
  %2301 = vmatpush1.msra.mxu0 0.0
  %2302 = vmatprep.mubr.f32.mxu0 0.0
  %2303 = vmatmul.mubr.f32.gmra.mrb[0].mxu0 %v2234
  %v2304 = vpop.f32.mrb[0].mxu0
  %v2305 = vadd.f32 0.0, %v2304
  %v2306 = vpop.f32.mrb[0].mxu0
  %2307 = vmatprep.mubr.f32.mxu0 0.0
  %2308 = vmatmul.mubr.f32.gmra.mrb[0].mxu0 %v2236
  %v2309 = vpop.f32.mrb[0].mxu0
  %v2310 = vadd.f32 0.0, %v2309
  %v2311 = vpop.f32.mrb[0].mxu0
  %2312 = vdwg.mxu0
  %v2313 = vadd.f32 %v2226, %v2305
  %v2314 = vadd.f32 %v2227, %v2310
  %v2315 = vxor.u32 %v2313, 2147483648
  %v2316 = vxor.u32 %v2314, 2147483648
  %v2317 = vmul.f32 %v2315, 1.442695
  %v2318 = vpow.pop %v2317
  %v2319 = vmul.f32 %v2316, 1.442695
  %v2320 = vpow.pop %v2319
  %v2321 = vadd.f32 %v2318, 1.0
  %v2322 = vadd.f32 %v2320, 1.0
  %v2323 = vrcp.pop %v2321
  %v2324 = vmul.f32 1.0, %v2323
  %v2325 = vrcp.pop %v2322
  %v2326 = vmul.f32 1.0, %v2325
  %v2327 = vtanh.pop %v2313
  %v2328 = vtanh.pop %v2314
  %v2329 = vmul.f32 %v2324, %v2212
  %v2330 = vmul.f32 %v2326, %v2213
  %2333 = vrot.lane.b32.xlu0 %v2327, 64
  %v2334 = vpop.permute.xlu0 %2333
  %2335 = vrot.lane.b32.xlu0 %v2328, 64
  %v2336 = vpop.permute.xlu0 %2335
  %v2339 = vmul.f32 %v2324, %v2334
  %v2340 = vmul.f32 %v2326, %v2336
  %2343 = vrot.lane.b32.xlu0 %v2339, 32
  %v2344 = vpop.permute.xlu0 %2343
  %2345 = vrot.lane.b32.xlu0 %v2340, 32
  %v2346 = vpop.permute.xlu0 %2345
  %v2349 = vadd.f32 %v2329, %v2344
  %v2350 = vadd.f32 %v2330, %v2346
  %v2351 = vtanh.pop %v2349
  %v2352 = vtanh.pop %v2350
  %2355 = vrot.lane.b32.xlu0 %v2351, 64
  %v2356 = vpop.permute.xlu0 %2355
  %2357 = vrot.lane.b32.xlu0 %v2352, 64
  %v2358 = vpop.permute.xlu0 %2357
  %v2361 = vmul.f32 %v2324, %v2356
  %v2362 = vmul.f32 %v2326, %v2358
  %v2363 = vld [vmem:[%s1007] sm:$0xff]
  %v2364 = vld [vmem:[%s1007 + $0x8] sm:$0xff]
  %2367 = vrot.lane.b32.xlu0 %v2361, 32
  %v2368 = vpop.permute.xlu0 %2367
  %2369 = vrot.lane.b32.xlu0 %v2362, 32
  %v2370 = vpop.permute.xlu0 %2369
  %v2371 = vsel %vm296, %v2368, 0
  %v2373 = vsel %vm296, %v2370, 0
  %2375 = vmatprep.subr.mxu0 0.0
  %2376 = vmatpush1.msra.mxu0 %v1684
  %2377 = vmatprep.subr.mxu0 0.0
  %2378 = vmatpush1.msra.mxu0 %v1685
  %2379 = vmatprep.subr.mxu0 0.0
  %2380 = vmatpush1.msra.mxu0 %v1686
  %2381 = vmatprep.subr.mxu0 0.0
  %2382 = vmatpush1.msra.mxu0 %v1687
  %2383 = vmatprep.subr.mxu0 0.0
  %2384 = vmatpush1.msra.mxu0 0.0
  %2385 = vmatprep.subr.mxu0 0.0
  %2386 = vmatpush1.msra.mxu0 0.0
  %2387 = vmatprep.subr.mxu0 0.0
  %2388 = vmatpush1.msra.mxu0 0.0
  %2389 = vmatprep.subr.mxu0 0.0
  %2390 = vmatpush1.msra.mxu0 0.0
  %2391 = vmatprep.subr.mxu0 0.0
  %2392 = vmatpush1.msra.mxu0 0.0
  %2393 = vmatprep.subr.mxu0 0.0
  %2394 = vmatpush1.msra.mxu0 0.0
  %2395 = vmatprep.subr.mxu0 0.0
  %2396 = vmatpush1.msra.mxu0 0.0
  %2397 = vmatprep.subr.mxu0 0.0
  %2398 = vmatpush1.msra.mxu0 0.0
  %2399 = vmatprep.subr.mxu0 0.0
  %2400 = vmatpush1.msra.mxu0 0.0
  %2401 = vmatprep.subr.mxu0 0.0
  %2402 = vmatpush1.msra.mxu0 0.0
  %2403 = vmatprep.subr.mxu0 0.0
  %2404 = vmatpush1.msra.mxu0 0.0
  %2405 = vmatprep.subr.mxu0 0.0
  %2406 = vmatpush1.msra.mxu0 0.0
  %2407 = vmatprep.subr.mxu0 0.0
  %2408 = vmatpush1.msra.mxu0 0.0
  %2409 = vmatprep.subr.mxu0 0.0
  %2410 = vmatpush1.msra.mxu0 0.0
  %2411 = vmatprep.subr.mxu0 0.0
  %2412 = vmatpush1.msra.mxu0 0.0
  %2413 = vmatprep.subr.mxu0 0.0
  %2414 = vmatpush1.msra.mxu0 0.0
  %2415 = vmatprep.subr.mxu0 0.0
  %2416 = vmatpush1.msra.mxu0 0.0
  %2417 = vmatprep.subr.mxu0 0.0
  %2418 = vmatpush1.msra.mxu0 0.0
  %2419 = vmatprep.subr.mxu0 0.0
  %2420 = vmatpush1.msra.mxu0 0.0
  %2421 = vmatprep.subr.mxu0 0.0
  %2422 = vmatpush1.msra.mxu0 0.0
  %2423 = vmatprep.subr.mxu0 0.0
  %2424 = vmatpush1.msra.mxu0 0.0
  %2425 = vmatprep.subr.mxu0 0.0
  %2426 = vmatpush1.msra.mxu0 0.0
  %2427 = vmatprep.subr.mxu0 0.0
  %2428 = vmatpush1.msra.mxu0 0.0
  %2429 = vmatprep.subr.mxu0 0.0
  %2430 = vmatpush1.msra.mxu0 0.0
  %2431 = vmatprep.subr.mxu0 0.0
  %2432 = vmatpush1.msra.mxu0 0.0
  %2433 = vmatprep.subr.mxu0 0.0
  %2434 = vmatpush1.msra.mxu0 0.0
  %2435 = vmatprep.subr.mxu0 0.0
  %2436 = vmatpush1.msra.mxu0 0.0
  %2437 = vmatprep.subr.mxu0 0.0
  %2438 = vmatpush1.msra.mxu0 0.0
  %2439 = vmatprep.mubr.f32.mxu0 0.0
  %2440 = vmatmul.mubr.f32.gmra.mrb[0].mxu0 %v2371
  %v2441 = vpop.f32.mrb[0].mxu0
  %v2442 = vadd.f32 0.0, %v2441
  %v2443 = vpop.f32.mrb[0].mxu0
  %2444 = vmatprep.mubr.f32.mxu0 0.0
  %2445 = vmatmul.mubr.f32.gmra.mrb[0].mxu0 %v2373
  %v2446 = vpop.f32.mrb[0].mxu0
  %v2447 = vadd.f32 0.0, %v2446
  %v2448 = vpop.f32.mrb[0].mxu0
  %2449 = vdwg.mxu0
  %v2450 = vadd.f32 %v2363, %v2442
  %v2451 = vadd.f32 %v2364, %v2447
  %v2452 = vxor.u32 %v2450, 2147483648
  %v2453 = vxor.u32 %v2451, 2147483648
  %v2454 = vmul.f32 %v2452, 1.442695
  %v2455 = vpow.pop %v2454
  %v2456 = vmul.f32 %v2453, 1.442695
  %v2457 = vpow.pop %v2456
  %v2458 = vadd.f32 %v2455, 1.0
  %v2459 = vadd.f32 %v2457, 1.0
  %v2460 = vrcp.pop %v2458
  %v2461 = vmul.f32 1.0, %v2460
  %v2462 = vrcp.pop %v2459
  %v2463 = vmul.f32 1.0, %v2462
  %v2464 = vtanh.pop %v2450
  %v2465 = vtanh.pop %v2451
  %v2466 = vmul.f32 %v2461, %v2349
  %v2467 = vmul.f32 %v2463, %v2350
  %2470 = vrot.lane.b32.xlu0 %v2464, 64
  %v2471 = vpop.permute.xlu0 %2470
  %2472 = vrot.lane.b32.xlu0 %v2465, 64
  %v2473 = vpop.permute.xlu0 %2472
  %v2476 = vmul.f32 %v2461, %v2471
  %v2477 = vmul.f32 %v2463, %v2473
  %2480 = vrot.lane.b32.xlu0 %v2476, 32
  %v2481 = vpop.permute.xlu0 %2480
  %2482 = vrot.lane.b32.xlu0 %v2477, 32
  %v2483 = vpop.permute.xlu0 %2482
  %v2486 = vadd.f32 %v2466, %v2481
  %v2487 = vadd.f32 %v2467, %v2483
  %v2488 = vtanh.pop %v2486
  %v2489 = vtanh.pop %v2487
  %2492 = vrot.lane.b32.xlu0 %v2488, 64
  %v2493 = vpop.permute.xlu0 %2492
  %2494 = vrot.lane.b32.xlu0 %v2489, 64
  %v2495 = vpop.permute.xlu0 %2494
  %v2498 = vmul.f32 %v2461, %v2493
  %v2499 = vmul.f32 %v2463, %v2495
  %v2500 = vld [vmem:[%s1150] sm:$0xff]
  %v2501 = vld [vmem:[%s1150 + $0x8] sm:$0xff]
  %2504 = vrot.lane.b32.xlu0 %v2498, 32
  %v2505 = vpop.permute.xlu0 %2504
  %2506 = vrot.lane.b32.xlu0 %v2499, 32
  %v2507 = vpop.permute.xlu0 %2506
  %v2508 = vsel %vm296, %v2505, 0
  %v2510 = vsel %vm296, %v2507, 0
  %2512 = vmatprep.subr.mxu0 0.0
  %2513 = vmatpush1.msra.mxu0 %v1684
  %2514 = vmatprep.subr.mxu0 0.0
  %2515 = vmatpush1.msra.mxu0 %v1685
  %2516 = vmatprep.subr.mxu0 0.0
  %2517 = vmatpush1.msra.mxu0 %v1686
  %2518 = vmatprep.subr.mxu0 0.0
  %2519 = vmatpush1.msra.mxu0 %v1687
  %2520 = vmatprep.subr.mxu0 0.0
  %2521 = vmatpush1.msra.mxu0 0.0
  %2522 = vmatprep.subr.mxu0 0.0
  %2523 = vmatpush1.msra.mxu0 0.0
  %2524 = vmatprep.subr.mxu0 0.0
  %2525 = vmatpush1.msra.mxu0 0.0
  %2526 = vmatprep.subr.mxu0 0.0
  %2527 = vmatpush1.msra.mxu0 0.0
  %2528 = vmatprep.subr.mxu0 0.0
  %2529 = vmatpush1.msra.mxu0 0.0
  %2530 = vmatprep.subr.mxu0 0.0
  %2531 = vmatpush1.msra.mxu0 0.0
  %2532 = vmatprep.subr.mxu0 0.0
  %2533 = vmatpush1.msra.mxu0 0.0
  %2534 = vmatprep.subr.mxu0 0.0
  %2535 = vmatpush1.msra.mxu0 0.0
  %2536 = vmatprep.subr.mxu0 0.0
  %2537 = vmatpush1.msra.mxu0 0.0
  %2538 = vmatprep.subr.mxu0 0.0
  %2539 = vmatpush1.msra.mxu0 0.0
  %2540 = vmatprep.subr.mxu0 0.0
  %2541 = vmatpush1.msra.mxu0 0.0
  %2542 = vmatprep.subr.mxu0 0.0
  %2543 = vmatpush1.msra.mxu0 0.0
  %2544 = vmatprep.subr.mxu0 0.0
  %2545 = vmatpush1.msra.mxu0 0.0
  %2546 = vmatprep.subr.mxu0 0.0
  %2547 = vmatpush1.msra.mxu0 0.0
  %2548 = vmatprep.subr.mxu0 0.0
  %2549 = vmatpush1.msra.mxu0 0.0
  %2550 = vmatprep.subr.mxu0 0.0
  %2551 = vmatpush1.msra.mxu0 0.0
  %2552 = vmatprep.subr.mxu0 0.0
  %2553 = vmatpush1.msra.mxu0 0.0
  %2554 = vmatprep.subr.mxu0 0.0
  %2555 = vmatpush1.msra.mxu0 0.0
  %2556 = vmatprep.subr.mxu0 0.0
  %2557 = vmatpush1.msra.mxu0 0.0
  %2558 = vmatprep.subr.mxu0 0.0
  %2559 = vmatpush1.msra.mxu0 0.0
  %2560 = vmatprep.subr.mxu0 0.0
  %2561 = vmatpush1.msra.mxu0 0.0
  %2562 = vmatprep.subr.mxu0 0.0
  %2563 = vmatpush1.msra.mxu0 0.0
  %2564 = vmatprep.subr.mxu0 0.0
  %2565 = vmatpush1.msra.mxu0 0.0
  %2566 = vmatprep.subr.mxu0 0.0
  %2567 = vmatpush1.msra.mxu0 0.0
  %2568 = vmatprep.subr.mxu0 0.0
  %2569 = vmatpush1.msra.mxu0 0.0
  %2570 = vmatprep.subr.mxu0 0.0
  %2571 = vmatpush1.msra.mxu0 0.0
  %2572 = vmatprep.subr.mxu0 0.0
  %2573 = vmatpush1.msra.mxu0 0.0
  %2574 = vmatprep.subr.mxu0 0.0
  %2575 = vmatpush1.msra.mxu0 0.0
  %2576 = vmatprep.mubr.f32.mxu0 0.0
  %2577 = vmatmul.mubr.f32.gmra.mrb[0].mxu0 %v2508
  %v2578 = vpop.f32.mrb[0].mxu0
  %v2579 = vadd.f32 0.0, %v2578
  %v2580 = vpop.f32.mrb[0].mxu0
  %2581 = vmatprep.mubr.f32.mxu0 0.0
  %2582 = vmatmul.mubr.f32.gmra.mrb[0].mxu0 %v2510
  %v2583 = vpop.f32.mrb[0].mxu0
  %v2584 = vadd.f32 0.0, %v2583
  %v2585 = vpop.f32.mrb[0].mxu0
  %2586 = vdwg.mxu0
  %v2587 = vadd.f32 %v2500, %v2579
  %v2588 = vadd.f32 %v2501, %v2584
  %v2589 = vxor.u32 %v2587, 2147483648
  %v2590 = vxor.u32 %v2588, 2147483648
  %v2591 = vmul.f32 %v2589, 1.442695
  %v2592 = vpow.pop %v2591
  %v2593 = vmul.f32 %v2590, 1.442695
  %v2594 = vpow.pop %v2593
  %v2595 = vadd.f32 %v2592, 1.0
  %v2596 = vadd.f32 %v2594, 1.0
  %v2597 = vrcp.pop %v2595
  %v2598 = vmul.f32 1.0, %v2597
  %v2599 = vrcp.pop %v2596
  %v2600 = vmul.f32 1.0, %v2599
  %v2601 = vtanh.pop %v2587
  %v2602 = vtanh.pop %v2588
  %v2603 = vmul.f32 %v2598, %v2486
  %v2604 = vmul.f32 %v2600, %v2487
  %2607 = vrot.lane.b32.xlu0 %v2601, 64
  %v2608 = vpop.permute.xlu0 %2607
  %2609 = vrot.lane.b32.xlu0 %v2602, 64
  %v2610 = vpop.permute.xlu0 %2609
  %v2613 = vmul.f32 %v2598, %v2608
  %v2614 = vmul.f32 %v2600, %v2610
  %2617 = vrot.lane.b32.xlu0 %v2613, 32
  %v2618 = vpop.permute.xlu0 %2617
  %2619 = vrot.lane.b32.xlu0 %v2614, 32
  %v2620 = vpop.permute.xlu0 %2619
  %v2623 = vadd.f32 %v2603, %v2618
  %v2624 = vadd.f32 %v2604, %v2620
  %v2625 = vtanh.pop %v2623
  %v2626 = vtanh.pop %v2624
  %2629 = vrot.lane.b32.xlu0 %v2625, 64
  %v2630 = vpop.permute.xlu0 %2629
  %2631 = vrot.lane.b32.xlu0 %v2626, 64
  %v2632 = vpop.permute.xlu0 %2631
  %v2635 = vmul.f32 %v2598, %v2630
  %v2636 = vmul.f32 %v2600, %v2632
  %v2637 = vld [vmem:[%s1293] sm:$0xff]
  %v2638 = vld [vmem:[%s1293 + $0x8] sm:$0xff]
  %2641 = vrot.lane.b32.xlu0 %v2635, 32
  %v2642 = vpop.permute.xlu0 %2641
  %2643 = vrot.lane.b32.xlu0 %v2636, 32
  %v2644 = vpop.permute.xlu0 %2643
  %v2645 = vsel %vm296, %v2642, 0
  %v2647 = vsel %vm296, %v2644, 0
  %2649 = vmatprep.subr.mxu0 0.0
  %2650 = vmatpush1.msra.mxu0 %v1684
  %2651 = vmatprep.subr.mxu0 0.0
  %2652 = vmatpush1.msra.mxu0 %v1685
  %2653 = vmatprep.subr.mxu0 0.0
  %2654 = vmatpush1.msra.mxu0 %v1686
  %2655 = vmatprep.subr.mxu0 0.0
  %2656 = vmatpush1.msra.mxu0 %v1687
  %2657 = vmatprep.subr.mxu0 0.0
  %2658 = vmatpush1.msra.mxu0 0.0
  %2659 = vmatprep.subr.mxu0 0.0
  %2660 = vmatpush1.msra.mxu0 0.0
  %2661 = vmatprep.subr.mxu0 0.0
  %2662 = vmatpush1.msra.mxu0 0.0
  %2663 = vmatprep.subr.mxu0 0.0
  %2664 = vmatpush1.msra.mxu0 0.0
  %2665 = vmatprep.subr.mxu0 0.0
  %2666 = vmatpush1.msra.mxu0 0.0
  %2667 = vmatprep.subr.mxu0 0.0
  %2668 = vmatpush1.msra.mxu0 0.0
  %2669 = vmatprep.subr.mxu0 0.0
  %2670 = vmatpush1.msra.mxu0 0.0
  %2671 = vmatprep.subr.mxu0 0.0
  %2672 = vmatpush1.msra.mxu0 0.0
  %2673 = vmatprep.subr.mxu0 0.0
  %2674 = vmatpush1.msra.mxu0 0.0
  %2675 = vmatprep.subr.mxu0 0.0
  %2676 = vmatpush1.msra.mxu0 0.0
  %2677 = vmatprep.subr.mxu0 0.0
  %2678 = vmatpush1.msra.mxu0 0.0
  %2679 = vmatprep.subr.mxu0 0.0
  %2680 = vmatpush1.msra.mxu0 0.0
  %2681 = vmatprep.subr.mxu0 0.0
  %2682 = vmatpush1.msra.mxu0 0.0
  %2683 = vmatprep.subr.mxu0 0.0
  %2684 = vmatpush1.msra.mxu0 0.0
  %2685 = vmatprep.subr.mxu0 0.0
  %2686 = vmatpush1.msra.mxu0 0.0
  %2687 = vmatprep.subr.mxu0 0.0
  %2688 = vmatpush1.msra.mxu0 0.0
  %2689 = vmatprep.subr.mxu0 0.0
  %2690 = vmatpush1.msra.mxu0 0.0
  %2691 = vmatprep.subr.mxu0 0.0
  %2692 = vmatpush1.msra.mxu0 0.0
  %2693 = vmatprep.subr.mxu0 0.0
  %2694 = vmatpush1.msra.mxu0 0.0
  %2695 = vmatprep.subr.mxu0 0.0
  %2696 = vmatpush1.msra.mxu0 0.0
  %2697 = vmatprep.subr.mxu0 0.0
  %2698 = vmatpush1.msra.mxu0 0.0
  %2699 = vmatprep.subr.mxu0 0.0
  %2700 = vmatpush1.msra.mxu0 0.0
  %2701 = vmatprep.subr.mxu0 0.0
  %2702 = vmatpush1.msra.mxu0 0.0
  %2703 = vmatprep.subr.mxu0 0.0
  %2704 = vmatpush1.msra.mxu0 0.0
  %2705 = vmatprep.subr.mxu0 0.0
  %2706 = vmatpush1.msra.mxu0 0.0
  %2707 = vmatprep.subr.mxu0 0.0
  %2708 = vmatpush1.msra.mxu0 0.0
  %2709 = vmatprep.subr.mxu0 0.0
  %2710 = vmatpush1.msra.mxu0 0.0
  %2711 = vmatprep.subr.mxu0 0.0
  %2712 = vmatpush1.msra.mxu0 0.0
  %2713 = vmatprep.mubr.f32.mxu0 0.0
  %2714 = vmatmul.mubr.f32.gmra.mrb[0].mxu0 %v2645
  %v2715 = vpop.f32.mrb[0].mxu0
  %v2716 = vadd.f32 0.0, %v2715
  %v2717 = vpop.f32.mrb[0].mxu0
  %2718 = vmatprep.mubr.f32.mxu0 0.0
  %2719 = vmatmul.mubr.f32.gmra.mrb[0].mxu0 %v2647
  %v2720 = vpop.f32.mrb[0].mxu0
  %v2721 = vadd.f32 0.0, %v2720
  %v2722 = vpop.f32.mrb[0].mxu0
  %2723 = vdwg.mxu0
  %v2724 = vadd.f32 %v2637, %v2716
  %v2725 = vadd.f32 %v2638, %v2721
  %v2726 = vxor.u32 %v2724, 2147483648
  %v2727 = vxor.u32 %v2725, 2147483648
  %v2728 = vmul.f32 %v2726, 1.442695
  %v2729 = vpow.pop %v2728
  %v2730 = vmul.f32 %v2727, 1.442695
  %v2731 = vpow.pop %v2730
  %v2732 = vadd.f32 %v2729, 1.0
  %v2733 = vadd.f32 %v2731, 1.0
  %v2734 = vrcp.pop %v2732
  %v2735 = vmul.f32 1.0, %v2734
  %v2736 = vrcp.pop %v2733
  %v2737 = vmul.f32 1.0, %v2736
  %v2738 = vtanh.pop %v2724
  %v2739 = vtanh.pop %v2725
  %v2740 = vmul.f32 %v2735, %v2623
  %v2741 = vmul.f32 %v2737, %v2624
  %2744 = vrot.lane.b32.xlu0 %v2738, 64
  %v2745 = vpop.permute.xlu0 %2744
  %2746 = vrot.lane.b32.xlu0 %v2739, 64
  %v2747 = vpop.permute.xlu0 %2746
  %v2750 = vmul.f32 %v2735, %v2745
  %v2751 = vmul.f32 %v2737, %v2747
  %2754 = vrot.lane.b32.xlu0 %v2750, 32
  %v2755 = vpop.permute.xlu0 %2754
  %2756 = vrot.lane.b32.xlu0 %v2751, 32
  %v2757 = vpop.permute.xlu0 %2756
  %v2760 = vadd.f32 %v2740, %v2755
  %v2761 = vadd.f32 %v2741, %v2757
  %v2762 = vtanh.pop %v2760
  %v2763 = vtanh.pop %v2761
  %2766 = vrot.lane.b32.xlu0 %v2762, 64
  %v2767 = vpop.permute.xlu0 %2766
  %2768 = vrot.lane.b32.xlu0 %v2763, 64
  %v2769 = vpop.permute.xlu0 %2768
  %v2772 = vmul.f32 %v2735, %v2767
  %v2773 = vmul.f32 %v2737, %v2769
  %2776 = vrot.lane.b32.xlu0 %v2772, 32
  %v2777 = vpop.permute.xlu0 %2776
  %2778 = vrot.lane.b32.xlu0 %v2773, 32
  %v2779 = vpop.permute.xlu0 %2778
  %s2782 = scalar_lea.vmem %s16, 16
  %2783 = vst.msk [vmem:[%s2782] sm:$0xff] %vm296, %v2777
  %2784 = vst.msk [vmem:[%s2782 + $0x8] sm:$0xff] %vm296, %v2779
  %2787 = vrot.lane.b32.xlu0 %v2760, 96
  %v2788 = vpop.permute.xlu0 %2787
  %2789 = vrot.lane.b32.xlu0 %v2761, 96
  %v2790 = vpop.permute.xlu0 %2789
  %s2793 = scalar_lea.vmem %s17, 16
  %2794 = vst.msk [vmem:[%s2793] sm:$0xff] %vm296, %v2788
  %2795 = vst.msk [vmem:[%s2793 + $0x8] sm:$0xff] %vm296, %v2790
  %2796 = vst.msk [vmem:[%s15] sm:$0xff] %vm296, %v2777
  %2797 = vst.msk [vmem:[%s15 + $0x8] sm:$0xff] %vm296, %v2779
  %vm2798 = vcmask 1048320
  %v2799 = vsel %vm2798, %v2772, 0.0
  %v2800 = vrot.slane %v2799, 4
  %v2801 = vadd.f32 %v2799, %v2800
  %v2802 = vrot.slane %v2801, 2
  %v2803 = vadd.f32 %v2801, %v2802
  %v2804 = vrot.slane %v2803, 1
  %v2805 = vadd.f32 %v2803, %v2804
  %v2806 = vrcp.pop 8.0
  %v2807 = vmul.f32 %v2805, %v2806
  %v2808 = vsub.f32 %v2772, %v2807
  %v2809 = vmul.f32 %v2808, %v2808
  %v2810 = vsel %vm2798, %v2809, 0.0
  %v2811 = vrot.slane %v2810, 4
  %v2812 = vadd.f32 %v2810, %v2811
  %v2813 = vrot.slane %v2812, 2
  %v2814 = vadd.f32 %v2812, %v2813
  %v2815 = vrot.slane %v2814, 1
  %v2816 = vadd.f32 %v2814, %v2815
  %v2817 = vmul.f32 %v2816, %v2806
  %v2818 = vadd.f32 %v2817, 1e-05
  %v2819 = vrsqrt.pop %v2818
  %v2820 = vmul.f32 %v2808, %v2819
  %v2821 = vld [vmem:[%s7] sm:$0x1]
  %v2823 = vlaneseq
  %v2824 = vshrl.u32 %v2823, 7
  %v2825 = vsub.s32 0, %v2824
  %v2826 = vrot.slane %v2821, %v2825
  %2827 = vrot.lane.b32.xlu0 %v2826, 96
  %v2828 = vpop.permute.xlu0 %2827
  %v2830 = vmul.f32 %v2820, %v2828
  %v2831 = vld [vmem:[%s8] sm:$0x1]
  %v2833 = vlaneseq
  %v2834 = vshrl.u32 %v2833, 7
  %v2835 = vsub.s32 0, %v2834
  %v2836 = vrot.slane %v2831, %v2835
  %2837 = vrot.lane.b32.xlu0 %v2836, 96
  %v2838 = vpop.permute.xlu0 %2837
  %v2840 = vadd.f32 %v2830, %v2838
  %v2841 = vld [vmem:[%s9] sm:$0xff]
  %v2842 = vld [vmem:[%s9 + $0x8] sm:$0xff]
  %v2843 = vld [vmem:[%s9 + $0x10] sm:$0xff]
  %v2844 = vld [vmem:[%s9 + $0x18] sm:$0xff]
  %v2845 = vld [vmem:[%s10] sm:$0x1]
  %v2847 = vlaneseq
  %v2848 = vshrl.u32 %v2847, 7
  %v2849 = vsub.s32 0, %v2848
  %v2850 = vrot.slane %v2845, %v2849
  %2853 = vrot.lane.b32.xlu0 %v2840, 32
  %v2854 = vpop.permute.xlu0 %2853
  %v2855 = vsel %vm296, %v2854, 0
  %2857 = vmatprep.subr.mxu0 0.0
  %2858 = vmatpush1.msra.mxu0 %v2841
  %2859 = vmatprep.subr.mxu0 0.0
  %2860 = vmatpush1.msra.mxu0 %v2842
  %2861 = vmatprep.subr.mxu0 0.0
  %2862 = vmatpush1.msra.mxu0 %v2843
  %2863 = vmatprep.subr.mxu0 0.0
  %2864 = vmatpush1.msra.mxu0 %v2844
  %2865 = vmatprep.subr.mxu0 0.0
  %2866 = vmatpush1.msra.mxu0 0.0
  %2867 = vmatprep.subr.mxu0 0.0
  %2868 = vmatpush1.msra.mxu0 0.0
  %2869 = vmatprep.subr.mxu0 0.0
  %2870 = vmatpush1.msra.mxu0 0.0
  %2871 = vmatprep.subr.mxu0 0.0
  %2872 = vmatpush1.msra.mxu0 0.0
  %2873 = vmatprep.subr.mxu0 0.0
  %2874 = vmatpush1.msra.mxu0 0.0
  %2875 = vmatprep.subr.mxu0 0.0
  %2876 = vmatpush1.msra.mxu0 0.0
  %2877 = vmatprep.subr.mxu0 0.0
  %2878 = vmatpush1.msra.mxu0 0.0
  %2879 = vmatprep.subr.mxu0 0.0
  %2880 = vmatpush1.msra.mxu0 0.0
  %2881 = vmatprep.subr.mxu0 0.0
  %2882 = vmatpush1.msra.mxu0 0.0
  %2883 = vmatprep.subr.mxu0 0.0
  %2884 = vmatpush1.msra.mxu0 0.0
  %2885 = vmatprep.subr.mxu0 0.0
  %2886 = vmatpush1.msra.mxu0 0.0
  %2887 = vmatprep.subr.mxu0 0.0
  %2888 = vmatpush1.msra.mxu0 0.0
  %2889 = vmatprep.subr.mxu0 0.0
  %2890 = vmatpush1.msra.mxu0 0.0
  %2891 = vmatprep.subr.mxu0 0.0
  %2892 = vmatpush1.msra.mxu0 0.0
  %2893 = vmatprep.subr.mxu0 0.0
  %2894 = vmatpush1.msra.mxu0 0.0
  %2895 = vmatprep.subr.mxu0 0.0
  %2896 = vmatpush1.msra.mxu0 0.0
  %2897 = vmatprep.subr.mxu0 0.0
  %2898 = vmatpush1.msra.mxu0 0.0
  %2899 = vmatprep.subr.mxu0 0.0
  %2900 = vmatpush1.msra.mxu0 0.0
  %2901 = vmatprep.subr.mxu0 0.0
  %2902 = vmatpush1.msra.mxu0 0.0
  %2903 = vmatprep.subr.mxu0 0.0
  %2904 = vmatpush1.msra.mxu0 0.0
  %2905 = vmatprep.subr.mxu0 0.0
  %2906 = vmatpush1.msra.mxu0 0.0
  %2907 = vmatprep.subr.mxu0 0.0
  %2908 = vmatpush1.msra.mxu0 0.0
  %2909 = vmatprep.subr.mxu0 0.0
  %2910 = vmatpush1.msra.mxu0 0.0
  %2911 = vmatprep.subr.mxu0 0.0
  %2912 = vmatpush1.msra.mxu0 0.0
  %2913 = vmatprep.subr.mxu0 0.0
  %2914 = vmatpush1.msra.mxu0 0.0
  %2915 = vmatprep.subr.mxu0 0.0
  %2916 = vmatpush1.msra.mxu0 0.0
  %2917 = vmatprep.subr.mxu0 0.0
  %2918 = vmatpush1.msra.mxu0 0.0
  %2919 = vmatprep.subr.mxu0 0.0
  %2920 = vmatpush1.msra.mxu0 0.0
  %2921 = vmatprep.mubr.f32.mxu0 0.0
  %2922 = vmatmul.mubr.f32.gmra.mrb[0].mxu0 %v2855
  %v2923 = vpop.f32.mrb[0].mxu0
  %v2924 = vadd.f32 %v2850, %v2923
  %v2925 = vpop.f32.mrb[0].mxu0
  %2926 = vdwg.mxu0
  %vm2927 = vcmask 130048
  %v2928 = vsel %vm2927, %v2924, 0.0
  %v2929 = vrot.slane %v2928, 4
  %v2930 = vadd.f32 %v2928, %v2929
  %v2931 = vrot.slane %v2930, 2
  %v2932 = vadd.f32 %v2930, %v2931
  %v2933 = vrot.slane %v2932, 1
  %v2934 = vadd.f32 %v2932, %v2933
  %v2935 = vmul.f32 %v2934, %v2806
  %v2936 = vsub.f32 %v2924, %v2935
  %v2937 = vmul.f32 %v2936, %v2936
  %v2938 = vsel %vm2927, %v2937, 0.0
  %v2939 = vrot.slane %v2938, 4
  %v2940 = vadd.f32 %v2938, %v2939
  %v2941 = vrot.slane %v2940, 2
  %v2942 = vadd.f32 %v2940, %v2941
  %v2943 = vrot.slane %v2942, 1
  %v2944 = vadd.f32 %v2942, %v2943
  %v2945 = vmul.f32 %v2944, %v2806
  %v2946 = vadd.f32 %v2945, 1e-05
  %v2947 = vrsqrt.pop %v2946
  %v2948 = vmul.f32 %v2936, %v2947
  %v2949 = vld [vmem:[%s11] sm:$0x1]
  %v2951 = vlaneseq
  %v2952 = vshrl.u32 %v2951, 7
  %v2953 = vsub.s32 0, %v2952
  %v2954 = vrot.slane %v2949, %v2953
  %v2956 = vmul.f32 %v2948, %v2954
  %v2957 = vld [vmem:[%s12] sm:$0x1]
  %v2959 = vlaneseq
  %v2960 = vshrl.u32 %v2959, 7
  %v2961 = vsub.s32 0, %v2960
  %v2962 = vrot.slane %v2957, %v2961
  %v2964 = vadd.f32 %v2956, %v2962
  %v2965 = vld [vmem:[%s13] sm:$0xff]
  %v2966 = vld [vmem:[%s13 + $0x8] sm:$0xff]
  %v2967 = vld [vmem:[#allocation4] sm:$0x1]
  %v2969 = vlaneseq
  %v2970 = vshrl.u32 %v2969, 7
  %v2971 = vsub.s32 0, %v2970
  %v2972 = vrot.slane %v2967, %v2971
  %v2975 = vsel %vm2927, %v2964, 0
  %2977 = vmatprep.subr.mxu0 0.0
  %2978 = vmatpush1.msra.mxu0 %v2965
  %2979 = vmatprep.subr.mxu0 0.0
  %2980 = vmatpush1.msra.mxu0 %v2966
  %2981 = vmatprep.subr.mxu0 0.0
  %2982 = vmatpush1.msra.mxu0 0.0
  %2983 = vmatprep.subr.mxu0 0.0
  %2984 = vmatpush1.msra.mxu0 0.0
  %2985 = vmatprep.subr.mxu0 0.0
  %2986 = vmatpush1.msra.mxu0 0.0
  %2987 = vmatprep.subr.mxu0 0.0
  %2988 = vmatpush1.msra.mxu0 0.0
  %2989 = vmatprep.subr.mxu0 0.0
  %2990 = vmatpush1.msra.mxu0 0.0
  %2991 = vmatprep.subr.mxu0 0.0
  %2992 = vmatpush1.msra.mxu0 0.0
  %2993 = vmatprep.subr.mxu0 0.0
  %2994 = vmatpush1.msra.mxu0 0.0
  %2995 = vmatprep.subr.mxu0 0.0
  %2996 = vmatpush1.msra.mxu0 0.0
  %2997 = vmatprep.subr.mxu0 0.0
  %2998 = vmatpush1.msra.mxu0 0.0
  %2999 = vmatprep.subr.mxu0 0.0
  %3000 = vmatpush1.msra.mxu0 0.0
  %3001 = vmatprep.subr.mxu0 0.0
  %3002 = vmatpush1.msra.mxu0 0.0
  %3003 = vmatprep.subr.mxu0 0.0
  %3004 = vmatpush1.msra.mxu0 0.0
  %3005 = vmatprep.subr.mxu0 0.0
  %3006 = vmatpush1.msra.mxu0 0.0
  %3007 = vmatprep.subr.mxu0 0.0
  %3008 = vmatpush1.msra.mxu0 0.0
  %3009 = vmatprep.subr.mxu0 0.0
  %3010 = vmatpush1.msra.mxu0 0.0
  %3011 = vmatprep.subr.mxu0 0.0
  %3012 = vmatpush1.msra.mxu0 0.0
  %3013 = vmatprep.subr.mxu0 0.0
  %3014 = vmatpush1.msra.mxu0 0.0
  %3015 = vmatprep.subr.mxu0 0.0
  %3016 = vmatpush1.msra.mxu0 0.0
  %3017 = vmatprep.subr.mxu0 0.0
  %3018 = vmatpush1.msra.mxu0 0.0
  %3019 = vmatprep.subr.mxu0 0.0
  %3020 = vmatpush1.msra.mxu0 0.0
  %3021 = vmatprep.subr.mxu0 0.0
  %3022 = vmatpush1.msra.mxu0 0.0
  %3023 = vmatprep.subr.mxu0 0.0
  %3024 = vmatpush1.msra.mxu0 0.0
  %3025 = vmatprep.subr.mxu0 0.0
  %3026 = vmatpush1.msra.mxu0 0.0
  %3027 = vmatprep.subr.mxu0 0.0
  %3028 = vmatpush1.msra.mxu0 0.0
  %3029 = vmatprep.subr.mxu0 0.0
  %3030 = vmatpush1.msra.mxu0 0.0
  %3031 = vmatprep.subr.mxu0 0.0
  %3032 = vmatpush1.msra.mxu0 0.0
  %3033 = vmatprep.subr.mxu0 0.0
  %3034 = vmatpush1.msra.mxu0 0.0
  %3035 = vmatprep.subr.mxu0 0.0
  %3036 = vmatpush1.msra.mxu0 0.0
  %3037 = vmatprep.subr.mxu0 0.0
  %3038 = vmatpush1.msra.mxu0 0.0
  %3039 = vmatprep.subr.mxu0 0.0
  %3040 = vmatpush1.msra.mxu0 0.0
  %3041 = vmatprep.mubr.f32.mxu0 0.0
  %3042 = vmatmul.mubr.f32.gmra.mrb[0].mxu0 %v2975
  %v3043 = vpop.f32.mrb[0].mxu0
  %v3044 = vadd.f32 %v2972, %v3043
  %v3045 = vpop.f32.mrb[0].mxu0
  %3046 = vdwg.mxu0
  %vm3047 = vcmask 7168
  %3048 = vst.msk [vmem:[%s18] sm:$0xff] %vm3047, %v3044
  // Predicated region
  $region62: #{gclstm_forward.1} parent=0 // pred_check
    _
  $region63: #{gclstm_forward.1} parent=0 // pred_check_branch
    %3050 = sbr.rel (0) target = $region65
  $region64: #{gclstm_forward.1} parent=0 // pred_region
    _
  $region65: #{gclstm_forward.1} parent=0 // pred_fallthru
    _
  // Predicated region
  $region66: #{gclstm_forward.1} parent=0 // pred_check
    _
  $region67: #{gclstm_forward.1} parent=0 // pred_check_branch
    %3052 = sbr.rel (0) target = $region69
  $region68: #{gclstm_forward.1} parent=0 // pred_region
    _
  $region69: #{gclstm_forward.1} parent=0 // pred_fallthru
    _
  // Predicated region
  $region70: #{gclstm_forward.1} parent=0 // pred_check
    _
  $region71: #{gclstm_forward.1} parent=0 // pred_check_branch
    %3054 = sbr.rel (0) target = $region73
  $region72: #{gclstm_forward.1} parent=0 // pred_region
    _
  $region73: #{gclstm_forward.1} parent=0 // pred_fallthru
    _
  // Predicated region
  $region74: #{gclstm_forward.1} parent=0 // pred_check
    _
  $region75: #{gclstm_forward.1} parent=0 // pred_check_branch
    %3056 = sbr.rel (0) target = $region77
  $region76: #{gclstm_forward.1} parent=0 // pred_region
    _
  $region77: #{gclstm_forward.1} parent=0 // pred_fallthru
    _
  // Predicated region
  $region78: #{gclstm_forward.1} parent=0 // pred_check
    _
  $region79: #{gclstm_forward.1} parent=0 // pred_check_branch
    %3058 = sbr.rel (0) target = $region81
  $region80: #{gclstm_forward.1} parent=0 // pred_region
    _
  $region81: #{gclstm_forward.1} parent=0 // pred_fallthru
    _
  // Predicated region
  $region82: #{gclstm_forward.1} parent=0 // pred_check
    _
  $region83: #{gclstm_forward.1} parent=0 // pred_check_branch
    %3060 = sbr.rel (0) target = $region85
  $region84: #{gclstm_forward.1} parent=0 // pred_region
    _
  $region85: #{gclstm_forward.1} parent=0 // pred_fallthru
    _
  // Predicated region
  $region86: #{gclstm_forward.1} parent=0 // pred_check
    _
  $region87: #{gclstm_forward.1} parent=0 // pred_check_branch
    %3062 = sbr.rel (0) target = $region89
  $region88: #{gclstm_forward.1} parent=0 // pred_region
    _
  $region89: #{gclstm_forward.1} parent=0 // pred_fallthru
    _
  // Predicated region
  $region90: #{gclstm_forward.1} parent=0 // pred_check
    _
  $region91: #{gclstm_forward.1} parent=0 // pred_check_branch
    %3064 = sbr.rel (0) target = $region93
  $region92: #{gclstm_forward.1} parent=0 // pred_region
    _
  $region93: #{gclstm_forward.1} parent=0 // pred_fallthru
    _

</llo_original>
